<compile_context>
chip_gen: v7x
topology: tpu7x:2x2x1
jax: 0.10.0
libtpu: 0.0.40
codegen_flags: <defaults>
</compile_context>

<pallas_src>
import functools
import math

import jax
import jax.numpy as jnp
from jax.experimental import pallas as pl
from jax.experimental.pallas import tpu as pltpu

EPS = 1e-5
NEG_INF = -1e30  # additive causal-mask bias (finite; diagonal never masked)


# ----------------------------- in-kernel helpers ----------------------------

def _layernorm(x, g, b):
    # matches the from-scratch LayerNorm: mean/var over last dim, unbiased=False
    mean = jnp.mean(x, axis=-1, keepdims=True)
    var = jnp.mean((x - mean) ** 2, axis=-1, keepdims=True)
    return (x - mean) * jax.lax.rsqrt(var + EPS) * g + b


def _gelu(x):
    # tanh-approximation GELU (the GPT-from-scratch GELU module), f32 math
    c = jnp.float32(math.sqrt(2.0 / math.pi))
    return 0.5 * x * (1.0 + jnp.tanh(c * (x + 0.044715 * x ** 3)))


def _nbytes(shape, dtype):
    return math.prod(shape) * jnp.dtype(dtype).itemsize


def _tile(dim, pref):
    return dim if dim < pref else pref


def _compiler_params(dims, est_bytes):
    # explicit scoped-VMEM limit derived from the tile sizes, floored at
    # 32 MiB and capped below v7x's 64 MiB physical VMEM.
    vmem = int(min(60 * 1024 * 1024, max(32 * 1024 * 1024,
                                         est_bytes + 8 * 1024 * 1024)))
    return pltpu.CompilerParams(dimension_semantics=dims,
                                vmem_limit_bytes=vmem)


# ----------------------------- Pallas kernels ------------------------------

def qkv_proj_kernel(x_ref, g_ref, b_ref, wqkv_ref, q_ref, k_ref, v_ref, *,
                    num_heads, head_dim):
    """LN1 + fused QKV projection; outputs head-major bf16 q/k/v."""
    E = num_heads * head_dim
    x = x_ref[0]                                          # (TT, E) f32
    h = _layernorm(x, g_ref[...], b_ref[...])
    qkv = jnp.dot(h.astype(jnp.bfloat16), wqkv_ref[...],
                  preferred_element_type=jnp.float32)     # (TT, 3E) f32
    inv_scale = jnp.float32(1.0 / math.sqrt(head_dim))
    TT = x.shape[0]

    def to_heads(m):                                      # (TT,E)->(nh,TT,Dh)
        return jnp.transpose(m.reshape(TT, num_heads, head_dim), (1, 0, 2))

    q_ref[0] = to_heads(qkv[:, :E] * inv_scale).astype(jnp.bfloat16)
    k_ref[0] = to_heads(qkv[:, E:2 * E]).astype(jnp.bfloat16)
    v_ref[0] = to_heads(qkv[:, 2 * E:]).astype(jnp.bfloat16)


def flash_attn_kernel(q_ref, k_ref, v_ref, o_ref, m_ref, l_ref, acc_ref, *,
                      tq, tkv):
    """Causal flash attention, batched over heads, KV-tile streaming."""
    qi = pl.program_id(1)
    ki = pl.program_id(2)

    @pl.when(ki == 0)
    def _init():
        m_ref[...] = jnp.full_like(m_ref, -jnp.inf)
        l_ref[...] = jnp.zeros_like(l_ref)
        acc_ref[...] = jnp.zeros_like(acc_ref)

    # skip KV blocks that lie entirely in the causal future of this Q tile
    @pl.when(ki * tkv <= qi * tq + (tq - 1))
    def _compute():
        q = q_ref[0]                                      # (nh, TQ, Dh) bf16
        k = k_ref[0]                                      # (nh, TKV, Dh) bf16
        v = v_ref[0]
        s = jnp.einsum("hqd,hkd->hqk", q, k,
                       preferred_element_type=jnp.float32)  # (nh, TQ, TKV)
        row = jax.lax.broadcasted_iota(jnp.int32, (tq, tkv), 0) + qi * tq
        col = jax.lax.broadcasted_iota(jnp.int32, (tq, tkv), 1) + ki * tkv
        bias = jnp.where(col > row, jnp.float32(NEG_INF), jnp.float32(0.0))
        s = s + bias[None, :, :]
        m_new = jnp.maximum(m_ref[...], jnp.max(s, axis=-1, keepdims=True))
        a = jnp.exp(m_ref[...] - m_new)
        p = jnp.exp(s - m_new)
        l_ref[...] = a * l_ref[...] + jnp.sum(p, axis=-1, keepdims=True)
        acc_ref[...] = a * acc_ref[...] + jnp.einsum(
            "hqk,hkd->hqd", p.astype(jnp.bfloat16), v,
            preferred_element_type=jnp.float32)
        m_ref[...] = m_new

    @pl.when(ki == pl.num_programs(2) - 1)
    def _finalize():
        nh, _, dh = acc_ref.shape
        ctx = acc_ref[...] * pl.reciprocal(l_ref[...], approx=True)
        ctx = jnp.transpose(ctx, (1, 0, 2)).reshape(tq, nh * dh)
        o_ref[0] = ctx.astype(o_ref.dtype)                # lane-dense (TQ, E)


def out_proj_ffn_kernel(x_ref, ctx_ref, wo_ref, bo_ref, g_ref, b_ref,
                        w1_ref, b1_ref, w2_ref, b2_ref, o_ref,
                        x2_ref, acc_ref):
    """attn out-proj + residual + LN2 + H-tiled FFN (+residual)."""
    hstep = pl.program_id(2)

    @pl.when(hstep == 0)
    def _init():
        attn = jnp.dot(ctx_ref[0], wo_ref[...],
                       preferred_element_type=jnp.float32) + bo_ref[...]
        y = x_ref[0] + attn                   # residual 1 (dropout p=0 == id)
        acc_ref[...] = y
        x2_ref[...] = _layernorm(y, g_ref[...], b_ref[...]).astype(jnp.bfloat16)

    f = jnp.dot(x2_ref[...], w1_ref[...],
                preferred_element_type=jnp.float32) + b1_ref[...]
    f = _gelu(f)
    acc_ref[...] += jnp.dot(f.astype(jnp.bfloat16), w2_ref[...],
                            preferred_element_type=jnp.float32)

    @pl.when(hstep == pl.num_programs(2) - 1)
    def _finalize():
        o_ref[0] = (acc_ref[...] + b2_ref[...]).astype(o_ref.dtype)


def lm_head_kernel(x_ref, g_ref, b_ref, w_ref, o_ref, h_ref):
    """Final LayerNorm (computed once per seq-tile) + vocab-tiled LM head."""
    @pl.when(pl.program_id(2) == 0)
    def _ln():
        h_ref[...] = _layernorm(x_ref[0], g_ref[...],
                                b_ref[...]).astype(jnp.bfloat16)

    o_ref[0] = jnp.dot(h_ref[...], w_ref[...],
                       preferred_element_type=jnp.float32).astype(o_ref.dtype)


# ------------------------------ wrappers ------------------------------------

def run_transformer_block(x, p, num_heads):
    B, T, E = x.shape
    nh = num_heads
    dh = E // nh
    H = p["w1"].shape[1]
    f32, bf16 = jnp.float32, jnp.bfloat16

    TT = _tile(T, 256)
    nT = pl.cdiv(T, TT)

    # ---- kernel 1: LN1 + fused QKV projection ----
    qkv_est = 2 * (_nbytes((TT, E), f32) + _nbytes((E, 3 * E), bf16)
                   + 3 * _nbytes((nh, TT, dh), bf16))
    qkv_cost = pl.CostEstimate(
        flops=2 * B * T * E * 3 * E,
        transcendentals=B * T,
        bytes_accessed=B * T * E * 4 + E * 3 * E * 2 + 3 * B * T * E * 2)
    q, k, v = pl.pallas_call(
        functools.partial(qkv_proj_kernel, num_heads=nh, head_dim=dh),
        out_shape=tuple(jax.ShapeDtypeStruct((B, nh, T, dh), bf16)
                        for _ in range(3)),
        grid=(B, nT),
        in_specs=[
            pl.BlockSpec((1, TT, E), lambda b, t: (b, t, 0)),
            pl.BlockSpec((1, E), lambda b, t: (0, 0)),
            pl.BlockSpec((1, E), lambda b, t: (0, 0)),
            pl.BlockSpec((E, 3 * E), lambda b, t: (0, 0)),
        ],
        out_specs=tuple(
            pl.BlockSpec((1, nh, TT, dh), lambda b, t: (b, 0, t, 0))
            for _ in range(3)),
        compiler_params=_compiler_params(("parallel", "parallel"), qkv_est),
        cost_estimate=qkv_cost,
    )(x, p["ln1_g"], p["ln1_b"], p["w_qkv"])

    # ---- kernel 2: flash attention (KV streamed over the grid) ----
    TQ = _tile(T, 128)
    TKV = _tile(T, 128)
    nQ = pl.cdiv(T, TQ)
    nKV = pl.cdiv(T, TKV)
    attn_est = (2 * (3 * _nbytes((nh, max(TQ, TKV), dh), bf16)
                     + _nbytes((TQ, E), bf16))
                + 3 * _nbytes((nh, TQ, dh), f32))
    attn_cost = pl.CostEstimate(
        flops=4 * B * T * T * E,
        transcendentals=B * nh * T * T,
        bytes_accessed=3 * B * T * E * 2 + B * T * E * 2)
    ctx = pl.pallas_call(
        functools.partial(flash_attn_kernel, tq=TQ, tkv=TKV),
        out_shape=jax.ShapeDtypeStruct((B, T, E), bf16),
        grid=(B, nQ, nKV),
        in_specs=[
            pl.BlockSpec((1, nh, TQ, dh), lambda b, qi, ki: (b, 0, qi, 0)),
            pl.BlockSpec((1, nh, TKV, dh), lambda b, qi, ki: (b, 0, ki, 0)),
            pl.BlockSpec((1, nh, TKV, dh), lambda b, qi, ki: (b, 0, ki, 0)),
        ],
        out_specs=pl.BlockSpec((1, TQ, E), lambda b, qi, ki: (b, qi, 0)),
        scratch_shapes=[
            pltpu.VMEM((nh, TQ, 1), f32),      # running max m
            pltpu.VMEM((nh, TQ, 1), f32),      # running denom l
            pltpu.VMEM((nh, TQ, dh), f32),     # output accumulator
        ],
        compiler_params=_compiler_params(
            ("parallel", "parallel", "arbitrary"), attn_est),
        cost_estimate=attn_cost,
    )(q, k, v)

    # ---- kernel 3: out-proj + residual + LN2 + H-tiled FFN + residual ----
    tH = _tile(H, 512)
    nH = pl.cdiv(H, tH)
    ffn_est = (2 * (_nbytes((TT, E), f32) + _nbytes((TT, E), bf16)
                    + _nbytes((E, E), bf16) + _nbytes((E, tH), bf16)
                    + _nbytes((tH, E), bf16) + _nbytes((TT, E), f32))
               + _nbytes((TT, E), f32) + _nbytes((TT, E), bf16))
    ffn_cost = pl.CostEstimate(
        flops=2 * B * T * E * E + 4 * B * T * E * H,
        transcendentals=B * T * H,
        bytes_accessed=(3 * B * T * E * 4 + B * T * E * 2
                        + (E * E + 2 * E * H) * 2))
    out = pl.pallas_call(
        out_proj_ffn_kernel,
        out_shape=jax.ShapeDtypeStruct((B, T, E), x.dtype),
        grid=(B, nT, nH),
        in_specs=[
            pl.BlockSpec((1, TT, E), lambda b, t, h: (b, t, 0)),   # x
            pl.BlockSpec((1, TT, E), lambda b, t, h: (b, t, 0)),   # ctx
            pl.BlockSpec((E, E), lambda b, t, h: (0, 0)),          # wo
            pl.BlockSpec((1, E), lambda b, t, h: (0, 0)),          # bo
            pl.BlockSpec((1, E), lambda b, t, h: (0, 0)),          # ln2_g
            pl.BlockSpec((1, E), lambda b, t, h: (0, 0)),          # ln2_b
            pl.BlockSpec((E, tH), lambda b, t, h: (0, h)),         # w1 tile
            pl.BlockSpec((1, tH), lambda b, t, h: (0, h)),         # b1 tile
            pl.BlockSpec((tH, E), lambda b, t, h: (h, 0)),         # w2 tile
            pl.BlockSpec((1, E), lambda b, t, h: (0, 0)),          # b2
        ],
        out_specs=pl.BlockSpec((1, TT, E), lambda b, t, h: (b, t, 0)),
        scratch_shapes=[
            pltpu.VMEM((TT, E), bf16),     # LN2(x) as bf16 matmul operand
            pltpu.VMEM((TT, E), f32),      # residual + FFN accumulator
        ],
        compiler_params=_compiler_params(
            ("parallel", "parallel", "arbitrary"), ffn_est),
        cost_estimate=ffn_cost,
    )(x, ctx, p["wo"], p["bo"], p["ln2_g"], p["ln2_b"],
      p["w1"], p["b1"], p["w2"], p["b2"])
    return out


def run_lm_head(x, g, b, w_out):
    B, T, E = x.shape
    V = w_out.shape[1]
    f32, bf16 = jnp.float32, jnp.bfloat16
    TT = _tile(T, 256)
    tV = _tile(V, 512)
    nT = pl.cdiv(T, TT)
    nV = pl.cdiv(V, tV)
    est = (2 * (_nbytes((TT, E), f32) + _nbytes((E, tV), bf16)
                + _nbytes((TT, tV), f32))
           + _nbytes((TT, E), bf16))
    cost = pl.CostEstimate(
        flops=2 * B * T * E * V,
        transcendentals=B * T,
        bytes_accessed=B * T * E * 4 + E * V * 2 + B * T * V * 4)
    return pl.pallas_call(
        lm_head_kernel,
        out_shape=jax.ShapeDtypeStruct((B, T, V), jnp.float32),
        grid=(B, nT, nV),
        in_specs=[
            pl.BlockSpec((1, TT, E), lambda b, t, v: (b, t, 0)),
            pl.BlockSpec((1, E), lambda b, t, v: (0, 0)),
            pl.BlockSpec((1, E), lambda b, t, v: (0, 0)),
            pl.BlockSpec((E, tV), lambda b, t, v: (0, v)),
        ],
        out_specs=pl.BlockSpec((1, TT, tV), lambda b, t, v: (b, t, v)),
        scratch_shapes=[pltpu.VMEM((TT, E), bf16)],   # LN(x) reused over vocab
        compiler_params=_compiler_params(
            ("parallel", "parallel", "arbitrary"), est),
        cost_estimate=cost,
    )(x, g, b, w_out)


def gpt_forward(inp_idx, params, cfg):
    B, T = inp_idx.shape
    # TODO(synk): embedding gather stays in plain JAX (dynamic row gather);
    # everything downstream runs in Pallas kernels.
    tok_embs = jnp.take(params["tok_emb"], inp_idx, axis=0)   # (B, T, E)
    pos_embs = params["pos_emb"][:T]                          # (T, E)
    x = tok_embs + pos_embs[None]
    # drop_emb(rate=0) == identity
    for blk in params["blocks"]:
        x = run_transformer_block(x, blk, cfg["n_heads"])
    return run_lm_head(x, params["final_g"], params["final_b"],
                       params["w_out"])


# --------------------------- deterministic init ------------------------------

def init_params(key, cfg):
    E, V, C = cfg["emb_dim"], cfg["vocab_size"], cfg["context_length"]
    H = 4 * E
    keys = jax.random.split(key, 3 + cfg["n_layers"])
    params = {
        "tok_emb": 0.02 * jax.random.normal(keys[0], (V, E), jnp.float32),
        "pos_emb": 0.02 * jax.random.normal(keys[1], (C, E), jnp.float32),
        "final_g": jnp.ones((1, E), jnp.float32),
        "final_b": jnp.zeros((1, E), jnp.float32),
        # MXU operands stored in bf16 (f32 accumulation inside the kernels)
        "w_out": (0.02 * jax.random.normal(keys[2], (E, V), jnp.float32)
                  ).astype(jnp.bfloat16),
        "blocks": [],
    }
    for i in range(cfg["n_layers"]):
        bk = jax.random.split(keys[3 + i], 6)
        wq = 0.02 * jax.random.normal(bk[0], (E, E), jnp.float32)
        wk = 0.02 * jax.random.normal(bk[1], (E, E), jnp.float32)
        wv = 0.02 * jax.random.normal(bk[2], (E, E), jnp.float32)
        params["blocks"].append(dict(
            ln1_g=jnp.ones((1, E), jnp.float32),
            ln1_b=jnp.zeros((1, E), jnp.float32),
            # fused QKV weight -> one wide (E, 3E) matmul (qkv_bias=False)
            w_qkv=jnp.concatenate([wq, wk, wv], axis=1).astype(jnp.bfloat16),
            wo=(0.02 * jax.random.normal(bk[3], (E, E), jnp.float32)
                ).astype(jnp.bfloat16),
            bo=jnp.zeros((1, E), jnp.float32),
            ln2_g=jnp.ones((1, E), jnp.float32),
            ln2_b=jnp.zeros((1, E), jnp.float32),
            w1=(0.02 * jax.random.normal(bk[4], (E, H), jnp.float32)
                ).astype(jnp.bfloat16),
            b1=jnp.zeros((1, H), jnp.float32),
            w2=(0.02 * jax.random.normal(bk[5], (H, E), jnp.float32)
                ).astype(jnp.bfloat16),
            b2=jnp.zeros((1, E), jnp.float32),
        ))
    return params


if __name__ == "__main__":
    cfg = dict(vocab_size=64, context_length=8, emb_dim=32, n_heads=4,
               n_layers=2, drop_rate=0.0, qkv_bias=False)

    key = jax.random.PRNGKey(0)
    pkey, dkey = jax.random.split(key)
    params = init_params(pkey, cfg)

    B, T = 2, 8
    inp_idx = jax.random.randint(dkey, (B, T), 0, cfg["vocab_size"],
                                 dtype=jnp.int32)

    fwd = jax.jit(lambda idx, p: gpt_forward(idx, p, cfg))
    logits = fwd(inp_idx, params)
    jax.block_until_ready(logits)
    assert logits.shape == (B, T, cfg["vocab_size"])
    assert bool(jnp.all(jnp.isfinite(logits)))
    print("KERNEL_OK")
</pallas_src>

<mosaic_0001>
module attributes {stable_mosaic.version = 11 : i64} {
  func.func @qkv_proj_kernel(%arg0: i32, %arg1: i32, %arg2: memref<1x8x32xf32, #tpu.memory_space<vmem>>, %arg3: memref<1x32xf32, #tpu.memory_space<vmem>>, %arg4: memref<1x32xf32, #tpu.memory_space<vmem>>, %arg5: memref<32x96xbf16, #tpu.memory_space<vmem>>, %arg6: memref<1x4x8x8xbf16, #tpu.memory_space<vmem>>, %arg7: memref<1x4x8x8xbf16, #tpu.memory_space<vmem>>, %arg8: memref<1x4x8x8xbf16, #tpu.memory_space<vmem>>) attributes {dimension_semantics = [#tpu.dimension_semantics<parallel>, #tpu.dimension_semantics<parallel>], iteration_bounds = array<i64: 2, 1>, scalar_prefetch = 0 : i64, scratch_operands = 0 : i64, tpu.core_type = #tpu.core_type<tc>, window_params = [{transform_indices = @transform_0, window_bounds = array<i64: 1, 8, 32>}, {pipeline_mode = #tpu.pipeline_mode<synchronous>, transform_indices = @transform_1, window_bounds = array<i64: 1, 32>}, {pipeline_mode = #tpu.pipeline_mode<synchronous>, transform_indices = @transform_2, window_bounds = array<i64: 1, 32>}, {pipeline_mode = #tpu.pipeline_mode<synchronous>, transform_indices = @transform_3, window_bounds = array<i64: 32, 96>}, {transform_indices = @transform_4, window_bounds = array<i64: 1, 4, 8, 8>}, {transform_indices = @transform_5, window_bounds = array<i64: 1, 4, 8, 8>}, {transform_indices = @transform_6, window_bounds = array<i64: 1, 4, 8, 8>}]} {
    %c0 = arith.constant 0 : index
    %c0_0 = arith.constant 0 : index
    %c0_1 = arith.constant 0 : index
    %0 = vector.load %arg2[%c0, %c0_0, %c0_1] : memref<1x8x32xf32, #tpu.memory_space<vmem>>, vector<1x8x32xf32>
    %1 = vector.shape_cast %0 : vector<1x8x32xf32> to vector<8x32xf32>
    %c0_2 = arith.constant 0 : index
    %c0_3 = arith.constant 0 : index
    %2 = vector.load %arg3[%c0_2, %c0_3] : memref<1x32xf32, #tpu.memory_space<vmem>>, vector<1x32xf32>
    %c0_4 = arith.constant 0 : index
    %c0_5 = arith.constant 0 : index
    %3 = vector.load %arg4[%c0_4, %c0_5] : memref<1x32xf32, #tpu.memory_space<vmem>>, vector<1x32xf32>
    %cst = arith.constant dense<0.000000e+00> : vector<8xf32>
    %4 = vector.multi_reduction <add>, %1, %cst [1] : vector<8x32xf32> to vector<8xf32>
    %5 = vector.shape_cast %4 : vector<8xf32> to vector<8x1xf32>
    %cst_6 = arith.constant 3.200000e+01 : f32
    %6 = vector.broadcast %cst_6 : f32 to vector<8x1xf32>
    %7 = arith.divf %5, %6 : vector<8x1xf32>
    %8 = vector.broadcast %7 : vector<8x1xf32> to vector<8x32xf32>
    %9 = arith.subf %1, %8 : vector<8x32xf32>
    %10 = arith.mulf %9, %9 : vector<8x32xf32>
    %cst_7 = arith.constant dense<0.000000e+00> : vector<8xf32>
    %11 = vector.multi_reduction <add>, %10, %cst_7 [1] : vector<8x32xf32> to vector<8xf32>
    %12 = vector.shape_cast %11 : vector<8xf32> to vector<8x1xf32>
    %cst_8 = arith.constant 3.200000e+01 : f32
    %13 = vector.broadcast %cst_8 : f32 to vector<8x1xf32>
    %14 = arith.divf %12, %13 : vector<8x1xf32>
    %15 = vector.broadcast %7 : vector<8x1xf32> to vector<8x32xf32>
    %16 = arith.subf %1, %15 : vector<8x32xf32>
    %cst_9 = arith.constant 9.99999974E-6 : f32
    %17 = vector.broadcast %cst_9 : f32 to vector<8x1xf32>
    %18 = arith.addf %14, %17 : vector<8x1xf32>
    %19 = math.rsqrt %18 : vector<8x1xf32>
    %20 = vector.broadcast %19 : vector<8x1xf32> to vector<8x32xf32>
    %21 = arith.mulf %16, %20 : vector<8x32xf32>
    %22 = vector.broadcast %2 : vector<1x32xf32> to vector<8x32xf32>
    %23 = arith.mulf %21, %22 : vector<8x32xf32>
    %24 = vector.broadcast %3 : vector<1x32xf32> to vector<8x32xf32>
    %25 = arith.addf %23, %24 : vector<8x32xf32>
    %26 = arith.truncf %25 : vector<8x32xf32> to vector<8x32xbf16>
    %c0_10 = arith.constant 0 : index
    %c0_11 = arith.constant 0 : index
    %27 = vector.load %arg5[%c0_10, %c0_11] : memref<32x96xbf16, #tpu.memory_space<vmem>>, vector<32x96xbf16>
    %cst_12 = arith.constant dense<0.000000e+00> : vector<8x96xf32>
    %28 = tpu.matmul %26, %27, %cst_12 {dimension_numbers = #tpu.dot_dimension_numbers<[1], [0], [0], [1], [0, 0, 1, 1], [], []>} : vector<8x32xbf16>, vector<32x96xbf16>, vector<8x96xf32> -> vector<8x96xf32>
    %29 = vector.extract_strided_slice %28 {offsets = [0, 0], sizes = [8, 32], strides = [1, 1]} : vector<8x96xf32> to vector<8x32xf32>
    %cst_13 = arith.constant 0.353553385 : f32
    %30 = vector.broadcast %cst_13 : f32 to vector<8x32xf32>
    %31 = arith.mulf %29, %30 : vector<8x32xf32>
    %32 = vector.shape_cast %31 : vector<8x32xf32> to vector<8x4x8xf32>
    %33 = tpu.transpose %32, [1, 0, 2] : vector<8x4x8xf32> -> vector<4x8x8xf32>
    %34 = arith.truncf %33 : vector<4x8x8xf32> to vector<4x8x8xbf16>
    %c0_14 = arith.constant 0 : index
    %c0_15 = arith.constant 0 : index
    %c0_16 = arith.constant 0 : index
    %c0_17 = arith.constant 0 : index
    %35 = vector.load %arg6[%c0_14, %c0_15, %c0_16, %c0_17] : memref<1x4x8x8xbf16, #tpu.memory_space<vmem>>, vector<1x4x8x8xbf16>
    %36 = vector.shape_cast %35 : vector<1x4x8x8xbf16> to vector<4x8x8xbf16>
    %37 = vector.shape_cast %34 : vector<4x8x8xbf16> to vector<1x4x8x8xbf16>
    tpu.vector_store %arg6[%c0_14, %c0_15, %c0_16, %c0_17], %37 {strides = array<i32>} : memref<1x4x8x8xbf16, #tpu.memory_space<vmem>>, vector<1x4x8x8xbf16>,
    %38 = vector.extract_strided_slice %28 {offsets = [0, 32], sizes = [8, 32], strides = [1, 1]} : vector<8x96xf32> to vector<8x32xf32>
    %39 = vector.shape_cast %38 : vector<8x32xf32> to vector<8x4x8xf32>
    %40 = tpu.transpose %39, [1, 0, 2] : vector<8x4x8xf32> -> vector<4x8x8xf32>
    %41 = arith.truncf %40 : vector<4x8x8xf32> to vector<4x8x8xbf16>
    %c0_18 = arith.constant 0 : index
    %c0_19 = arith.constant 0 : index
    %c0_20 = arith.constant 0 : index
    %c0_21 = arith.constant 0 : index
    %42 = vector.load %arg7[%c0_18, %c0_19, %c0_20, %c0_21] : memref<1x4x8x8xbf16, #tpu.memory_space<vmem>>, vector<1x4x8x8xbf16>
    %43 = vector.shape_cast %42 : vector<1x4x8x8xbf16> to vector<4x8x8xbf16>
    %44 = vector.shape_cast %41 : vector<4x8x8xbf16> to vector<1x4x8x8xbf16>
    tpu.vector_store %arg7[%c0_18, %c0_19, %c0_20, %c0_21], %44 {strides = array<i32>} : memref<1x4x8x8xbf16, #tpu.memory_space<vmem>>, vector<1x4x8x8xbf16>,
    %45 = vector.extract_strided_slice %28 {offsets = [0, 64], sizes = [8, 32], strides = [1, 1]} : vector<8x96xf32> to vector<8x32xf32>
    %46 = vector.shape_cast %45 : vector<8x32xf32> to vector<8x4x8xf32>
    %47 = tpu.transpose %46, [1, 0, 2] : vector<8x4x8xf32> -> vector<4x8x8xf32>
    %48 = arith.truncf %47 : vector<4x8x8xf32> to vector<4x8x8xbf16>
    %c0_22 = arith.constant 0 : index
    %c0_23 = arith.constant 0 : index
    %c0_24 = arith.constant 0 : index
    %c0_25 = arith.constant 0 : index
    %49 = vector.load %arg8[%c0_22, %c0_23, %c0_24, %c0_25] : memref<1x4x8x8xbf16, #tpu.memory_space<vmem>>, vector<1x4x8x8xbf16>
    %50 = vector.shape_cast %49 : vector<1x4x8x8xbf16> to vector<4x8x8xbf16>
    %51 = vector.shape_cast %48 : vector<4x8x8xbf16> to vector<1x4x8x8xbf16>
    tpu.vector_store %arg8[%c0_22, %c0_23, %c0_24, %c0_25], %51 {strides = array<i32>} : memref<1x4x8x8xbf16, #tpu.memory_space<vmem>>, vector<1x4x8x8xbf16>,
    return
  }
  func.func @transform_0(%arg0: i32, %arg1: i32) -> (i32, i32, i32) {
    %c0_i32 = arith.constant 0 : i32
    %c0_i32_0 = arith.constant 0 : i32
    return %arg0, %arg1, %c0_i32 : i32, i32, i32
  }
  func.func @transform_1(%arg0: i32, %arg1: i32) -> (i32, i32) {
    %c0_i32 = arith.constant 0 : i32
    %c0_i32_0 = arith.constant 0 : i32
    %c0_i32_1 = arith.constant 0 : i32
    return %c0_i32, %c0_i32_0 : i32, i32
  }
  func.func @transform_2(%arg0: i32, %arg1: i32) -> (i32, i32) {
    %c0_i32 = arith.constant 0 : i32
    %c0_i32_0 = arith.constant 0 : i32
    %c0_i32_1 = arith.constant 0 : i32
    return %c0_i32, %c0_i32_0 : i32, i32
  }
  func.func @transform_3(%arg0: i32, %arg1: i32) -> (i32, i32) {
    %c0_i32 = arith.constant 0 : i32
    %c0_i32_0 = arith.constant 0 : i32
    %c0_i32_1 = arith.constant 0 : i32
    return %c0_i32, %c0_i32_0 : i32, i32
  }
  func.func @transform_4(%arg0: i32, %arg1: i32) -> (i32, i32, i32, i32) {
    %c0_i32 = arith.constant 0 : i32
    %c0_i32_0 = arith.constant 0 : i32
    %c0_i32_1 = arith.constant 0 : i32
    return %arg0, %c0_i32, %arg1, %c0_i32_0 : i32, i32, i32, i32
  }
  func.func @transform_5(%arg0: i32, %arg1: i32) -> (i32, i32, i32, i32) {
    %c0_i32 = arith.constant 0 : i32
    %c0_i32_0 = arith.constant 0 : i32
    %c0_i32_1 = arith.constant 0 : i32
    return %arg0, %c0_i32, %arg1, %c0_i32_0 : i32, i32, i32, i32
  }
  func.func @transform_6(%arg0: i32, %arg1: i32) -> (i32, i32, i32, i32) {
    %c0_i32 = arith.constant 0 : i32
    %c0_i32_0 = arith.constant 0 : i32
    %c0_i32_1 = arith.constant 0 : i32
    return %arg0, %c0_i32, %arg1, %c0_i32_0 : i32, i32, i32, i32
  }
}

module attributes {stable_mosaic.version = 11 : i64} {
  func.func @flash_attn_kernel(%arg0: i32, %arg1: i32, %arg2: i32, %arg3: memref<1x4x8x8xbf16, #tpu.memory_space<vmem>>, %arg4: memref<1x4x8x8xbf16, #tpu.memory_space<vmem>>, %arg5: memref<1x4x8x8xbf16, #tpu.memory_space<vmem>>, %arg6: memref<1x8x32xbf16, #tpu.memory_space<vmem>>, %arg7: memref<4x8x1xf32, #tpu.memory_space<vmem>>, %arg8: memref<4x8x1xf32, #tpu.memory_space<vmem>>, %arg9: memref<4x8x8xf32, #tpu.memory_space<vmem>>) attributes {dimension_semantics = [#tpu.dimension_semantics<parallel>, #tpu.dimension_semantics<parallel>, #tpu.dimension_semantics<arbitrary>], iteration_bounds = array<i64: 2, 1, 1>, scalar_prefetch = 0 : i64, scratch_operands = 3 : i64, tpu.core_type = #tpu.core_type<tc>, window_params = [{transform_indices = @transform_0, window_bounds = array<i64: 1, 4, 8, 8>}, {transform_indices = @transform_1, window_bounds = array<i64: 1, 4, 8, 8>}, {transform_indices = @transform_2, window_bounds = array<i64: 1, 4, 8, 8>}, {transform_indices = @transform_3, window_bounds = array<i64: 1, 8, 32>}]} {
    %c0_i32 = arith.constant 0 : i32
    %0 = arith.cmpi eq, %arg2, %c0_i32 : i32
    %1 = arith.extui %0 : i1 to i32
    %c0_i32_0 = arith.constant 0 : i32
    %2 = arith.cmpi ne, %1, %c0_i32_0 : i32
    scf.if %2 {
      %cst = arith.constant 0xFF800000 : f32
      %12 = vector.broadcast %cst : f32 to vector<4x8x1xf32>
      %c0 = arith.constant 0 : index
      %c0_5 = arith.constant 0 : index
      %c0_6 = arith.constant 0 : index
      %13 = vector.load %arg7[%c0, %c0_5, %c0_6] : memref<4x8x1xf32, #tpu.memory_space<vmem>>, vector<4x8x1xf32>
      tpu.vector_store %arg7[%c0, %c0_5, %c0_6], %12 {strides = array<i32>} : memref<4x8x1xf32, #tpu.memory_space<vmem>>, vector<4x8x1xf32>,
      %cst_7 = arith.constant 0.000000e+00 : f32
      %14 = vector.broadcast %cst_7 : f32 to vector<4x8x1xf32>
      %c0_8 = arith.constant 0 : index
      %c0_9 = arith.constant 0 : index
      %c0_10 = arith.constant 0 : index
      %15 = vector.load %arg8[%c0_8, %c0_9, %c0_10] : memref<4x8x1xf32, #tpu.memory_space<vmem>>, vector<4x8x1xf32>
      tpu.vector_store %arg8[%c0_8, %c0_9, %c0_10], %14 {strides = array<i32>} : memref<4x8x1xf32, #tpu.memory_space<vmem>>, vector<4x8x1xf32>,
      %cst_11 = arith.constant 0.000000e+00 : f32
      %16 = vector.broadcast %cst_11 : f32 to vector<4x8x8xf32>
      %c0_12 = arith.constant 0 : index
      %c0_13 = arith.constant 0 : index
      %c0_14 = arith.constant 0 : index
      %17 = vector.load %arg9[%c0_12, %c0_13, %c0_14] : memref<4x8x8xf32, #tpu.memory_space<vmem>>, vector<4x8x8xf32>
      tpu.vector_store %arg9[%c0_12, %c0_13, %c0_14], %16 {strides = array<i32>} : memref<4x8x8xf32, #tpu.memory_space<vmem>>, vector<4x8x8xf32>,
    } else {
    }
    %c8_i32 = arith.constant 8 : i32
    %3 = arith.muli %arg2, %c8_i32 : i32
    %c8_i32_1 = arith.constant 8 : i32
    %4 = arith.muli %arg1, %c8_i32_1 : i32
    %c7_i32 = arith.constant 7 : i32
    %5 = arith.addi %4, %c7_i32 : i32
    %6 = arith.cmpi sle, %3, %5 : i32
    %7 = arith.extui %6 : i1 to i32
    %c0_i32_2 = arith.constant 0 : i32
    %8 = arith.cmpi ne, %7, %c0_i32_2 : i32
    scf.if %8 {
      %c0 = arith.constant 0 : index
      %c0_5 = arith.constant 0 : index
      %c0_6 = arith.constant 0 : index
      %c0_7 = arith.constant 0 : index
      %12 = vector.load %arg3[%c0, %c0_5, %c0_6, %c0_7] : memref<1x4x8x8xbf16, #tpu.memory_space<vmem>>, vector<1x4x8x8xbf16>
      %13 = vector.shape_cast %12 : vector<1x4x8x8xbf16> to vector<4x8x8xbf16>
      %c0_8 = arith.constant 0 : index
      %c0_9 = arith.constant 0 : index
      %c0_10 = arith.constant 0 : index
      %c0_11 = arith.constant 0 : index
      %14 = vector.load %arg4[%c0_8, %c0_9, %c0_10, %c0_11] : memref<1x4x8x8xbf16, #tpu.memory_space<vmem>>, vector<1x4x8x8xbf16>
      %15 = vector.shape_cast %14 : vector<1x4x8x8xbf16> to vector<4x8x8xbf16>
      %c0_12 = arith.constant 0 : index
      %c0_13 = arith.constant 0 : index
      %c0_14 = arith.constant 0 : index
      %c0_15 = arith.constant 0 : index
      %16 = vector.load %arg5[%c0_12, %c0_13, %c0_14, %c0_15] : memref<1x4x8x8xbf16, #tpu.memory_space<vmem>>, vector<1x4x8x8xbf16>
      %17 = vector.shape_cast %16 : vector<1x4x8x8xbf16> to vector<4x8x8xbf16>
      "tpu.trace_start"() <{level = 10 : i32, message = "hqd,hkd->hqk"}> : () -> ()
      %cst = arith.constant dense<0.000000e+00> : vector<4x8x8xf32>
      %18 = tpu.matmul %13, %15, %cst {dimension_numbers = #tpu.dot_dimension_numbers<[2], [2], [1], [1], [0, 0, 0, 1, 1, 1], [0], [0]>} : vector<4x8x8xbf16>, vector<4x8x8xbf16>, vector<4x8x8xf32> -> vector<4x8x8xf32>
      "tpu.trace_stop"() : () -> ()
      %19 = tpu.iota {dimensions = array<i32: 0>} : vector<8x8xi32>
      %c8_i32_16 = arith.constant 8 : i32
      %20 = arith.muli %arg1, %c8_i32_16 : i32
      %21 = vector.broadcast %20 : i32 to vector<8x8xi32>
      %22 = arith.addi %19, %21 : vector<8x8xi32>
      %23 = tpu.iota {dimensions = array<i32: 1>} : vector<8x8xi32>
      %c8_i32_17 = arith.constant 8 : i32
      %24 = arith.muli %arg2, %c8_i32_17 : i32
      %25 = vector.broadcast %24 : i32 to vector<8x8xi32>
      %26 = arith.addi %23, %25 : vector<8x8xi32>
      %27 = arith.cmpi sgt, %26, %22 : vector<8x8xi32>
      %cst_18 = arith.constant -1.000000e+30 : f32
      %cst_19 = arith.constant 0.000000e+00 : f32
      %28 = vector.broadcast %cst_18 : f32 to vector<8x8xf32>
      %29 = vector.broadcast %cst_19 : f32 to vector<8x8xf32>
      %30 = arith.select %27, %28, %29 : vector<8x8xi1>, vector<8x8xf32>
      %31 = vector.shape_cast %30 : vector<8x8xf32> to vector<1x8x8xf32>
      %32 = vector.broadcast %31 : vector<1x8x8xf32> to vector<4x8x8xf32>
      %33 = arith.addf %18, %32 : vector<4x8x8xf32>
      %c0_20 = arith.constant 0 : index
      %c0_21 = arith.constant 0 : index
      %c0_22 = arith.constant 0 : index
      %34 = vector.load %arg7[%c0_20, %c0_21, %c0_22] : memref<4x8x1xf32, #tpu.memory_space<vmem>>, vector<4x8x1xf32>
      %cst_23 = arith.constant dense<0xFF800000> : vector<4x8xf32>
      %35 = vector.multi_reduction <maximumf>, %33, %cst_23 [2] : vector<4x8x8xf32> to vector<4x8xf32>
      %36 = vector.shape_cast %35 : vector<4x8xf32> to vector<4x8x1xf32>
      %37 = arith.maximumf %34, %36 : vector<4x8x1xf32>
      %c0_24 = arith.constant 0 : index
      %c0_25 = arith.constant 0 : index
      %c0_26 = arith.constant 0 : index
      %38 = vector.load %arg7[%c0_24, %c0_25, %c0_26] : memref<4x8x1xf32, #tpu.memory_space<vmem>>, vector<4x8x1xf32>
      %39 = arith.subf %38, %37 : vector<4x8x1xf32>
      %40 = math.exp %39 : vector<4x8x1xf32>
      %41 = vector.broadcast %37 : vector<4x8x1xf32> to vector<4x8x8xf32>
      %42 = arith.subf %33, %41 : vector<4x8x8xf32>
      %43 = math.exp %42 : vector<4x8x8xf32>
      %c0_27 = arith.constant 0 : index
      %c0_28 = arith.constant 0 : index
      %c0_29 = arith.constant 0 : index
      %44 = vector.load %arg8[%c0_27, %c0_28, %c0_29] : memref<4x8x1xf32, #tpu.memory_space<vmem>>, vector<4x8x1xf32>
      %45 = arith.mulf %40, %44 : vector<4x8x1xf32>
      %cst_30 = arith.constant dense<0.000000e+00> : vector<4x8xf32>
      %46 = vector.multi_reduction <add>, %43, %cst_30 [2] : vector<4x8x8xf32> to vector<4x8xf32>
      %47 = vector.shape_cast %46 : vector<4x8xf32> to vector<4x8x1xf32>
      %48 = arith.addf %45, %47 : vector<4x8x1xf32>
      %c0_31 = arith.constant 0 : index
      %c0_32 = arith.constant 0 : index
      %c0_33 = arith.constant 0 : index
      %49 = vector.load %arg8[%c0_31, %c0_32, %c0_33] : memref<4x8x1xf32, #tpu.memory_space<vmem>>, vector<4x8x1xf32>
      tpu.vector_store %arg8[%c0_31, %c0_32, %c0_33], %48 {strides = array<i32>} : memref<4x8x1xf32, #tpu.memory_space<vmem>>, vector<4x8x1xf32>,
      %c0_34 = arith.constant 0 : index
      %c0_35 = arith.constant 0 : index
      %c0_36 = arith.constant 0 : index
      %50 = vector.load %arg9[%c0_34, %c0_35, %c0_36] : memref<4x8x8xf32, #tpu.memory_space<vmem>>, vector<4x8x8xf32>
      %51 = vector.broadcast %40 : vector<4x8x1xf32> to vector<4x8x8xf32>
      %52 = arith.mulf %51, %50 : vector<4x8x8xf32>
      %53 = arith.truncf %43 : vector<4x8x8xf32> to vector<4x8x8xbf16>
      "tpu.trace_start"() <{level = 10 : i32, message = "hqk,hkd->hqd"}> : () -> ()
      %cst_37 = arith.constant dense<0.000000e+00> : vector<4x8x8xf32>
      %54 = tpu.matmul %53, %17, %cst_37 {dimension_numbers = #tpu.dot_dimension_numbers<[2], [1], [1], [2], [0, 0, 0, 1, 1, 2], [0], [0]>} : vector<4x8x8xbf16>, vector<4x8x8xbf16>, vector<4x8x8xf32> -> vector<4x8x8xf32>
      "tpu.trace_stop"() : () -> ()
      %55 = arith.addf %52, %54 : vector<4x8x8xf32>
      %c0_38 = arith.constant 0 : index
      %c0_39 = arith.constant 0 : index
      %c0_40 = arith.constant 0 : index
      %56 = vector.load %arg9[%c0_38, %c0_39, %c0_40] : memref<4x8x8xf32, #tpu.memory_space<vmem>>, vector<4x8x8xf32>
      tpu.vector_store %arg9[%c0_38, %c0_39, %c0_40], %55 {strides = array<i32>} : memref<4x8x8xf32, #tpu.memory_space<vmem>>, vector<4x8x8xf32>,
      %c0_41 = arith.constant 0 : index
      %c0_42 = arith.constant 0 : index
      %c0_43 = arith.constant 0 : index
      %57 = vector.load %arg7[%c0_41, %c0_42, %c0_43] : memref<4x8x1xf32, #tpu.memory_space<vmem>>, vector<4x8x1xf32>
      tpu.vector_store %arg7[%c0_41, %c0_42, %c0_43], %37 {strides = array<i32>} : memref<4x8x1xf32, #tpu.memory_space<vmem>>, vector<4x8x1xf32>,
    } else {
    }
    %c0_i32_3 = arith.constant 0 : i32
    %9 = arith.cmpi eq, %arg2, %c0_i32_3 : i32
    %10 = arith.extui %9 : i1 to i32
    %c0_i32_4 = arith.constant 0 : i32
    %11 = arith.cmpi ne, %10, %c0_i32_4 : i32
    scf.if %11 {
      %c0 = arith.constant 0 : index
      %c0_5 = arith.constant 0 : index
      %c0_6 = arith.constant 0 : index
      %12 = vector.load %arg9[%c0, %c0_5, %c0_6] : memref<4x8x8xf32, #tpu.memory_space<vmem>>, vector<4x8x8xf32>
      %c0_7 = arith.constant 0 : index
      %c0_8 = arith.constant 0 : index
      %c0_9 = arith.constant 0 : index
      %13 = vector.load %arg8[%c0_7, %c0_8, %c0_9] : memref<4x8x1xf32, #tpu.memory_space<vmem>>, vector<4x8x1xf32>
      %14 = tpu.reciprocal %13 {approx = true} : vector<4x8x1xf32> -> vector<4x8x1xf32>
      %15 = vector.broadcast %14 : vector<4x8x1xf32> to vector<4x8x8xf32>
      %16 = arith.mulf %12, %15 : vector<4x8x8xf32>
      %17 = tpu.transpose %16, [1, 0, 2] : vector<4x8x8xf32> -> vector<8x4x8xf32>
      %18 = vector.shape_cast %17 : vector<8x4x8xf32> to vector<8x32xf32>
      %19 = arith.truncf %18 : vector<8x32xf32> to vector<8x32xbf16>
      %c0_10 = arith.constant 0 : index
      %c0_11 = arith.constant 0 : index
      %c0_12 = arith.constant 0 : index
      %20 = vector.load %arg6[%c0_10, %c0_11, %c0_12] : memref<1x8x32xbf16, #tpu.memory_space<vmem>>, vector<1x8x32xbf16>
      %21 = vector.shape_cast %20 : vector<1x8x32xbf16> to vector<8x32xbf16>
      %22 = vector.shape_cast %19 : vector<8x32xbf16> to vector<1x8x32xbf16>
      tpu.vector_store %arg6[%c0_10, %c0_11, %c0_12], %22 {strides = array<i32>} : memref<1x8x32xbf16, #tpu.memory_space<vmem>>, vector<1x8x32xbf16>,
    } else {
    }
    return
  }
  func.func @transform_0(%arg0: i32, %arg1: i32, %arg2: i32) -> (i32, i32, i32, i32) {
    %c0_i32 = arith.constant 0 : i32
    %c0_i32_0 = arith.constant 0 : i32
    %c0_i32_1 = arith.constant 0 : i32
    return %arg0, %c0_i32, %arg1, %c0_i32_0 : i32, i32, i32, i32
  }
  func.func @transform_1(%arg0: i32, %arg1: i32, %arg2: i32) -> (i32, i32, i32, i32) {
    %c0_i32 = arith.constant 0 : i32
    %c0_i32_0 = arith.constant 0 : i32
    %c0_i32_1 = arith.constant 0 : i32
    return %arg0, %c0_i32, %arg2, %c0_i32_0 : i32, i32, i32, i32
  }
  func.func @transform_2(%arg0: i32, %arg1: i32, %arg2: i32) -> (i32, i32, i32, i32) {
    %c0_i32 = arith.constant 0 : i32
    %c0_i32_0 = arith.constant 0 : i32
    %c0_i32_1 = arith.constant 0 : i32
    return %arg0, %c0_i32, %arg2, %c0_i32_0 : i32, i32, i32, i32
  }
  func.func @transform_3(%arg0: i32, %arg1: i32, %arg2: i32) -> (i32, i32, i32) {
    %c0_i32 = arith.constant 0 : i32
    %c0_i32_0 = arith.constant 0 : i32
    return %arg0, %arg1, %c0_i32 : i32, i32, i32
  }
}

module attributes {stable_mosaic.version = 11 : i64} {
  func.func @out_proj_ffn_kernel(%arg0: i32, %arg1: i32, %arg2: i32, %arg3: memref<1x8x32xf32, #tpu.memory_space<vmem>>, %arg4: memref<1x8x32xbf16, #tpu.memory_space<vmem>>, %arg5: memref<32x32xbf16, #tpu.memory_space<vmem>>, %arg6: memref<1x32xf32, #tpu.memory_space<vmem>>, %arg7: memref<1x32xf32, #tpu.memory_space<vmem>>, %arg8: memref<1x32xf32, #tpu.memory_space<vmem>>, %arg9: memref<32x128xbf16, #tpu.memory_space<vmem>>, %arg10: memref<1x128xf32, #tpu.memory_space<vmem>>, %arg11: memref<128x32xbf16, #tpu.memory_space<vmem>>, %arg12: memref<1x32xf32, #tpu.memory_space<vmem>>, %arg13: memref<1x8x32xf32, #tpu.memory_space<vmem>>, %arg14: memref<8x32xbf16, #tpu.memory_space<vmem>>, %arg15: memref<8x32xf32, #tpu.memory_space<vmem>>) attributes {dimension_semantics = [#tpu.dimension_semantics<parallel>, #tpu.dimension_semantics<parallel>, #tpu.dimension_semantics<arbitrary>], iteration_bounds = array<i64: 2, 1, 1>, scalar_prefetch = 0 : i64, scratch_operands = 2 : i64, tpu.core_type = #tpu.core_type<tc>, window_params = [{transform_indices = @transform_0, window_bounds = array<i64: 1, 8, 32>}, {transform_indices = @transform_1, window_bounds = array<i64: 1, 8, 32>}, {pipeline_mode = #tpu.pipeline_mode<synchronous>, transform_indices = @transform_2, window_bounds = array<i64: 32, 32>}, {pipeline_mode = #tpu.pipeline_mode<synchronous>, transform_indices = @transform_3, window_bounds = array<i64: 1, 32>}, {pipeline_mode = #tpu.pipeline_mode<synchronous>, transform_indices = @transform_4, window_bounds = array<i64: 1, 32>}, {pipeline_mode = #tpu.pipeline_mode<synchronous>, transform_indices = @transform_5, window_bounds = array<i64: 1, 32>}, {transform_indices = @transform_6, window_bounds = array<i64: 32, 128>}, {transform_indices = @transform_7, window_bounds = array<i64: 1, 128>}, {transform_indices = @transform_8, window_bounds = array<i64: 128, 32>}, {pipeline_mode = #tpu.pipeline_mode<synchronous>, transform_indices = @transform_9, window_bounds = array<i64: 1, 32>}, {transform_indices = @transform_10, window_bounds = array<i64: 1, 8, 32>}]} {
    %c0_i32 = arith.constant 0 : i32
    %0 = arith.cmpi eq, %arg2, %c0_i32 : i32
    %1 = arith.extui %0 : i1 to i32
    %c0_i32_0 = arith.constant 0 : i32
    %2 = arith.cmpi ne, %1, %c0_i32_0 : i32
    scf.if %2 {
      %c0_19 = arith.constant 0 : index
      %c0_20 = arith.constant 0 : index
      %c0_21 = arith.constant 0 : index
      %31 = vector.load %arg4[%c0_19, %c0_20, %c0_21] : memref<1x8x32xbf16, #tpu.memory_space<vmem>>, vector<1x8x32xbf16>
      %32 = vector.shape_cast %31 : vector<1x8x32xbf16> to vector<8x32xbf16>
      %c0_22 = arith.constant 0 : index
      %c0_23 = arith.constant 0 : index
      %33 = vector.load %arg5[%c0_22, %c0_23] : memref<32x32xbf16, #tpu.memory_space<vmem>>, vector<32x32xbf16>
      %cst_24 = arith.constant dense<0.000000e+00> : vector<8x32xf32>
      %34 = tpu.matmul %32, %33, %cst_24 {dimension_numbers = #tpu.dot_dimension_numbers<[1], [0], [0], [1], [0, 0, 1, 1], [], []>} : vector<8x32xbf16>, vector<32x32xbf16>, vector<8x32xf32> -> vector<8x32xf32>
      %c0_25 = arith.constant 0 : index
      %c0_26 = arith.constant 0 : index
      %35 = vector.load %arg6[%c0_25, %c0_26] : memref<1x32xf32, #tpu.memory_space<vmem>>, vector<1x32xf32>
      %36 = vector.broadcast %35 : vector<1x32xf32> to vector<8x32xf32>
      %37 = arith.addf %34, %36 : vector<8x32xf32>
      %c0_27 = arith.constant 0 : index
      %c0_28 = arith.constant 0 : index
      %c0_29 = arith.constant 0 : index
      %38 = vector.load %arg3[%c0_27, %c0_28, %c0_29] : memref<1x8x32xf32, #tpu.memory_space<vmem>>, vector<1x8x32xf32>
      %39 = vector.shape_cast %38 : vector<1x8x32xf32> to vector<8x32xf32>
      %40 = arith.addf %39, %37 : vector<8x32xf32>
      %c0_30 = arith.constant 0 : index
      %c0_31 = arith.constant 0 : index
      %41 = vector.load %arg15[%c0_30, %c0_31] : memref<8x32xf32, #tpu.memory_space<vmem>>, vector<8x32xf32>
      tpu.vector_store %arg15[%c0_30, %c0_31], %40 {strides = array<i32>} : memref<8x32xf32, #tpu.memory_space<vmem>>, vector<8x32xf32>,
      %c0_32 = arith.constant 0 : index
      %c0_33 = arith.constant 0 : index
      %42 = vector.load %arg7[%c0_32, %c0_33] : memref<1x32xf32, #tpu.memory_space<vmem>>, vector<1x32xf32>
      %c0_34 = arith.constant 0 : index
      %c0_35 = arith.constant 0 : index
      %43 = vector.load %arg8[%c0_34, %c0_35] : memref<1x32xf32, #tpu.memory_space<vmem>>, vector<1x32xf32>
      %cst_36 = arith.constant dense<0.000000e+00> : vector<8xf32>
      %44 = vector.multi_reduction <add>, %40, %cst_36 [1] : vector<8x32xf32> to vector<8xf32>
      %45 = vector.shape_cast %44 : vector<8xf32> to vector<8x1xf32>
      %cst_37 = arith.constant 3.200000e+01 : f32
      %46 = vector.broadcast %cst_37 : f32 to vector<8x1xf32>
      %47 = arith.divf %45, %46 : vector<8x1xf32>
      %48 = vector.broadcast %47 : vector<8x1xf32> to vector<8x32xf32>
      %49 = arith.subf %40, %48 : vector<8x32xf32>
      %50 = arith.mulf %49, %49 : vector<8x32xf32>
      %cst_38 = arith.constant dense<0.000000e+00> : vector<8xf32>
      %51 = vector.multi_reduction <add>, %50, %cst_38 [1] : vector<8x32xf32> to vector<8xf32>
      %52 = vector.shape_cast %51 : vector<8xf32> to vector<8x1xf32>
      %cst_39 = arith.constant 3.200000e+01 : f32
      %53 = vector.broadcast %cst_39 : f32 to vector<8x1xf32>
      %54 = arith.divf %52, %53 : vector<8x1xf32>
      %55 = vector.broadcast %47 : vector<8x1xf32> to vector<8x32xf32>
      %56 = arith.subf %40, %55 : vector<8x32xf32>
      %cst_40 = arith.constant 9.99999974E-6 : f32
      %57 = vector.broadcast %cst_40 : f32 to vector<8x1xf32>
      %58 = arith.addf %54, %57 : vector<8x1xf32>
      %59 = math.rsqrt %58 : vector<8x1xf32>
      %60 = vector.broadcast %59 : vector<8x1xf32> to vector<8x32xf32>
      %61 = arith.mulf %56, %60 : vector<8x32xf32>
      %62 = vector.broadcast %42 : vector<1x32xf32> to vector<8x32xf32>
      %63 = arith.mulf %61, %62 : vector<8x32xf32>
      %64 = vector.broadcast %43 : vector<1x32xf32> to vector<8x32xf32>
      %65 = arith.addf %63, %64 : vector<8x32xf32>
      %66 = arith.truncf %65 : vector<8x32xf32> to vector<8x32xbf16>
      %c0_41 = arith.constant 0 : index
      %c0_42 = arith.constant 0 : index
      %67 = vector.load %arg14[%c0_41, %c0_42] : memref<8x32xbf16, #tpu.memory_space<vmem>>, vector<8x32xbf16>
      tpu.vector_store %arg14[%c0_41, %c0_42], %66 {strides = array<i32>} : memref<8x32xbf16, #tpu.memory_space<vmem>>, vector<8x32xbf16>,
    } else {
    }
    %c0 = arith.constant 0 : index
    %c0_1 = arith.constant 0 : index
    %3 = vector.load %arg14[%c0, %c0_1] : memref<8x32xbf16, #tpu.memory_space<vmem>>, vector<8x32xbf16>
    %c0_2 = arith.constant 0 : index
    %c0_3 = arith.constant 0 : index
    %4 = vector.load %arg9[%c0_2, %c0_3] : memref<32x128xbf16, #tpu.memory_space<vmem>>, vector<32x128xbf16>
    %cst = arith.constant dense<0.000000e+00> : vector<8x128xf32>
    %5 = tpu.matmul %3, %4, %cst {dimension_numbers = #tpu.dot_dimension_numbers<[1], [0], [0], [1], [0, 0, 1, 1], [], []>} : vector<8x32xbf16>, vector<32x128xbf16>, vector<8x128xf32> -> vector<8x128xf32>
    %c0_4 = arith.constant 0 : index
    %c0_5 = arith.constant 0 : index
    %6 = vector.load %arg10[%c0_4, %c0_5] : memref<1x128xf32, #tpu.memory_space<vmem>>, vector<1x128xf32>
    %7 = vector.broadcast %6 : vector<1x128xf32> to vector<8x128xf32>
    %8 = arith.addf %5, %7 : vector<8x128xf32>
    %cst_6 = arith.constant 5.000000e-01 : f32
    %9 = vector.broadcast %cst_6 : f32 to vector<8x128xf32>
    %10 = arith.mulf %9, %8 : vector<8x128xf32>
    %11 = arith.mulf %8, %8 : vector<8x128xf32>
    %12 = arith.mulf %8, %11 : vector<8x128xf32>
    %cst_7 = arith.constant 4.471500e-02 : f32
    %13 = vector.broadcast %cst_7 : f32 to vector<8x128xf32>
    %14 = arith.mulf %13, %12 : vector<8x128xf32>
    %15 = arith.addf %8, %14 : vector<8x128xf32>
    %cst_8 = arith.constant 0.797884583 : f32
    %16 = vector.broadcast %cst_8 : f32 to vector<8x128xf32>
    %17 = arith.mulf %16, %15 : vector<8x128xf32>
    %18 = math.tanh %17 : vector<8x128xf32>
    %cst_9 = arith.constant 1.000000e+00 : f32
    %19 = vector.broadcast %cst_9 : f32 to vector<8x128xf32>
    %20 = arith.addf %19, %18 : vector<8x128xf32>
    %21 = arith.mulf %10, %20 : vector<8x128xf32>
    %c0_10 = arith.constant 0 : index
    %c0_11 = arith.constant 0 : index
    %22 = vector.load %arg15[%c0_10, %c0_11] : memref<8x32xf32, #tpu.memory_space<vmem>>, vector<8x32xf32>
    %23 = arith.truncf %21 : vector<8x128xf32> to vector<8x128xbf16>
    %c0_12 = arith.constant 0 : index
    %c0_13 = arith.constant 0 : index
    %24 = vector.load %arg11[%c0_12, %c0_13] : memref<128x32xbf16, #tpu.memory_space<vmem>>, vector<128x32xbf16>
    %cst_14 = arith.constant dense<0.000000e+00> : vector<8x32xf32>
    %25 = tpu.matmul %23, %24, %cst_14 {dimension_numbers = #tpu.dot_dimension_numbers<[1], [0], [0], [1], [0, 0, 1, 1], [], []>} : vector<8x128xbf16>, vector<128x32xbf16>, vector<8x32xf32> -> vector<8x32xf32>
    %26 = arith.addf %22, %25 : vector<8x32xf32>
    %c0_15 = arith.constant 0 : index
    %c0_16 = arith.constant 0 : index
    %27 = vector.load %arg15[%c0_15, %c0_16] : memref<8x32xf32, #tpu.memory_space<vmem>>, vector<8x32xf32>
    tpu.vector_store %arg15[%c0_15, %c0_16], %26 {strides = array<i32>} : memref<8x32xf32, #tpu.memory_space<vmem>>, vector<8x32xf32>,
    %c0_i32_17 = arith.constant 0 : i32
    %28 = arith.cmpi eq, %arg2, %c0_i32_17 : i32
    %29 = arith.extui %28 : i1 to i32
    %c0_i32_18 = arith.constant 0 : i32
    %30 = arith.cmpi ne, %29, %c0_i32_18 : i32
    scf.if %30 {
      %c0_19 = arith.constant 0 : index
      %c0_20 = arith.constant 0 : index
      %31 = vector.load %arg15[%c0_19, %c0_20] : memref<8x32xf32, #tpu.memory_space<vmem>>, vector<8x32xf32>
      %c0_21 = arith.constant 0 : index
      %c0_22 = arith.constant 0 : index
      %32 = vector.load %arg12[%c0_21, %c0_22] : memref<1x32xf32, #tpu.memory_space<vmem>>, vector<1x32xf32>
      %33 = vector.broadcast %32 : vector<1x32xf32> to vector<8x32xf32>
      %34 = arith.addf %31, %33 : vector<8x32xf32>
      %c0_23 = arith.constant 0 : index
      %c0_24 = arith.constant 0 : index
      %c0_25 = arith.constant 0 : index
      %35 = vector.load %arg13[%c0_23, %c0_24, %c0_25] : memref<1x8x32xf32, #tpu.memory_space<vmem>>, vector<1x8x32xf32>
      %36 = vector.shape_cast %35 : vector<1x8x32xf32> to vector<8x32xf32>
      %37 = vector.shape_cast %34 : vector<8x32xf32> to vector<1x8x32xf32>
      tpu.vector_store %arg13[%c0_23, %c0_24, %c0_25], %37 {strides = array<i32>} : memref<1x8x32xf32, #tpu.memory_space<vmem>>, vector<1x8x32xf32>,
    } else {
    }
    return
  }
  func.func @transform_0(%arg0: i32, %arg1: i32, %arg2: i32) -> (i32, i32, i32) {
    %c0_i32 = arith.constant 0 : i32
    %c0_i32_0 = arith.constant 0 : i32
    return %arg0, %arg1, %c0_i32 : i32, i32, i32
  }
  func.func @transform_1(%arg0: i32, %arg1: i32, %arg2: i32) -> (i32, i32, i32) {
    %c0_i32 = arith.constant 0 : i32
    %c0_i32_0 = arith.constant 0 : i32
    return %arg0, %arg1, %c0_i32 : i32, i32, i32
  }
  func.func @transform_2(%arg0: i32, %arg1: i32, %arg2: i32) -> (i32, i32) {
    %c0_i32 = arith.constant 0 : i32
    %c0_i32_0 = arith.constant 0 : i32
    %c0_i32_1 = arith.constant 0 : i32
    return %c0_i32, %c0_i32_0 : i32, i32
  }
  func.func @transform_3(%arg0: i32, %arg1: i32, %arg2: i32) -> (i32, i32) {
    %c0_i32 = arith.constant 0 : i32
    %c0_i32_0 = arith.constant 0 : i32
    %c0_i32_1 = arith.constant 0 : i32
    return %c0_i32, %c0_i32_0 : i32, i32
  }
  func.func @transform_4(%arg0: i32, %arg1: i32, %arg2: i32) -> (i32, i32) {
    %c0_i32 = arith.constant 0 : i32
    %c0_i32_0 = arith.constant 0 : i32
    %c0_i32_1 = arith.constant 0 : i32
    return %c0_i32, %c0_i32_0 : i32, i32
  }
  func.func @transform_5(%arg0: i32, %arg1: i32, %arg2: i32) -> (i32, i32) {
    %c0_i32 = arith.constant 0 : i32
    %c0_i32_0 = arith.constant 0 : i32
    %c0_i32_1 = arith.constant 0 : i32
    return %c0_i32, %c0_i32_0 : i32, i32
  }
  func.func @transform_6(%arg0: i32, %arg1: i32, %arg2: i32) -> (i32, i32) {
    %c0_i32 = arith.constant 0 : i32
    %c0_i32_0 = arith.constant 0 : i32
    return %c0_i32, %arg2 : i32, i32
  }
  func.func @transform_7(%arg0: i32, %arg1: i32, %arg2: i32) -> (i32, i32) {
    %c0_i32 = arith.constant 0 : i32
    %c0_i32_0 = arith.constant 0 : i32
    return %c0_i32, %arg2 : i32, i32
  }
  func.func @transform_8(%arg0: i32, %arg1: i32, %arg2: i32) -> (i32, i32) {
    %c0_i32 = arith.constant 0 : i32
    %c0_i32_0 = arith.constant 0 : i32
    return %arg2, %c0_i32 : i32, i32
  }
  func.func @transform_9(%arg0: i32, %arg1: i32, %arg2: i32) -> (i32, i32) {
    %c0_i32 = arith.constant 0 : i32
    %c0_i32_0 = arith.constant 0 : i32
    %c0_i32_1 = arith.constant 0 : i32
    return %c0_i32, %c0_i32_0 : i32, i32
  }
  func.func @transform_10(%arg0: i32, %arg1: i32, %arg2: i32) -> (i32, i32, i32) {
    %c0_i32 = arith.constant 0 : i32
    %c0_i32_0 = arith.constant 0 : i32
    return %arg0, %arg1, %c0_i32 : i32, i32, i32
  }
}

module attributes {stable_mosaic.version = 11 : i64} {
  func.func @lm_head_kernel(%arg0: i32, %arg1: i32, %arg2: i32, %arg3: memref<1x8x32xf32, #tpu.memory_space<vmem>>, %arg4: memref<1x32xf32, #tpu.memory_space<vmem>>, %arg5: memref<1x32xf32, #tpu.memory_space<vmem>>, %arg6: memref<32x64xbf16, #tpu.memory_space<vmem>>, %arg7: memref<1x8x64xf32, #tpu.memory_space<vmem>>, %arg8: memref<8x32xbf16, #tpu.memory_space<vmem>>) attributes {dimension_semantics = [#tpu.dimension_semantics<parallel>, #tpu.dimension_semantics<parallel>, #tpu.dimension_semantics<arbitrary>], iteration_bounds = array<i64: 2, 1, 1>, scalar_prefetch = 0 : i64, scratch_operands = 1 : i64, tpu.core_type = #tpu.core_type<tc>, window_params = [{transform_indices = @transform_0, window_bounds = array<i64: 1, 8, 32>}, {pipeline_mode = #tpu.pipeline_mode<synchronous>, transform_indices = @transform_1, window_bounds = array<i64: 1, 32>}, {pipeline_mode = #tpu.pipeline_mode<synchronous>, transform_indices = @transform_2, window_bounds = array<i64: 1, 32>}, {transform_indices = @transform_3, window_bounds = array<i64: 32, 64>}, {transform_indices = @transform_4, window_bounds = array<i64: 1, 8, 64>}]} {
    %c0_i32 = arith.constant 0 : i32
    %0 = arith.cmpi eq, %arg2, %c0_i32 : i32
    %1 = arith.extui %0 : i1 to i32
    %c0_i32_0 = arith.constant 0 : i32
    %2 = arith.cmpi ne, %1, %c0_i32_0 : i32
    scf.if %2 {
      %c0_7 = arith.constant 0 : index
      %c0_8 = arith.constant 0 : index
      %c0_9 = arith.constant 0 : index
      %9 = vector.load %arg3[%c0_7, %c0_8, %c0_9] : memref<1x8x32xf32, #tpu.memory_space<vmem>>, vector<1x8x32xf32>
      %10 = vector.shape_cast %9 : vector<1x8x32xf32> to vector<8x32xf32>
      %c0_10 = arith.constant 0 : index
      %c0_11 = arith.constant 0 : index
      %11 = vector.load %arg4[%c0_10, %c0_11] : memref<1x32xf32, #tpu.memory_space<vmem>>, vector<1x32xf32>
      %c0_12 = arith.constant 0 : index
      %c0_13 = arith.constant 0 : index
      %12 = vector.load %arg5[%c0_12, %c0_13] : memref<1x32xf32, #tpu.memory_space<vmem>>, vector<1x32xf32>
      %cst_14 = arith.constant dense<0.000000e+00> : vector<8xf32>
      %13 = vector.multi_reduction <add>, %10, %cst_14 [1] : vector<8x32xf32> to vector<8xf32>
      %14 = vector.shape_cast %13 : vector<8xf32> to vector<8x1xf32>
      %cst_15 = arith.constant 3.200000e+01 : f32
      %15 = vector.broadcast %cst_15 : f32 to vector<8x1xf32>
      %16 = arith.divf %14, %15 : vector<8x1xf32>
      %17 = vector.broadcast %16 : vector<8x1xf32> to vector<8x32xf32>
      %18 = arith.subf %10, %17 : vector<8x32xf32>
      %19 = arith.mulf %18, %18 : vector<8x32xf32>
      %cst_16 = arith.constant dense<0.000000e+00> : vector<8xf32>
      %20 = vector.multi_reduction <add>, %19, %cst_16 [1] : vector<8x32xf32> to vector<8xf32>
      %21 = vector.shape_cast %20 : vector<8xf32> to vector<8x1xf32>
      %cst_17 = arith.constant 3.200000e+01 : f32
      %22 = vector.broadcast %cst_17 : f32 to vector<8x1xf32>
      %23 = arith.divf %21, %22 : vector<8x1xf32>
      %24 = vector.broadcast %16 : vector<8x1xf32> to vector<8x32xf32>
      %25 = arith.subf %10, %24 : vector<8x32xf32>
      %cst_18 = arith.constant 9.99999974E-6 : f32
      %26 = vector.broadcast %cst_18 : f32 to vector<8x1xf32>
      %27 = arith.addf %23, %26 : vector<8x1xf32>
      %28 = math.rsqrt %27 : vector<8x1xf32>
      %29 = vector.broadcast %28 : vector<8x1xf32> to vector<8x32xf32>
      %30 = arith.mulf %25, %29 : vector<8x32xf32>
      %31 = vector.broadcast %11 : vector<1x32xf32> to vector<8x32xf32>
      %32 = arith.mulf %30, %31 : vector<8x32xf32>
      %33 = vector.broadcast %12 : vector<1x32xf32> to vector<8x32xf32>
      %34 = arith.addf %32, %33 : vector<8x32xf32>
      %35 = arith.truncf %34 : vector<8x32xf32> to vector<8x32xbf16>
      %c0_19 = arith.constant 0 : index
      %c0_20 = arith.constant 0 : index
      %36 = vector.load %arg8[%c0_19, %c0_20] : memref<8x32xbf16, #tpu.memory_space<vmem>>, vector<8x32xbf16>
      tpu.vector_store %arg8[%c0_19, %c0_20], %35 {strides = array<i32>} : memref<8x32xbf16, #tpu.memory_space<vmem>>, vector<8x32xbf16>,
    } else {
    }
    %c0 = arith.constant 0 : index
    %c0_1 = arith.constant 0 : index
    %3 = vector.load %arg8[%c0, %c0_1] : memref<8x32xbf16, #tpu.memory_space<vmem>>, vector<8x32xbf16>
    %c0_2 = arith.constant 0 : index
    %c0_3 = arith.constant 0 : index
    %4 = vector.load %arg6[%c0_2, %c0_3] : memref<32x64xbf16, #tpu.memory_space<vmem>>, vector<32x64xbf16>
    %cst = arith.constant dense<0.000000e+00> : vector<8x64xf32>
    %5 = tpu.matmul %3, %4, %cst {dimension_numbers = #tpu.dot_dimension_numbers<[1], [0], [0], [1], [0, 0, 1, 1], [], []>} : vector<8x32xbf16>, vector<32x64xbf16>, vector<8x64xf32> -> vector<8x64xf32>
    %c0_4 = arith.constant 0 : index
    %c0_5 = arith.constant 0 : index
    %c0_6 = arith.constant 0 : index
    %6 = vector.load %arg7[%c0_4, %c0_5, %c0_6] : memref<1x8x64xf32, #tpu.memory_space<vmem>>, vector<1x8x64xf32>
    %7 = vector.shape_cast %6 : vector<1x8x64xf32> to vector<8x64xf32>
    %8 = vector.shape_cast %5 : vector<8x64xf32> to vector<1x8x64xf32>
    tpu.vector_store %arg7[%c0_4, %c0_5, %c0_6], %8 {strides = array<i32>} : memref<1x8x64xf32, #tpu.memory_space<vmem>>, vector<1x8x64xf32>,
    return
  }
  func.func @transform_0(%arg0: i32, %arg1: i32, %arg2: i32) -> (i32, i32, i32) {
    %c0_i32 = arith.constant 0 : i32
    %c0_i32_0 = arith.constant 0 : i32
    return %arg0, %arg1, %c0_i32 : i32, i32, i32
  }
  func.func @transform_1(%arg0: i32, %arg1: i32, %arg2: i32) -> (i32, i32) {
    %c0_i32 = arith.constant 0 : i32
    %c0_i32_0 = arith.constant 0 : i32
    %c0_i32_1 = arith.constant 0 : i32
    return %c0_i32, %c0_i32_0 : i32, i32
  }
  func.func @transform_2(%arg0: i32, %arg1: i32, %arg2: i32) -> (i32, i32) {
    %c0_i32 = arith.constant 0 : i32
    %c0_i32_0 = arith.constant 0 : i32
    %c0_i32_1 = arith.constant 0 : i32
    return %c0_i32, %c0_i32_0 : i32, i32
  }
  func.func @transform_3(%arg0: i32, %arg1: i32, %arg2: i32) -> (i32, i32) {
    %c0_i32 = arith.constant 0 : i32
    %c0_i32_0 = arith.constant 0 : i32
    return %c0_i32, %arg2 : i32, i32
  }
  func.func @transform_4(%arg0: i32, %arg1: i32, %arg2: i32) -> (i32, i32, i32) {
    %c0_i32 = arith.constant 0 : i32
    return %arg0, %arg1, %arg2 : i32, i32, i32
  }
}

</mosaic_0001>

<llo_original>
// kernel: _lambda_.13
$region0: #{_lambda_.13}
  #allocation0 [shape = 'u32[]', space=smem, size = 0x4, offset = 0x4, fixed_abs, tag = 'smem constant byte address 0x4 - core index']
  #allocation1 [shape = 'u32[144,128]{1,0:T(1,128)}', space=vmem, size = 0x12000, scoped, tag = 'internal scratch']
  #allocation2 [shape = 'bf16[8,32]{1,0:T(8,128)(2,1)}', space=vmem, size = 0x800, scoped, tag = 'scratch operand']
  %s0 = inlined_call_operand.vmem [shape: f32[2,8,32], index: 0, kind: input, shape index: {}]
  %s1 = inlined_call_operand.vmem [shape: f32[1,32], index: 1, kind: input, shape index: {}]
  %s2 = inlined_call_operand.vmem [shape: f32[1,32], index: 2, kind: input, shape index: {}]
  %s3 = inlined_call_operand.vmem [shape: bf16[32,64], index: 3, kind: input, shape index: {}]
  %s4 = inlined_call_operand.hbm [shape: f32[2,8,64], index: 4, kind: output, shape index: {}]
  %s5 = sld [smem:[#allocation0]]
  $region53: #{_lambda_.13} parent=0
    _
  %s7 = ssub.s32 1, %s5
  %s8 = scalar_select 0, %s7, %s5
  $region1: #{_lambda_.13} parent=0
    #allocation3 [shape = 'u8[8192]{0}', space=vmem, size = 0x2000, scoped, tag = 'output window, operand 0']
    #allocation4 [shape = 's32[2]{0}', space=sflag, size = 0x8, scoped, tag = 'scoped memory for _lambda_.13']
    %9 = vsyncpa [#allocation4], 0
    %s10 = scalar_lea.sflag [#allocation4], 1
    %11 = vsyncpa %s10, 0
    loop: start=0, step=1, limit=4
    $region2: #{_lambda_.13} parent=1 // loop_pre_header
      _
    $region3: #{_lambda_.13} parent=1 // loop_header
      %s13 = sphi 0, %s17
      %p14 = scmp.ge.s32.totalorder %s13, 4
      %s20 = sphi 0, %s39
      %s21 = sphi 0, %s35
      %s22 = sphi 0, %s31
      %s23 = sphi 0, %s20
      %s24 = sphi 0, %s21
      %s25 = sphi 0, %s22
      %s26 = sphi 0, %s23
      %s27 = sphi 0, %s24
      %s28 = sphi 0, %s25
      %s44 = sphi 0, %s46
      %s47 = sphi 0, %s44
      %s48 = sphi 0, %s47
      %s64 = sphi 0, %s48
      %s68 = sphi 0, %s68
      %s70 = sphi 0, %s68
      %s71 = sphi 0, %s70
      %s85 = sphi 0, %s71
      %s89 = sphi 0, %s89
      %s91 = sphi 0, %s89
      %s92 = sphi 0, %s91
      %s106 = sphi 0, %s92
      %s112 = sphi 0, %s114
      %s115 = sphi 0, %s112
      %s116 = sphi 0, %s115
      %s132 = sphi 0, %s116
      %s142 = sphi 0, %s144
      %s145 = sphi 0, %s142
      %s146 = sphi 0, %s145
      %s162 = sphi 0, %s146
    $region4: #{_lambda_.13} parent=1 // loop_header_branch
      %16 = sbr.rel (%p14) target = $region8
    $region5: #{_lambda_.13} parent=1 // loop_body
      %s18 = ssub.s32 %s13, 1
      %s19 = ssub.s32 %s13, 2
      %s29 = sadd.s32 1, %s22
      %p30 = scmp.ge.s32.totalorder %s29, 1
      %s31 = scalar_select %p30, 0, %s29
      %s32 = sadd.s32 1, %s21
      %s33 = scalar_select %p30, %s32, %s21
      %p34 = scmp.ge.s32.totalorder %s33, 1
      %s35 = scalar_select %p34, 0, %s33
      %s36 = sadd.s32 1, %s20
      %s37 = scalar_select %p34, %s36, %s20
      %p38 = scmp.ge.s32.totalorder %s37, 2
      %s39 = scalar_select %p38, 0, %s37
      %s40 = ssub.s32 %s20, %s39
      %s41 = ssub.s32 %s21, %s35
      %s42 = sor.u32 %s40, %s41
      %p43 = scmp.eq.s32.totalorder %s42, 0
      %s45 = sadd.s32 %s44, 1
      %s46 = scalar_select %p43, %s44, %s45
      %p49 = pneg %p43
      %p50 = scmp.eq.s32.totalorder %s13, 1
      %p51 = por %p49, %p50
      %p52 = scmp.ne.s32.totalorder %s44, %s47
      %p53 = scmp.eq.s32.totalorder %s13, 0
      %p54 = por %p52, %p53
      %p55 = scmp.ne.s32.totalorder %s44, %s47
      %p56 = scmp.eq.s32.totalorder %s18, 1
      %p57 = por %p55, %p56
      %p58 = scmp.ne.s32.totalorder %s47, %s48
      %p59 = scmp.eq.s32.totalorder %s18, 0
      %p60 = por %p58, %p59
      %p61 = scmp.ne.s32.totalorder %s47, %s48
      %p62 = scmp.eq.s32.totalorder %s19, 1
      %p63 = por %p61, %p62
      %p65 = scmp.ne.s32.totalorder %s48, %s64
      %p66 = scmp.eq.s32.totalorder %s19, 0
      %p67 = por %p65, %p66
      %s69 = sadd.s32 %s68, 1
      %p72 = scmp.eq.s32.totalorder %s13, 1
      %p73 = scmp.ne.s32.totalorder %s68, %s70
      %p74 = scmp.eq.s32.totalorder %s13, 0
      %p75 = por %p73, %p74
      %p76 = scmp.ne.s32.totalorder %s68, %s70
      %p77 = scmp.eq.s32.totalorder %s18, 1
      %p78 = por %p76, %p77
      %p79 = scmp.ne.s32.totalorder %s70, %s71
      %p80 = scmp.eq.s32.totalorder %s18, 0
      %p81 = por %p79, %p80
      %p82 = scmp.ne.s32.totalorder %s70, %s71
      %p83 = scmp.eq.s32.totalorder %s19, 1
      %p84 = por %p82, %p83
      %p86 = scmp.ne.s32.totalorder %s71, %s85
      %p87 = scmp.eq.s32.totalorder %s19, 0
      %p88 = por %p86, %p87
      %s90 = sadd.s32 %s89, 1
      %p93 = scmp.eq.s32.totalorder %s13, 1
      %p94 = scmp.ne.s32.totalorder %s89, %s91
      %p95 = scmp.eq.s32.totalorder %s13, 0
      %p96 = por %p94, %p95
      %p97 = scmp.ne.s32.totalorder %s89, %s91
      %p98 = scmp.eq.s32.totalorder %s18, 1
      %p99 = por %p97, %p98
      %p100 = scmp.ne.s32.totalorder %s91, %s92
      %p101 = scmp.eq.s32.totalorder %s18, 0
      %p102 = por %p100, %p101
      %p103 = scmp.ne.s32.totalorder %s91, %s92
      %p104 = scmp.eq.s32.totalorder %s19, 1
      %p105 = por %p103, %p104
      %p107 = scmp.ne.s32.totalorder %s92, %s106
      %p108 = scmp.eq.s32.totalorder %s19, 0
      %p109 = por %p107, %p108
      %s110 = ssub.s32 %s22, %s31
      %p111 = scmp.eq.s32.totalorder %s110, 0
      %s113 = sadd.s32 %s112, 1
      %s114 = scalar_select %p111, %s112, %s113
      %p117 = pneg %p111
      %p118 = scmp.eq.s32.totalorder %s13, 1
      %p119 = por %p117, %p118
      %p120 = scmp.ne.s32.totalorder %s112, %s115
      %p121 = scmp.eq.s32.totalorder %s13, 0
      %p122 = por %p120, %p121
      %p123 = scmp.ne.s32.totalorder %s112, %s115
      %p124 = scmp.eq.s32.totalorder %s18, 1
      %p125 = por %p123, %p124
      %p126 = scmp.ne.s32.totalorder %s115, %s116
      %p127 = scmp.eq.s32.totalorder %s18, 0
      %p128 = por %p126, %p127
      %p129 = scmp.ne.s32.totalorder %s115, %s116
      %p130 = scmp.eq.s32.totalorder %s19, 1
      %p131 = por %p129, %p130
      %p133 = scmp.ne.s32.totalorder %s116, %s132
      %p134 = scmp.eq.s32.totalorder %s19, 0
      %p135 = por %p133, %p134
      %s136 = ssub.s32 %s20, %s39
      %s137 = ssub.s32 %s21, %s35
      %s138 = sor.u32 %s136, %s137
      %s139 = ssub.s32 %s22, %s31
      %s140 = sor.u32 %s138, %s139
      %p141 = scmp.eq.s32.totalorder %s140, 0
      %s143 = sadd.s32 %s142, 1
      %s144 = scalar_select %p141, %s142, %s143
      %p147 = pneg %p141
      %p148 = scmp.eq.s32.totalorder %s13, 1
      %p149 = por %p147, %p148
      %p150 = scmp.ne.s32.totalorder %s142, %s145
      %p151 = scmp.eq.s32.totalorder %s13, 0
      %p152 = por %p150, %p151
      %p153 = scmp.ne.s32.totalorder %s142, %s145
      %p154 = scmp.eq.s32.totalorder %s18, 1
      %p155 = por %p153, %p154
      %p156 = scmp.ne.s32.totalorder %s145, %s146
      %p157 = scmp.eq.s32.totalorder %s18, 0
      %p158 = por %p156, %p157
      %p159 = scmp.ne.s32.totalorder %s145, %s146
      %p160 = scmp.eq.s32.totalorder %s19, 1
      %p161 = por %p159, %p160
      %p163 = scmp.ne.s32.totalorder %s146, %s162
      %p164 = scmp.eq.s32.totalorder %s19, 0
      %p165 = por %p163, %p164
      %p166 = scmp.le.s32.totalorder 1, %s13
      %p167 = scmp.lt.s32.totalorder %s13, 3
      %p168 = pnand %p166, %p167
      %p169 = pneg %p168
      // Predicated region
      $region9: #{_lambda_.13} parent=5 // pred_check
        _
      $region10: #{_lambda_.13} parent=5 // pred_check_branch
        %171 = sbr.rel (%p168) target = $region12
      $region11: #{_lambda_.13} parent=5 // pred_region
        %s172 = ssub.s32 %s13, 1
        // Predicated region
        $region13: #{_lambda_.13} parent=11 // pred_check
          %p173 = pneg %p81
        $region14: #{_lambda_.13} parent=11 // pred_check_branch
          %175 = sbr.rel (%p173) target = $region16
        $region15: #{_lambda_.13} parent=11 // pred_region
          _
        $region16: #{_lambda_.13} parent=11 // pred_fallthru
          _
        // Predicated region
        $region17: #{_lambda_.13} parent=11 // pred_check
          %p176 = pneg %p102
        $region18: #{_lambda_.13} parent=11 // pred_check_branch
          %178 = sbr.rel (%p176) target = $region20
        $region19: #{_lambda_.13} parent=11 // pred_region
          _
        $region20: #{_lambda_.13} parent=11 // pred_fallthru
          _
        // Predicated region
        $region21: #{_lambda_.13} parent=11 // pred_check
          %p179 = pneg %p128
        $region22: #{_lambda_.13} parent=11 // pred_check_branch
          %181 = sbr.rel (%p179) target = $region24
        $region23: #{_lambda_.13} parent=11 // pred_region
          %p182 = scmp.lt.s32.totalorder %s25, 0
          %s183 = scalar_select %p182, %s25, 0
          %s184 = smul.addr %s183, 4
          %s185 = scalar_lea.vmem %s3, %s184
        $region24: #{_lambda_.13} parent=11 // pred_fallthru
          _
      $region12: #{_lambda_.13} parent=5 // pred_fallthru
        _
      %p186 = scmp.lt.s32.totalorder %s13, 2
      // Predicated region
      $region25: #{_lambda_.13} parent=5 // pred_check
        %p187 = pneg %p186
      $region26: #{_lambda_.13} parent=5 // pred_check_branch
        %189 = sbr.rel (%p187) target = $region28
      $region27: #{_lambda_.13} parent=5 // pred_region
        // Predicated region
        $region29: #{_lambda_.13} parent=27 // pred_check
          %p190 = pneg %p54
        $region30: #{_lambda_.13} parent=27 // pred_check_branch
          %192 = sbr.rel (%p190) target = $region32
        $region31: #{_lambda_.13} parent=27 // pred_region
          %p193 = scmp.lt.s32.totalorder %s20, 1
          %s194 = scalar_select %p193, %s20, 1
          %p195 = scmp.lt.s32.totalorder %s21, 0
          %s196 = scalar_select %p195, %s21, 0
          %s197 = sadd.s32 %s196, %s194
          %s198 = smul.addr %s197, 8
          %s199 = scalar_lea.vmem %s0, %s198
        $region32: #{_lambda_.13} parent=27 // pred_fallthru
          _
      $region28: #{_lambda_.13} parent=5 // pred_fallthru
        _
      %p200 = scmp.le.s32.totalorder 1, %s13
      %p201 = scmp.lt.s32.totalorder %s13, 3
      %p202 = pnand %p200, %p201
      %p203 = pneg %p202
      // Predicated region
      $region33: #{_lambda_.13} parent=5 // pred_check
        _
      $region34: #{_lambda_.13} parent=5 // pred_check_branch
        %205 = sbr.rel (%p202) target = $region36
      $region35: #{_lambda_.13} parent=5 // pred_region
        %s206 = ssub.s32 %s13, 1
        %p207 = scmp.lt.s32.totalorder %s23, 1
        %s208 = scalar_select %p207, %s23, 1
        %p209 = scmp.lt.s32.totalorder %s24, 0
        %s210 = scalar_select %p209, %s24, 0
        %s211 = sadd.s32 %s210, %s208
        %s212 = smul.addr %s211, 8
        %s213 = scalar_lea.vmem %s0, %s212
        %p214 = pneg %p60
        %p215 = pneg %p57
        %p216 = pneg %p81
        %p217 = pneg %p78
        %p218 = pneg %p102
        %p219 = pneg %p99
        %p220 = scmp.lt.s32.totalorder %s25, 0
        %s221 = scalar_select %p220, %s25, 0
        %s222 = smul.addr %s221, 4
        %s223 = scalar_lea.vmem %s3, %s222
        %p224 = pneg %p128
        %p225 = pneg %p125
        %p226 = pneg %p158
        %p227 = pneg %p155
        %s228 = sand.u32 %s145, 1
        %s229 = scalar_lea.sflag [#allocation4], %s228
        %s230 = sand.u32 %s145, 1
        %s231 = smul.addr %s230, 8
        %s232 = scalar_lea.vmem [#allocation3], %s231
        %p233 = scmp.lt.s32.totalorder %s23, 1
        %s234 = scalar_select %p233, %s23, 1
        %p235 = scmp.lt.s32.totalorder %s24, 0
        %s236 = scalar_select %p235, %s24, 0
        %s237 = sadd.s32 %s236, %s234
        %s238 = smul.addr %s237, 8
        %s239 = scalar_lea.vmem %s0, %s238
        %p240 = scmp.lt.s32.totalorder %s25, 0
        %s241 = scalar_select %p240, %s25, 0
        %s242 = smul.addr %s241, 4
        %s243 = scalar_lea.vmem %s3, %s242
        %p245 = scmp.eq.s32.totalorder %s25, 0
        // Predicated region
        $region37: #{_lambda_.13} parent=35 // pred_check
          %p246 = pneg %p245
        $region38: #{_lambda_.13} parent=35 // pred_check_branch
          %248 = sbr.rel (%p246) target = $region40
        $region39: #{_lambda_.13} parent=35 // pred_region
          %v249 = vld [vmem:[%s239] sm:$0xff]
          %v250 = vld [vmem:[%s1] sm:$0x1]
          %v251 = vld [vmem:[%s2] sm:$0x1]
          %vm252 = vcmask 261120
          %v253 = vsel %vm252, %v249, 0.0
          %254 = vadd.xlane.f32.xlu0 %v253
          %v255 = vpop.xlane.xlu0 %254
          %v256 = vrcp.pop 32.0
          %v257 = vmul.f32 %v255, %v256
          %v258 = vsub.f32 %v249, %v257
          %v259 = vmul.f32 %v258, %v258
          %v260 = vsel %vm252, %v259, 0.0
          %261 = vadd.xlane.f32.xlu0 %v260
          %v262 = vpop.xlane.xlu0 %261
          %v263 = vmul.f32 %v262, %v256
          %v264 = vadd.f32 %v263, 1e-05
          %v265 = vrsqrt.pop %v264
          %v266 = vmul.f32 %v258, %v265
          %v268 = vlaneseq
          %v269 = vshrl.u32 %v268, 7
          %v270 = vsub.s32 0, %v269
          %v271 = vrot.slane %v250, %v270
          %v273 = vmul.f32 %v266, %v271
          %v275 = vlaneseq
          %v276 = vshrl.u32 %v275, 7
          %v277 = vsub.s32 0, %v276
          %v278 = vrot.slane %v251, %v277
          %v280 = vadd.f32 %v273, %v278
          %v281 = vpack.c.bf16 %v280, %v280
          %vm282 = vcmask 257024
          %283 = vst.msk [vmem:[#allocation2] sm:$0xf] %vm282, %v281
        $region40: #{_lambda_.13} parent=35 // pred_fallthru
          _
        %v284 = vld [vmem:[#allocation2] sm:$0xf]
        %v285 = vld [vmem:[%s243] sm:$0xf]
        %v286 = vld [vmem:[%s243 + $0x4] sm:$0xf]
        %v287 = vld [vmem:[%s243 + $0x8] sm:$0xf]
        %v288 = vld [vmem:[%s243 + $0xc] sm:$0xf]
        %v293 = vunpack.c.l.b16 %v285
        %v294 = vunpack.c.l.b16 %v286
        %v295 = vunpack.c.l.b16 %v287
        %v296 = vunpack.c.l.b16 %v288
        %v297 = vpack.c.b16 %v294, %v293
        %v298 = vpack.c.b16 %v296, %v295
        %vm301 = vcmask 261120
        %v303 = vsel %vm301, %v284, 0
        %305 = vmatprep.subr.bf16.mxu0 0
        %306 = vmatpush1.bf16.msra.mxu0 %v297
        %307 = vmatprep.subr.bf16.mxu0 0
        %308 = vmatpush1.bf16.msra.mxu0 %v298
        %309 = vmatprep.subr.bf16.mxu0 0
        %310 = vmatpush1.bf16.msra.mxu0 0
        %311 = vmatprep.subr.bf16.mxu0 0
        %312 = vmatpush1.bf16.msra.mxu0 0
        %313 = vmatprep.subr.bf16.mxu0 0
        %314 = vmatpush1.bf16.msra.mxu0 0
        %315 = vmatprep.subr.bf16.mxu0 0
        %316 = vmatpush1.bf16.msra.mxu0 0
        %317 = vmatprep.subr.bf16.mxu0 0
        %318 = vmatpush1.bf16.msra.mxu0 0
        %319 = vmatprep.subr.bf16.mxu0 0
        %320 = vmatpush1.bf16.msra.mxu0 0
        %321 = vmatprep.subr.bf16.mxu0 0
        %322 = vmatpush1.bf16.msra.mxu0 0
        %323 = vmatprep.subr.bf16.mxu0 0
        %324 = vmatpush1.bf16.msra.mxu0 0
        %325 = vmatprep.subr.bf16.mxu0 0
        %326 = vmatpush1.bf16.msra.mxu0 0
        %327 = vmatprep.subr.bf16.mxu0 0
        %328 = vmatpush1.bf16.msra.mxu0 0
        %329 = vmatprep.subr.bf16.mxu0 0
        %330 = vmatpush1.bf16.msra.mxu0 0
        %331 = vmatprep.subr.bf16.mxu0 0
        %332 = vmatpush1.bf16.msra.mxu0 0
        %333 = vmatprep.subr.bf16.mxu0 0
        %334 = vmatpush1.bf16.msra.mxu0 0
        %335 = vmatprep.subr.bf16.mxu0 0
        %336 = vmatpush1.bf16.msra.mxu0 0
        %337 = vmatprep.mubr.bf16.mxu0 0
        %338 = vmatmul.mubr.bf16.gmra.mrb[0].mxu0 %v303
        %v339 = vpop.f32.mrb[0].mxu0
        %v340 = vadd.f32 0.0, %v339
        %v341 = vpop.f32.mrb[0].mxu0
        %v342 = vpop.f32.mrb[0].mxu0
        %v343 = vpop.f32.mrb[0].mxu0
        %344 = vdwg.mxu0
        %vm345 = vcmask 523264
        %346 = vst.msk [vmem:[%s232] sm:$0xff] %vm345, %v340
        %s347 = sand.u32 %s145, 1
        %s348 = scalar_lea.sflag [#allocation4], %s347
        %s349 = sand.u32 %s145, 1
        %s350 = smul.addr %s349, 8
        %s351 = scalar_lea.vmem [#allocation3], %s350
        // Predicated region
        $region41: #{_lambda_.13} parent=35 // pred_check
          %p352 = pneg %p155
        $region42: #{_lambda_.13} parent=35 // pred_check_branch
          %354 = sbr.rel (%p352) target = $region44
        $region43: #{_lambda_.13} parent=35 // pred_region
          %s356 = ssub.s32 128, 128
          %357 = vsyncadd %s348, %s356
          %s358 = sadd.s32 %s25, %s24
          %s359 = sadd.s32 %s358, %s23
          %s360 = smul.addr %s359, 128
          %s361 = scalar_lea.hbm %s4, %s360
          %s363 = sshll.u32 %s351, 4
          %s364 = int_to_ptr.vmem [resolvable:$true] %s363
          %366 = dma.vmem_to_hbm [thread:$0]  %s364, 128, %s361, %s348
        $region44: #{_lambda_.13} parent=35 // pred_fallthru
          _
      $region36: #{_lambda_.13} parent=5 // pred_fallthru
        _
      %p367 = scmp.le.s32.totalorder 2, %s13
      // Predicated region
      $region45: #{_lambda_.13} parent=5 // pred_check
        %p368 = pneg %p367
      $region46: #{_lambda_.13} parent=5 // pred_check_branch
        %370 = sbr.rel (%p368) target = $region48
      $region47: #{_lambda_.13} parent=5 // pred_region
        %s371 = ssub.s32 %s13, 2
        // Predicated region
        $region49: #{_lambda_.13} parent=47 // pred_check
          %p372 = pneg %p161
        $region50: #{_lambda_.13} parent=47 // pred_check_branch
          %374 = sbr.rel (%p372) target = $region52
        $region51: #{_lambda_.13} parent=47 // pred_region
          %s375 = sand.u32 %s146, 1
          %s376 = scalar_lea.sflag [#allocation4], %s375
          %s377 = sand.u32 %s146, 1
          %s378 = smul.addr %s377, 8
          %s379 = scalar_lea.vmem [#allocation3], %s378
          %380 = dma.done %s376, 128
        $region52: #{_lambda_.13} parent=47 // pred_fallthru
          _
      $region48: #{_lambda_.13} parent=5 // pred_fallthru
        _
    $region6: #{_lambda_.13} parent=1 // loop_footer
      %s17 = sadd.s32 1, %s13
    $region7: #{_lambda_.13} parent=1 // loop_footer_branch
      %12 = sbr.rel target = $region3
    $region8: #{_lambda_.13} parent=1 // loop_exit
      _
    %381 = vsyncpa [#allocation4], 1
    %s382 = scalar_lea.sflag [#allocation4], 1
    %383 = vsyncpa %s382, 1

// kernel: _lambda_.9
$region0: #{_lambda_.9}
  #allocation0 [shape = 'u32[]', space=smem, size = 0x4, offset = 0x4, fixed_abs, tag = 'smem constant byte address 0x4 - core index']
  #allocation1 [shape = 'u32[144,128]{1,0:T(1,128)}', space=vmem, size = 0x12000, scoped, tag = 'internal scratch']
  #allocation2 [shape = 'bf16[8,32]{1,0:T(8,128)(2,1)}', space=vmem, size = 0x800, scoped, tag = 'scratch operand']
  #allocation3 [shape = 'f32[8,32]{1,0:T(8,128)}', space=vmem, size = 0x1000, scoped, tag = 'scratch operand']
  %s0 = inlined_call_operand.vmem [shape: f32[2,8,32], index: 0, kind: input, shape index: {}]
  %s1 = inlined_call_operand.vmem [shape: bf16[2,8,32], index: 1, kind: input, shape index: {}]
  %s2 = inlined_call_operand.vmem [shape: bf16[32,32], index: 2, kind: input, shape index: {}]
  %s3 = inlined_call_operand.vmem [shape: f32[1,32], index: 3, kind: input, shape index: {}]
  %s4 = inlined_call_operand.vmem [shape: f32[1,32], index: 4, kind: input, shape index: {}]
  %s5 = inlined_call_operand.vmem [shape: f32[1,32], index: 5, kind: input, shape index: {}]
  %s6 = inlined_call_operand.vmem [shape: bf16[32,128], index: 6, kind: input, shape index: {}]
  %s7 = inlined_call_operand.vmem [shape: f32[1,128], index: 7, kind: input, shape index: {}]
  %s8 = inlined_call_operand.vmem [shape: bf16[128,32], index: 8, kind: input, shape index: {}]
  %s9 = inlined_call_operand.vmem [shape: f32[1,32], index: 9, kind: input, shape index: {}]
  %s10 = inlined_call_operand.vmem [shape: f32[2,8,32], index: 10, kind: output, shape index: {}]
  %s11 = sld [smem:[#allocation0]]
  $region81: #{_lambda_.9} parent=0
    _
  %s13 = ssub.s32 1, %s11
  %s14 = scalar_select 0, %s13, %s11
  loop: start=0, step=1, limit=4
  $region2: #{_lambda_.9} parent=0 // loop_pre_header
    _
  $region3: #{_lambda_.9} parent=0 // loop_header
    %s16 = sphi 0, %s20
    %p17 = scmp.ge.s32.totalorder %s16, 4
    %s23 = sphi 0, %s42
    %s24 = sphi 0, %s38
    %s25 = sphi 0, %s34
    %s26 = sphi 0, %s23
    %s27 = sphi 0, %s24
    %s28 = sphi 0, %s25
    %s29 = sphi 0, %s26
    %s30 = sphi 0, %s27
    %s31 = sphi 0, %s28
    %s47 = sphi 0, %s49
    %s50 = sphi 0, %s47
    %s51 = sphi 0, %s50
    %s67 = sphi 0, %s51
    %s75 = sphi 0, %s77
    %s78 = sphi 0, %s75
    %s79 = sphi 0, %s78
    %s95 = sphi 0, %s79
    %s99 = sphi 0, %s99
    %s101 = sphi 0, %s99
    %s102 = sphi 0, %s101
    %s116 = sphi 0, %s102
    %s120 = sphi 0, %s120
    %s122 = sphi 0, %s120
    %s123 = sphi 0, %s122
    %s137 = sphi 0, %s123
    %s141 = sphi 0, %s141
    %s143 = sphi 0, %s141
    %s144 = sphi 0, %s143
    %s158 = sphi 0, %s144
    %s162 = sphi 0, %s162
    %s164 = sphi 0, %s162
    %s165 = sphi 0, %s164
    %s179 = sphi 0, %s165
    %s185 = sphi 0, %s187
    %s188 = sphi 0, %s185
    %s189 = sphi 0, %s188
    %s205 = sphi 0, %s189
    %s211 = sphi 0, %s213
    %s214 = sphi 0, %s211
    %s215 = sphi 0, %s214
    %s231 = sphi 0, %s215
    %s237 = sphi 0, %s239
    %s240 = sphi 0, %s237
    %s241 = sphi 0, %s240
    %s257 = sphi 0, %s241
    %s261 = sphi 0, %s261
    %s263 = sphi 0, %s261
    %s264 = sphi 0, %s263
    %s278 = sphi 0, %s264
    %s286 = sphi 0, %s288
    %s289 = sphi 0, %s286
    %s290 = sphi 0, %s289
    %s306 = sphi 0, %s290
  $region4: #{_lambda_.9} parent=0 // loop_header_branch
    %19 = sbr.rel (%p17) target = $region8
  $region5: #{_lambda_.9} parent=0 // loop_body
    %s21 = ssub.s32 %s16, 1
    %s22 = ssub.s32 %s16, 2
    %s32 = sadd.s32 1, %s25
    %p33 = scmp.ge.s32.totalorder %s32, 1
    %s34 = scalar_select %p33, 0, %s32
    %s35 = sadd.s32 1, %s24
    %s36 = scalar_select %p33, %s35, %s24
    %p37 = scmp.ge.s32.totalorder %s36, 1
    %s38 = scalar_select %p37, 0, %s36
    %s39 = sadd.s32 1, %s23
    %s40 = scalar_select %p37, %s39, %s23
    %p41 = scmp.ge.s32.totalorder %s40, 2
    %s42 = scalar_select %p41, 0, %s40
    %s43 = ssub.s32 %s23, %s42
    %s44 = ssub.s32 %s24, %s38
    %s45 = sor.u32 %s43, %s44
    %p46 = scmp.eq.s32.totalorder %s45, 0
    %s48 = sadd.s32 %s47, 1
    %s49 = scalar_select %p46, %s47, %s48
    %p52 = pneg %p46
    %p53 = scmp.eq.s32.totalorder %s16, 1
    %p54 = por %p52, %p53
    %p55 = scmp.ne.s32.totalorder %s47, %s50
    %p56 = scmp.eq.s32.totalorder %s16, 0
    %p57 = por %p55, %p56
    %p58 = scmp.ne.s32.totalorder %s47, %s50
    %p59 = scmp.eq.s32.totalorder %s21, 1
    %p60 = por %p58, %p59
    %p61 = scmp.ne.s32.totalorder %s50, %s51
    %p62 = scmp.eq.s32.totalorder %s21, 0
    %p63 = por %p61, %p62
    %p64 = scmp.ne.s32.totalorder %s50, %s51
    %p65 = scmp.eq.s32.totalorder %s22, 1
    %p66 = por %p64, %p65
    %p68 = scmp.ne.s32.totalorder %s51, %s67
    %p69 = scmp.eq.s32.totalorder %s22, 0
    %p70 = por %p68, %p69
    %s71 = ssub.s32 %s23, %s42
    %s72 = ssub.s32 %s24, %s38
    %s73 = sor.u32 %s71, %s72
    %p74 = scmp.eq.s32.totalorder %s73, 0
    %s76 = sadd.s32 %s75, 1
    %s77 = scalar_select %p74, %s75, %s76
    %p80 = pneg %p74
    %p81 = scmp.eq.s32.totalorder %s16, 1
    %p82 = por %p80, %p81
    %p83 = scmp.ne.s32.totalorder %s75, %s78
    %p84 = scmp.eq.s32.totalorder %s16, 0
    %p85 = por %p83, %p84
    %p86 = scmp.ne.s32.totalorder %s75, %s78
    %p87 = scmp.eq.s32.totalorder %s21, 1
    %p88 = por %p86, %p87
    %p89 = scmp.ne.s32.totalorder %s78, %s79
    %p90 = scmp.eq.s32.totalorder %s21, 0
    %p91 = por %p89, %p90
    %p92 = scmp.ne.s32.totalorder %s78, %s79
    %p93 = scmp.eq.s32.totalorder %s22, 1
    %p94 = por %p92, %p93
    %p96 = scmp.ne.s32.totalorder %s79, %s95
    %p97 = scmp.eq.s32.totalorder %s22, 0
    %p98 = por %p96, %p97
    %s100 = sadd.s32 %s99, 1
    %p103 = scmp.eq.s32.totalorder %s16, 1
    %p104 = scmp.ne.s32.totalorder %s99, %s101
    %p105 = scmp.eq.s32.totalorder %s16, 0
    %p106 = por %p104, %p105
    %p107 = scmp.ne.s32.totalorder %s99, %s101
    %p108 = scmp.eq.s32.totalorder %s21, 1
    %p109 = por %p107, %p108
    %p110 = scmp.ne.s32.totalorder %s101, %s102
    %p111 = scmp.eq.s32.totalorder %s21, 0
    %p112 = por %p110, %p111
    %p113 = scmp.ne.s32.totalorder %s101, %s102
    %p114 = scmp.eq.s32.totalorder %s22, 1
    %p115 = por %p113, %p114
    %p117 = scmp.ne.s32.totalorder %s102, %s116
    %p118 = scmp.eq.s32.totalorder %s22, 0
    %p119 = por %p117, %p118
    %s121 = sadd.s32 %s120, 1
    %p124 = scmp.eq.s32.totalorder %s16, 1
    %p125 = scmp.ne.s32.totalorder %s120, %s122
    %p126 = scmp.eq.s32.totalorder %s16, 0
    %p127 = por %p125, %p126
    %p128 = scmp.ne.s32.totalorder %s120, %s122
    %p129 = scmp.eq.s32.totalorder %s21, 1
    %p130 = por %p128, %p129
    %p131 = scmp.ne.s32.totalorder %s122, %s123
    %p132 = scmp.eq.s32.totalorder %s21, 0
    %p133 = por %p131, %p132
    %p134 = scmp.ne.s32.totalorder %s122, %s123
    %p135 = scmp.eq.s32.totalorder %s22, 1
    %p136 = por %p134, %p135
    %p138 = scmp.ne.s32.totalorder %s123, %s137
    %p139 = scmp.eq.s32.totalorder %s22, 0
    %p140 = por %p138, %p139
    %s142 = sadd.s32 %s141, 1
    %p145 = scmp.eq.s32.totalorder %s16, 1
    %p146 = scmp.ne.s32.totalorder %s141, %s143
    %p147 = scmp.eq.s32.totalorder %s16, 0
    %p148 = por %p146, %p147
    %p149 = scmp.ne.s32.totalorder %s141, %s143
    %p150 = scmp.eq.s32.totalorder %s21, 1
    %p151 = por %p149, %p150
    %p152 = scmp.ne.s32.totalorder %s143, %s144
    %p153 = scmp.eq.s32.totalorder %s21, 0
    %p154 = por %p152, %p153
    %p155 = scmp.ne.s32.totalorder %s143, %s144
    %p156 = scmp.eq.s32.totalorder %s22, 1
    %p157 = por %p155, %p156
    %p159 = scmp.ne.s32.totalorder %s144, %s158
    %p160 = scmp.eq.s32.totalorder %s22, 0
    %p161 = por %p159, %p160
    %s163 = sadd.s32 %s162, 1
    %p166 = scmp.eq.s32.totalorder %s16, 1
    %p167 = scmp.ne.s32.totalorder %s162, %s164
    %p168 = scmp.eq.s32.totalorder %s16, 0
    %p169 = por %p167, %p168
    %p170 = scmp.ne.s32.totalorder %s162, %s164
    %p171 = scmp.eq.s32.totalorder %s21, 1
    %p172 = por %p170, %p171
    %p173 = scmp.ne.s32.totalorder %s164, %s165
    %p174 = scmp.eq.s32.totalorder %s21, 0
    %p175 = por %p173, %p174
    %p176 = scmp.ne.s32.totalorder %s164, %s165
    %p177 = scmp.eq.s32.totalorder %s22, 1
    %p178 = por %p176, %p177
    %p180 = scmp.ne.s32.totalorder %s165, %s179
    %p181 = scmp.eq.s32.totalorder %s22, 0
    %p182 = por %p180, %p181
    %s183 = ssub.s32 %s25, %s34
    %p184 = scmp.eq.s32.totalorder %s183, 0
    %s186 = sadd.s32 %s185, 1
    %s187 = scalar_select %p184, %s185, %s186
    %p190 = pneg %p184
    %p191 = scmp.eq.s32.totalorder %s16, 1
    %p192 = por %p190, %p191
    %p193 = scmp.ne.s32.totalorder %s185, %s188
    %p194 = scmp.eq.s32.totalorder %s16, 0
    %p195 = por %p193, %p194
    %p196 = scmp.ne.s32.totalorder %s185, %s188
    %p197 = scmp.eq.s32.totalorder %s21, 1
    %p198 = por %p196, %p197
    %p199 = scmp.ne.s32.totalorder %s188, %s189
    %p200 = scmp.eq.s32.totalorder %s21, 0
    %p201 = por %p199, %p200
    %p202 = scmp.ne.s32.totalorder %s188, %s189
    %p203 = scmp.eq.s32.totalorder %s22, 1
    %p204 = por %p202, %p203
    %p206 = scmp.ne.s32.totalorder %s189, %s205
    %p207 = scmp.eq.s32.totalorder %s22, 0
    %p208 = por %p206, %p207
    %s209 = ssub.s32 %s25, %s34
    %p210 = scmp.eq.s32.totalorder %s209, 0
    %s212 = sadd.s32 %s211, 1
    %s213 = scalar_select %p210, %s211, %s212
    %p216 = pneg %p210
    %p217 = scmp.eq.s32.totalorder %s16, 1
    %p218 = por %p216, %p217
    %p219 = scmp.ne.s32.totalorder %s211, %s214
    %p220 = scmp.eq.s32.totalorder %s16, 0
    %p221 = por %p219, %p220
    %p222 = scmp.ne.s32.totalorder %s211, %s214
    %p223 = scmp.eq.s32.totalorder %s21, 1
    %p224 = por %p222, %p223
    %p225 = scmp.ne.s32.totalorder %s214, %s215
    %p226 = scmp.eq.s32.totalorder %s21, 0
    %p227 = por %p225, %p226
    %p228 = scmp.ne.s32.totalorder %s214, %s215
    %p229 = scmp.eq.s32.totalorder %s22, 1
    %p230 = por %p228, %p229
    %p232 = scmp.ne.s32.totalorder %s215, %s231
    %p233 = scmp.eq.s32.totalorder %s22, 0
    %p234 = por %p232, %p233
    %s235 = ssub.s32 %s25, %s34
    %p236 = scmp.eq.s32.totalorder %s235, 0
    %s238 = sadd.s32 %s237, 1
    %s239 = scalar_select %p236, %s237, %s238
    %p242 = pneg %p236
    %p243 = scmp.eq.s32.totalorder %s16, 1
    %p244 = por %p242, %p243
    %p245 = scmp.ne.s32.totalorder %s237, %s240
    %p246 = scmp.eq.s32.totalorder %s16, 0
    %p247 = por %p245, %p246
    %p248 = scmp.ne.s32.totalorder %s237, %s240
    %p249 = scmp.eq.s32.totalorder %s21, 1
    %p250 = por %p248, %p249
    %p251 = scmp.ne.s32.totalorder %s240, %s241
    %p252 = scmp.eq.s32.totalorder %s21, 0
    %p253 = por %p251, %p252
    %p254 = scmp.ne.s32.totalorder %s240, %s241
    %p255 = scmp.eq.s32.totalorder %s22, 1
    %p256 = por %p254, %p255
    %p258 = scmp.ne.s32.totalorder %s241, %s257
    %p259 = scmp.eq.s32.totalorder %s22, 0
    %p260 = por %p258, %p259
    %s262 = sadd.s32 %s261, 1
    %p265 = scmp.eq.s32.totalorder %s16, 1
    %p266 = scmp.ne.s32.totalorder %s261, %s263
    %p267 = scmp.eq.s32.totalorder %s16, 0
    %p268 = por %p266, %p267
    %p269 = scmp.ne.s32.totalorder %s261, %s263
    %p270 = scmp.eq.s32.totalorder %s21, 1
    %p271 = por %p269, %p270
    %p272 = scmp.ne.s32.totalorder %s263, %s264
    %p273 = scmp.eq.s32.totalorder %s21, 0
    %p274 = por %p272, %p273
    %p275 = scmp.ne.s32.totalorder %s263, %s264
    %p276 = scmp.eq.s32.totalorder %s22, 1
    %p277 = por %p275, %p276
    %p279 = scmp.ne.s32.totalorder %s264, %s278
    %p280 = scmp.eq.s32.totalorder %s22, 0
    %p281 = por %p279, %p280
    %s282 = ssub.s32 %s23, %s42
    %s283 = ssub.s32 %s24, %s38
    %s284 = sor.u32 %s282, %s283
    %p285 = scmp.eq.s32.totalorder %s284, 0
    %s287 = sadd.s32 %s286, 1
    %s288 = scalar_select %p285, %s286, %s287
    %p291 = pneg %p285
    %p292 = scmp.eq.s32.totalorder %s16, 1
    %p293 = por %p291, %p292
    %p294 = scmp.ne.s32.totalorder %s286, %s289
    %p295 = scmp.eq.s32.totalorder %s16, 0
    %p296 = por %p294, %p295
    %p297 = scmp.ne.s32.totalorder %s286, %s289
    %p298 = scmp.eq.s32.totalorder %s21, 1
    %p299 = por %p297, %p298
    %p300 = scmp.ne.s32.totalorder %s289, %s290
    %p301 = scmp.eq.s32.totalorder %s21, 0
    %p302 = por %p300, %p301
    %p303 = scmp.ne.s32.totalorder %s289, %s290
    %p304 = scmp.eq.s32.totalorder %s22, 1
    %p305 = por %p303, %p304
    %p307 = scmp.ne.s32.totalorder %s290, %s306
    %p308 = scmp.eq.s32.totalorder %s22, 0
    %p309 = por %p307, %p308
    %p310 = scmp.le.s32.totalorder 1, %s16
    %p311 = scmp.lt.s32.totalorder %s16, 3
    %p312 = pnand %p310, %p311
    %p313 = pneg %p312
    // Predicated region
    $region9: #{_lambda_.9} parent=5 // pred_check
      _
    $region10: #{_lambda_.9} parent=5 // pred_check_branch
      %315 = sbr.rel (%p312) target = $region12
    $region11: #{_lambda_.9} parent=5 // pred_region
      %s316 = ssub.s32 %s16, 1
      // Predicated region
      $region13: #{_lambda_.9} parent=11 // pred_check
        %p317 = pneg %p112
      $region14: #{_lambda_.9} parent=11 // pred_check_branch
        %319 = sbr.rel (%p317) target = $region16
      $region15: #{_lambda_.9} parent=11 // pred_region
        _
      $region16: #{_lambda_.9} parent=11 // pred_fallthru
        _
      // Predicated region
      $region17: #{_lambda_.9} parent=11 // pred_check
        %p320 = pneg %p133
      $region18: #{_lambda_.9} parent=11 // pred_check_branch
        %322 = sbr.rel (%p320) target = $region20
      $region19: #{_lambda_.9} parent=11 // pred_region
        _
      $region20: #{_lambda_.9} parent=11 // pred_fallthru
        _
      // Predicated region
      $region21: #{_lambda_.9} parent=11 // pred_check
        %p323 = pneg %p154
      $region22: #{_lambda_.9} parent=11 // pred_check_branch
        %325 = sbr.rel (%p323) target = $region24
      $region23: #{_lambda_.9} parent=11 // pred_region
        _
      $region24: #{_lambda_.9} parent=11 // pred_fallthru
        _
      // Predicated region
      $region25: #{_lambda_.9} parent=11 // pred_check
        %p326 = pneg %p175
      $region26: #{_lambda_.9} parent=11 // pred_check_branch
        %328 = sbr.rel (%p326) target = $region28
      $region27: #{_lambda_.9} parent=11 // pred_region
        _
      $region28: #{_lambda_.9} parent=11 // pred_fallthru
        _
      // Predicated region
      $region29: #{_lambda_.9} parent=11 // pred_check
        %p329 = pneg %p201
      $region30: #{_lambda_.9} parent=11 // pred_check_branch
        %331 = sbr.rel (%p329) target = $region32
      $region31: #{_lambda_.9} parent=11 // pred_region
        %p332 = scmp.lt.s32.totalorder %s28, 0
        %s333 = scalar_select %p332, %s28, 0
        %s334 = smul.addr %s333, 4
        %s335 = scalar_lea.vmem %s6, %s334
      $region32: #{_lambda_.9} parent=11 // pred_fallthru
        _
      // Predicated region
      $region33: #{_lambda_.9} parent=11 // pred_check
        %p336 = pneg %p227
      $region34: #{_lambda_.9} parent=11 // pred_check_branch
        %338 = sbr.rel (%p336) target = $region36
      $region35: #{_lambda_.9} parent=11 // pred_region
        %p339 = scmp.lt.s32.totalorder %s28, 0
        %s340 = scalar_select %p339, %s28, 0
        %s341 = scalar_lea.vmem %s7, %s340
      $region36: #{_lambda_.9} parent=11 // pred_fallthru
        _
      // Predicated region
      $region37: #{_lambda_.9} parent=11 // pred_check
        %p342 = pneg %p253
      $region38: #{_lambda_.9} parent=11 // pred_check_branch
        %344 = sbr.rel (%p342) target = $region40
      $region39: #{_lambda_.9} parent=11 // pred_region
        %s345 = smul.u32 16, %s28
        %p346 = scmp.lt.s32.totalorder %s345, 15
        %s347 = scalar_select %p346, %s345, 15
        %s348 = smul.addr %s347, 4
        %s349 = scalar_lea.vmem %s8, %s348
        %s350 = smul.u32 16, %s28
      $region40: #{_lambda_.9} parent=11 // pred_fallthru
        _
      // Predicated region
      $region41: #{_lambda_.9} parent=11 // pred_check
        %p351 = pneg %p274
      $region42: #{_lambda_.9} parent=11 // pred_check_branch
        %353 = sbr.rel (%p351) target = $region44
      $region43: #{_lambda_.9} parent=11 // pred_region
        _
      $region44: #{_lambda_.9} parent=11 // pred_fallthru
        _
    $region12: #{_lambda_.9} parent=5 // pred_fallthru
      _
    %p354 = scmp.lt.s32.totalorder %s16, 2
    // Predicated region
    $region45: #{_lambda_.9} parent=5 // pred_check
      %p355 = pneg %p354
    $region46: #{_lambda_.9} parent=5 // pred_check_branch
      %357 = sbr.rel (%p355) target = $region48
    $region47: #{_lambda_.9} parent=5 // pred_region
      // Predicated region
      $region49: #{_lambda_.9} parent=47 // pred_check
        %p358 = pneg %p57
      $region50: #{_lambda_.9} parent=47 // pred_check_branch
        %360 = sbr.rel (%p358) target = $region52
      $region51: #{_lambda_.9} parent=47 // pred_region
        %p361 = scmp.lt.s32.totalorder %s23, 1
        %s362 = scalar_select %p361, %s23, 1
        %p363 = scmp.lt.s32.totalorder %s24, 0
        %s364 = scalar_select %p363, %s24, 0
        %s365 = sadd.s32 %s364, %s362
        %s366 = smul.addr %s365, 8
        %s367 = scalar_lea.vmem %s0, %s366
      $region52: #{_lambda_.9} parent=47 // pred_fallthru
        _
      // Predicated region
      $region53: #{_lambda_.9} parent=47 // pred_check
        %p368 = pneg %p85
      $region54: #{_lambda_.9} parent=47 // pred_check_branch
        %370 = sbr.rel (%p368) target = $region56
      $region55: #{_lambda_.9} parent=47 // pred_region
        %p371 = scmp.lt.s32.totalorder %s23, 1
        %s372 = scalar_select %p371, %s23, 1
        %p373 = scmp.lt.s32.totalorder %s24, 0
        %s374 = scalar_select %p373, %s24, 0
        %s375 = sadd.s32 %s374, %s372
        %s376 = smul.addr %s375, 4
        %s377 = scalar_lea.vmem %s1, %s376
      $region56: #{_lambda_.9} parent=47 // pred_fallthru
        _
    $region48: #{_lambda_.9} parent=5 // pred_fallthru
      _
    %p378 = scmp.le.s32.totalorder 1, %s16
    %p379 = scmp.lt.s32.totalorder %s16, 3
    %p380 = pnand %p378, %p379
    %p381 = pneg %p380
    // Predicated region
    $region57: #{_lambda_.9} parent=5 // pred_check
      _
    $region58: #{_lambda_.9} parent=5 // pred_check_branch
      %383 = sbr.rel (%p380) target = $region60
    $region59: #{_lambda_.9} parent=5 // pred_region
      %s384 = ssub.s32 %s16, 1
      %p385 = scmp.lt.s32.totalorder %s26, 1
      %s386 = scalar_select %p385, %s26, 1
      %p387 = scmp.lt.s32.totalorder %s27, 0
      %s388 = scalar_select %p387, %s27, 0
      %s389 = sadd.s32 %s388, %s386
      %s390 = smul.addr %s389, 8
      %s391 = scalar_lea.vmem %s0, %s390
      %p392 = pneg %p63
      %p393 = pneg %p60
      %p394 = scmp.lt.s32.totalorder %s26, 1
      %s395 = scalar_select %p394, %s26, 1
      %p396 = scmp.lt.s32.totalorder %s27, 0
      %s397 = scalar_select %p396, %s27, 0
      %s398 = sadd.s32 %s397, %s395
      %s399 = smul.addr %s398, 4
      %s400 = scalar_lea.vmem %s1, %s399
      %p401 = pneg %p91
      %p402 = pneg %p88
      %p403 = pneg %p112
      %p404 = pneg %p109
      %p405 = pneg %p133
      %p406 = pneg %p130
      %p407 = pneg %p154
      %p408 = pneg %p151
      %p409 = pneg %p175
      %p410 = pneg %p172
      %p411 = scmp.lt.s32.totalorder %s28, 0
      %s412 = scalar_select %p411, %s28, 0
      %s413 = smul.addr %s412, 4
      %s414 = scalar_lea.vmem %s6, %s413
      %p415 = pneg %p201
      %p416 = pneg %p198
      %p417 = scmp.lt.s32.totalorder %s28, 0
      %s418 = scalar_select %p417, %s28, 0
      %s419 = scalar_lea.vmem %s7, %s418
      %p420 = pneg %p227
      %p421 = pneg %p224
      %s422 = smul.u32 16, %s28
      %p423 = scmp.lt.s32.totalorder %s422, 15
      %s424 = scalar_select %p423, %s422, 15
      %s425 = smul.addr %s424, 4
      %s426 = scalar_lea.vmem %s8, %s425
      %p427 = pneg %p253
      %p428 = pneg %p250
      %p429 = pneg %p274
      %p430 = pneg %p271
      %p431 = pneg %p302
      %p432 = pneg %p299
      %p433 = scmp.lt.s32.totalorder %s26, 1
      %s434 = scalar_select %p433, %s26, 1
      %p435 = scmp.lt.s32.totalorder %s27, 0
      %s436 = scalar_select %p435, %s27, 0
      %s437 = sadd.s32 %s436, %s434
      %s438 = smul.addr %s437, 8
      %s439 = scalar_lea.vmem %s10, %s438
      %p440 = scmp.lt.s32.totalorder %s26, 1
      %s441 = scalar_select %p440, %s26, 1
      %p442 = scmp.lt.s32.totalorder %s27, 0
      %s443 = scalar_select %p442, %s27, 0
      %s444 = sadd.s32 %s443, %s441
      %s445 = smul.addr %s444, 8
      %s446 = scalar_lea.vmem %s0, %s445
      %p447 = scmp.lt.s32.totalorder %s26, 1
      %s448 = scalar_select %p447, %s26, 1
      %p449 = scmp.lt.s32.totalorder %s27, 0
      %s450 = scalar_select %p449, %s27, 0
      %s451 = sadd.s32 %s450, %s448
      %s452 = smul.addr %s451, 4
      %s453 = scalar_lea.vmem %s1, %s452
      %p454 = scmp.lt.s32.totalorder %s28, 0
      %s455 = scalar_select %p454, %s28, 0
      %s456 = smul.addr %s455, 4
      %s457 = scalar_lea.vmem %s6, %s456
      %p458 = scmp.lt.s32.totalorder %s28, 0
      %s459 = scalar_select %p458, %s28, 0
      %s460 = scalar_lea.vmem %s7, %s459
      %s461 = smul.u32 16, %s28
      %p462 = scmp.lt.s32.totalorder %s461, 15
      %s463 = scalar_select %p462, %s461, 15
      %s464 = smul.addr %s463, 4
      %s465 = scalar_lea.vmem %s8, %s464
      %s466 = smul.u32 16, %s28
      %p467 = scmp.lt.s32.totalorder %s26, 1
      %s468 = scalar_select %p467, %s26, 1
      %p469 = scmp.lt.s32.totalorder %s27, 0
      %s470 = scalar_select %p469, %s27, 0
      %s471 = sadd.s32 %s470, %s468
      %s472 = smul.addr %s471, 8
      %s473 = scalar_lea.vmem %s10, %s472
      %p475 = scmp.eq.s32.totalorder %s28, 0
      // Predicated region
      $region61: #{_lambda_.9} parent=59 // pred_check
        %p476 = pneg %p475
      $region62: #{_lambda_.9} parent=59 // pred_check_branch
        %478 = sbr.rel (%p476) target = $region64
      $region63: #{_lambda_.9} parent=59 // pred_region
        %v479 = vld [vmem:[%s453] sm:$0xf]
        %v480 = vld [vmem:[%s2] sm:$0xf]
        %v481 = vld [vmem:[%s2 + $0x4] sm:$0xf]
        %v482 = vld [vmem:[%s2 + $0x8] sm:$0xf]
        %v483 = vld [vmem:[%s2 + $0xc] sm:$0xf]
        %v484 = vld [vmem:[%s3] sm:$0x1]
        %v486 = vlaneseq
        %v487 = vshrl.u32 %v486, 7
        %v488 = vsub.s32 0, %v487
        %v489 = vrot.slane %v484, %v488
        %v495 = vunpack.c.l.b16 %v480
        %v496 = vunpack.c.l.b16 %v481
        %v497 = vunpack.c.l.b16 %v482
        %v498 = vunpack.c.l.b16 %v483
        %v499 = vpack.c.b16 %v496, %v495
        %v500 = vpack.c.b16 %v498, %v497
        %vm503 = vcmask 261120
        %v505 = vsel %vm503, %v479, 0
        %507 = vmatprep.subr.bf16.mxu0 0
        %508 = vmatpush1.bf16.msra.mxu0 %v499
        %509 = vmatprep.subr.bf16.mxu0 0
        %510 = vmatpush1.bf16.msra.mxu0 %v500
        %511 = vmatprep.subr.bf16.mxu0 0
        %512 = vmatpush1.bf16.msra.mxu0 0
        %513 = vmatprep.subr.bf16.mxu0 0
        %514 = vmatpush1.bf16.msra.mxu0 0
        %515 = vmatprep.subr.bf16.mxu0 0
        %516 = vmatpush1.bf16.msra.mxu0 0
        %517 = vmatprep.subr.bf16.mxu0 0
        %518 = vmatpush1.bf16.msra.mxu0 0
        %519 = vmatprep.subr.bf16.mxu0 0
        %520 = vmatpush1.bf16.msra.mxu0 0
        %521 = vmatprep.subr.bf16.mxu0 0
        %522 = vmatpush1.bf16.msra.mxu0 0
        %523 = vmatprep.subr.bf16.mxu0 0
        %524 = vmatpush1.bf16.msra.mxu0 0
        %525 = vmatprep.subr.bf16.mxu0 0
        %526 = vmatpush1.bf16.msra.mxu0 0
        %527 = vmatprep.subr.bf16.mxu0 0
        %528 = vmatpush1.bf16.msra.mxu0 0
        %529 = vmatprep.subr.bf16.mxu0 0
        %530 = vmatpush1.bf16.msra.mxu0 0
        %531 = vmatprep.subr.bf16.mxu0 0
        %532 = vmatpush1.bf16.msra.mxu0 0
        %533 = vmatprep.subr.bf16.mxu0 0
        %534 = vmatpush1.bf16.msra.mxu0 0
        %535 = vmatprep.subr.bf16.mxu0 0
        %536 = vmatpush1.bf16.msra.mxu0 0
        %537 = vmatprep.subr.bf16.mxu0 0
        %538 = vmatpush1.bf16.msra.mxu0 0
        %539 = vmatprep.mubr.bf16.mxu0 0
        %540 = vmatmul.mubr.bf16.gmra.mrb[0].mxu0 %v505
        %v541 = vpop.f32.mrb[0].mxu0
        %v542 = vadd.f32 %v489, %v541
        %v543 = vpop.f32.mrb[0].mxu0
        %v544 = vpop.f32.mrb[0].mxu0
        %v545 = vpop.f32.mrb[0].mxu0
        %546 = vdwg.mxu0
        %v547 = vld [vmem:[%s446] sm:$0xff]
        %v548 = vadd.f32 %v547, %v542
        %549 = vst.msk [vmem:[#allocation3] sm:$0xff] %vm503, %v548
        %v550 = vld [vmem:[%s4] sm:$0x1]
        %v551 = vld [vmem:[%s5] sm:$0x1]
        %v552 = vsel %vm503, %v548, 0.0
        %553 = vadd.xlane.f32.xlu0 %v552
        %v554 = vpop.xlane.xlu0 %553
        %v555 = vrcp.pop 32.0
        %v556 = vmul.f32 %v554, %v555
        %v557 = vsub.f32 %v548, %v556
        %v558 = vmul.f32 %v557, %v557
        %v559 = vsel %vm503, %v558, 0.0
        %560 = vadd.xlane.f32.xlu0 %v559
        %v561 = vpop.xlane.xlu0 %560
        %v562 = vmul.f32 %v561, %v555
        %v563 = vadd.f32 %v562, 1e-05
        %v564 = vrsqrt.pop %v563
        %v565 = vmul.f32 %v557, %v564
        %v567 = vlaneseq
        %v568 = vshrl.u32 %v567, 7
        %v569 = vsub.s32 0, %v568
        %v570 = vrot.slane %v550, %v569
        %v572 = vmul.f32 %v565, %v570
        %v574 = vlaneseq
        %v575 = vshrl.u32 %v574, 7
        %v576 = vsub.s32 0, %v575
        %v577 = vrot.slane %v551, %v576
        %v579 = vadd.f32 %v572, %v577
        %v580 = vpack.c.bf16 %v579, %v579
        %vm581 = vcmask 257024
        %582 = vst.msk [vmem:[#allocation2] sm:$0xf] %vm581, %v580
      $region64: #{_lambda_.9} parent=59 // pred_fallthru
        _
      %v583 = vld [vmem:[#allocation2] sm:$0xf]
      %v584 = vld [vmem:[%s457] sm:$0xf]
      %v585 = vld [vmem:[%s457 + $0x4] sm:$0xf]
      %v586 = vld [vmem:[%s457 + $0x8] sm:$0xf]
      %v587 = vld [vmem:[%s457 + $0xc] sm:$0xf]
      %v588 = vld [vmem:[%s460] sm:$0x1]
      %v590 = vlaneseq
      %v591 = vshrl.u32 %v590, 7
      %v592 = vsub.s32 0, %v591
      %v593 = vrot.slane %v588, %v592
      %v599 = vunpack.c.l.b16 %v584
      %v600 = vunpack.c.l.b16 %v585
      %v601 = vunpack.c.l.b16 %v586
      %v602 = vunpack.c.l.b16 %v587
      %v603 = vpack.c.b16 %v600, %v599
      %v604 = vpack.c.b16 %v602, %v601
      %vm607 = vcmask 261120
      %v609 = vsel %vm607, %v583, 0
      %611 = vmatprep.subr.bf16.mxu0 0
      %612 = vmatpush1.bf16.msra.mxu0 %v603
      %613 = vmatprep.subr.bf16.mxu0 0
      %614 = vmatpush1.bf16.msra.mxu0 %v604
      %615 = vmatprep.subr.bf16.mxu0 0
      %616 = vmatpush1.bf16.msra.mxu0 0
      %617 = vmatprep.subr.bf16.mxu0 0
      %618 = vmatpush1.bf16.msra.mxu0 0
      %619 = vmatprep.subr.bf16.mxu0 0
      %620 = vmatpush1.bf16.msra.mxu0 0
      %621 = vmatprep.subr.bf16.mxu0 0
      %622 = vmatpush1.bf16.msra.mxu0 0
      %623 = vmatprep.subr.bf16.mxu0 0
      %624 = vmatpush1.bf16.msra.mxu0 0
      %625 = vmatprep.subr.bf16.mxu0 0
      %626 = vmatpush1.bf16.msra.mxu0 0
      %627 = vmatprep.subr.bf16.mxu0 0
      %628 = vmatpush1.bf16.msra.mxu0 0
      %629 = vmatprep.subr.bf16.mxu0 0
      %630 = vmatpush1.bf16.msra.mxu0 0
      %631 = vmatprep.subr.bf16.mxu0 0
      %632 = vmatpush1.bf16.msra.mxu0 0
      %633 = vmatprep.subr.bf16.mxu0 0
      %634 = vmatpush1.bf16.msra.mxu0 0
      %635 = vmatprep.subr.bf16.mxu0 0
      %636 = vmatpush1.bf16.msra.mxu0 0
      %637 = vmatprep.subr.bf16.mxu0 0
      %638 = vmatpush1.bf16.msra.mxu0 0
      %639 = vmatprep.subr.bf16.mxu0 0
      %640 = vmatpush1.bf16.msra.mxu0 0
      %641 = vmatprep.subr.bf16.mxu0 0
      %642 = vmatpush1.bf16.msra.mxu0 0
      %643 = vmatprep.mubr.bf16.mxu0 0
      %644 = vmatmul.mubr.bf16.gmra.mrb[0].mxu0 %v609
      %v645 = vpop.f32.mrb[0].mxu0
      %v646 = vadd.f32 %v593, %v645
      %v647 = vpop.f32.mrb[0].mxu0
      %v648 = vpop.f32.mrb[0].mxu0
      %v649 = vpop.f32.mrb[0].mxu0
      %650 = vdwg.mxu0
      %v651 = vmul.f32 %v646, 0.5
      %v652 = vmul.f32 %v646, %v646
      %v653 = vmul.f32 %v646, %v652
      %v654 = vmul.f32 %v653, 0.044715
      %v655 = vadd.f32 %v646, %v654
      %v656 = vmul.f32 %v655, 0.7978846
      %v657 = vtanh.pop %v656
      %v658 = vadd.f32 %v657, 1.0
      %v659 = vmul.f32 %v651, %v658
      %v660 = vld [vmem:[#allocation3] sm:$0xff]
      %v661 = vpack.c.bf16 %v659, %v659
      %v662 = vld [vmem:[%s465] sm:$0xf]
      %v663 = vld [vmem:[%s465 + $0x4] sm:$0xf]
      %v664 = vld [vmem:[%s465 + $0x8] sm:$0xf]
      %v665 = vld [vmem:[%s465 + $0xc] sm:$0xf]
      %v666 = vld [vmem:[%s465 + $0x10] sm:$0xf]
      %v667 = vld [vmem:[%s465 + $0x14] sm:$0xf]
      %v668 = vld [vmem:[%s465 + $0x18] sm:$0xf]
      %v669 = vld [vmem:[%s465 + $0x1c] sm:$0xf]
      %v670 = vld [vmem:[%s465 + $0x20] sm:$0xf]
      %v671 = vld [vmem:[%s465 + $0x24] sm:$0xf]
      %v672 = vld [vmem:[%s465 + $0x28] sm:$0xf]
      %v673 = vld [vmem:[%s465 + $0x2c] sm:$0xf]
      %v674 = vld [vmem:[%s465 + $0x30] sm:$0xf]
      %v675 = vld [vmem:[%s465 + $0x34] sm:$0xf]
      %v676 = vld [vmem:[%s465 + $0x38] sm:$0xf]
      %v677 = vld [vmem:[%s465 + $0x3c] sm:$0xf]
      %v694 = vunpack.c.l.b16 %v662
      %v695 = vunpack.c.l.b16 %v663
      %v696 = vunpack.c.l.b16 %v664
      %v697 = vunpack.c.l.b16 %v665
      %v698 = vunpack.c.l.b16 %v666
      %v699 = vunpack.c.l.b16 %v667
      %v700 = vunpack.c.l.b16 %v668
      %v701 = vunpack.c.l.b16 %v669
      %v702 = vunpack.c.l.b16 %v670
      %v703 = vunpack.c.l.b16 %v671
      %v704 = vunpack.c.l.b16 %v672
      %v705 = vunpack.c.l.b16 %v673
      %v706 = vunpack.c.l.b16 %v674
      %v707 = vunpack.c.l.b16 %v675
      %v708 = vunpack.c.l.b16 %v676
      %v709 = vunpack.c.l.b16 %v677
      %v710 = vpack.c.b16 %v695, %v694
      %v711 = vpack.c.b16 %v697, %v696
      %v712 = vpack.c.b16 %v699, %v698
      %v713 = vpack.c.b16 %v701, %v700
      %v714 = vpack.c.b16 %v703, %v702
      %v715 = vpack.c.b16 %v705, %v704
      %v716 = vpack.c.b16 %v707, %v706
      %v717 = vpack.c.b16 %v709, %v708
      %726 = vmatprep.subr.bf16.mxu0 0
      %727 = vmatpush1.bf16.msra.mxu0 %v710
      %728 = vmatprep.subr.bf16.mxu0 0
      %729 = vmatpush1.bf16.msra.mxu0 %v711
      %730 = vmatprep.subr.bf16.mxu0 0
      %731 = vmatpush1.bf16.msra.mxu0 %v712
      %732 = vmatprep.subr.bf16.mxu0 0
      %733 = vmatpush1.bf16.msra.mxu0 %v713
      %734 = vmatprep.subr.bf16.mxu0 0
      %735 = vmatpush1.bf16.msra.mxu0 %v714
      %736 = vmatprep.subr.bf16.mxu0 0
      %737 = vmatpush1.bf16.msra.mxu0 %v715
      %738 = vmatprep.subr.bf16.mxu0 0
      %739 = vmatpush1.bf16.msra.mxu0 %v716
      %740 = vmatprep.subr.bf16.mxu0 0
      %741 = vmatpush1.bf16.msra.mxu0 %v717
      %742 = vmatprep.subr.bf16.mxu0 0
      %743 = vmatpush1.bf16.msra.mxu0 0
      %744 = vmatprep.subr.bf16.mxu0 0
      %745 = vmatpush1.bf16.msra.mxu0 0
      %746 = vmatprep.subr.bf16.mxu0 0
      %747 = vmatpush1.bf16.msra.mxu0 0
      %748 = vmatprep.subr.bf16.mxu0 0
      %749 = vmatpush1.bf16.msra.mxu0 0
      %750 = vmatprep.subr.bf16.mxu0 0
      %751 = vmatpush1.bf16.msra.mxu0 0
      %752 = vmatprep.subr.bf16.mxu0 0
      %753 = vmatpush1.bf16.msra.mxu0 0
      %754 = vmatprep.subr.bf16.mxu0 0
      %755 = vmatpush1.bf16.msra.mxu0 0
      %756 = vmatprep.subr.bf16.mxu0 0
      %757 = vmatpush1.bf16.msra.mxu0 0
      %758 = vmatprep.mubr.bf16.mxu0 0
      %759 = vmatmul.mubr.bf16.gmra.mrb[0].mxu0 %v661
      %v760 = vpop.f32.mrb[0].mxu0
      %v761 = vadd.f32 0.0, %v760
      %v762 = vpop.f32.mrb[0].mxu0
      %v763 = vpop.f32.mrb[0].mxu0
      %v764 = vpop.f32.mrb[0].mxu0
      %765 = vdwg.mxu0
      %v766 = vadd.f32 %v660, %v761
      %767 = vst.msk [vmem:[#allocation3] sm:$0xff] %vm607, %v766
      // Predicated region
      $region65: #{_lambda_.9} parent=59 // pred_check
        %p768 = pneg %p475
      $region66: #{_lambda_.9} parent=59 // pred_check_branch
        %770 = sbr.rel (%p768) target = $region68
      $region67: #{_lambda_.9} parent=59 // pred_region
        %v771 = vld [vmem:[#allocation3] sm:$0xff]
        %v772 = vld [vmem:[%s9] sm:$0x1]
        %v774 = vlaneseq
        %v775 = vshrl.u32 %v774, 7
        %v776 = vsub.s32 0, %v775
        %v777 = vrot.slane %v772, %v776
        %v779 = vadd.f32 %v771, %v777
        %780 = vst.msk [vmem:[%s473] sm:$0xff] %vm607, %v779
      $region68: #{_lambda_.9} parent=59 // pred_fallthru
        _
      %p781 = scmp.lt.s32.totalorder %s26, 1
      %s782 = scalar_select %p781, %s26, 1
      %p783 = scmp.lt.s32.totalorder %s27, 0
      %s784 = scalar_select %p783, %s27, 0
      %s785 = sadd.s32 %s784, %s782
      %s786 = smul.addr %s785, 8
      %s787 = scalar_lea.vmem %s10, %s786
      // Predicated region
      $region69: #{_lambda_.9} parent=59 // pred_check
        %p788 = pneg %p299
      $region70: #{_lambda_.9} parent=59 // pred_check_branch
        %790 = sbr.rel (%p788) target = $region72
      $region71: #{_lambda_.9} parent=59 // pred_region
        _
      $region72: #{_lambda_.9} parent=59 // pred_fallthru
        _
    $region60: #{_lambda_.9} parent=5 // pred_fallthru
      _
    %p791 = scmp.le.s32.totalorder 2, %s16
    // Predicated region
    $region73: #{_lambda_.9} parent=5 // pred_check
      %p792 = pneg %p791
    $region74: #{_lambda_.9} parent=5 // pred_check_branch
      %794 = sbr.rel (%p792) target = $region76
    $region75: #{_lambda_.9} parent=5 // pred_region
      %s795 = ssub.s32 %s16, 2
      // Predicated region
      $region77: #{_lambda_.9} parent=75 // pred_check
        %p796 = pneg %p305
      $region78: #{_lambda_.9} parent=75 // pred_check_branch
        %798 = sbr.rel (%p796) target = $region80
      $region79: #{_lambda_.9} parent=75 // pred_region
        %p799 = scmp.lt.s32.totalorder %s29, 1
        %s800 = scalar_select %p799, %s29, 1
        %p801 = scmp.lt.s32.totalorder %s30, 0
        %s802 = scalar_select %p801, %s30, 0
        %s803 = sadd.s32 %s802, %s800
        %s804 = smul.addr %s803, 8
        %s805 = scalar_lea.vmem %s10, %s804
      $region80: #{_lambda_.9} parent=75 // pred_fallthru
        _
    $region76: #{_lambda_.9} parent=5 // pred_fallthru
      _
  $region6: #{_lambda_.9} parent=0 // loop_footer
    %s20 = sadd.s32 1, %s16
  $region7: #{_lambda_.9} parent=0 // loop_footer_branch
    %15 = sbr.rel target = $region3
  $region8: #{_lambda_.9} parent=0 // loop_exit
    _

// kernel: _lambda_.7
$region0: #{_lambda_.7}
  #allocation0 [shape = 'u32[]', space=smem, size = 0x4, offset = 0x4, fixed_abs, tag = 'smem constant byte address 0x4 - core index']
  #allocation1 [shape = 'u32[144,128]{1,0:T(1,128)}', space=vmem, size = 0x12000, scoped, tag = 'internal scratch']
  %s0 = inlined_call_operand.vmem [shape: f32[2,8,32], index: 0, kind: input, shape index: {}]
  %s1 = inlined_call_operand.vmem [shape: f32[1,32], index: 1, kind: input, shape index: {}]
  %s2 = inlined_call_operand.vmem [shape: f32[1,32], index: 2, kind: input, shape index: {}]
  %s3 = inlined_call_operand.vmem [shape: bf16[32,96], index: 3, kind: input, shape index: {}]
  %s4 = inlined_call_operand.vmem [shape: bf16[2,4,8,8], index: 4, kind: output, shape index: {0}]
  %s5 = inlined_call_operand.vmem [shape: bf16[2,4,8,8], index: 5, kind: output, shape index: {1}]
  %s6 = inlined_call_operand.vmem [shape: bf16[2,4,8,8], index: 6, kind: output, shape index: {2}]
  %7 = xla_tuple %s4, %s5, %s6
  %s8 = sld [smem:[#allocation0]]
  $region65: #{_lambda_.7} parent=0
    _
  %s10 = ssub.s32 1, %s8
  %s11 = scalar_select 0, %s10, %s8
  loop: start=0, step=1, limit=4
  $region2: #{_lambda_.7} parent=0 // loop_pre_header
    _
  $region3: #{_lambda_.7} parent=0 // loop_header
    %s13 = sphi 0, %s17
    %p14 = scmp.ge.s32.totalorder %s13, 4
    %s20 = sphi 0, %s32
    %s21 = sphi 0, %s28
    %s22 = sphi 0, %s20
    %s23 = sphi 0, %s21
    %s24 = sphi 0, %s22
    %s25 = sphi 0, %s23
    %s37 = sphi 0, %s39
    %s40 = sphi 0, %s37
    %s41 = sphi 0, %s40
    %s57 = sphi 0, %s41
    %s61 = sphi 0, %s61
    %s63 = sphi 0, %s61
    %s64 = sphi 0, %s63
    %s78 = sphi 0, %s64
    %s82 = sphi 0, %s82
    %s84 = sphi 0, %s82
    %s85 = sphi 0, %s84
    %s99 = sphi 0, %s85
    %s103 = sphi 0, %s103
    %s105 = sphi 0, %s103
    %s106 = sphi 0, %s105
    %s120 = sphi 0, %s106
    %s128 = sphi 0, %s130
    %s131 = sphi 0, %s128
    %s132 = sphi 0, %s131
    %s148 = sphi 0, %s132
    %s156 = sphi 0, %s158
    %s159 = sphi 0, %s156
    %s160 = sphi 0, %s159
    %s176 = sphi 0, %s160
    %s184 = sphi 0, %s186
    %s187 = sphi 0, %s184
    %s188 = sphi 0, %s187
    %s204 = sphi 0, %s188
  $region4: #{_lambda_.7} parent=0 // loop_header_branch
    %16 = sbr.rel (%p14) target = $region8
  $region5: #{_lambda_.7} parent=0 // loop_body
    %s18 = ssub.s32 %s13, 1
    %s19 = ssub.s32 %s13, 2
    %s26 = sadd.s32 1, %s21
    %p27 = scmp.ge.s32.totalorder %s26, 1
    %s28 = scalar_select %p27, 0, %s26
    %s29 = sadd.s32 1, %s20
    %s30 = scalar_select %p27, %s29, %s20
    %p31 = scmp.ge.s32.totalorder %s30, 2
    %s32 = scalar_select %p31, 0, %s30
    %s33 = ssub.s32 %s20, %s32
    %s34 = ssub.s32 %s21, %s28
    %s35 = sor.u32 %s33, %s34
    %p36 = scmp.eq.s32.totalorder %s35, 0
    %s38 = sadd.s32 %s37, 1
    %s39 = scalar_select %p36, %s37, %s38
    %p42 = pneg %p36
    %p43 = scmp.eq.s32.totalorder %s13, 1
    %p44 = por %p42, %p43
    %p45 = scmp.ne.s32.totalorder %s37, %s40
    %p46 = scmp.eq.s32.totalorder %s13, 0
    %p47 = por %p45, %p46
    %p48 = scmp.ne.s32.totalorder %s37, %s40
    %p49 = scmp.eq.s32.totalorder %s18, 1
    %p50 = por %p48, %p49
    %p51 = scmp.ne.s32.totalorder %s40, %s41
    %p52 = scmp.eq.s32.totalorder %s18, 0
    %p53 = por %p51, %p52
    %p54 = scmp.ne.s32.totalorder %s40, %s41
    %p55 = scmp.eq.s32.totalorder %s19, 1
    %p56 = por %p54, %p55
    %p58 = scmp.ne.s32.totalorder %s41, %s57
    %p59 = scmp.eq.s32.totalorder %s19, 0
    %p60 = por %p58, %p59
    %s62 = sadd.s32 %s61, 1
    %p65 = scmp.eq.s32.totalorder %s13, 1
    %p66 = scmp.ne.s32.totalorder %s61, %s63
    %p67 = scmp.eq.s32.totalorder %s13, 0
    %p68 = por %p66, %p67
    %p69 = scmp.ne.s32.totalorder %s61, %s63
    %p70 = scmp.eq.s32.totalorder %s18, 1
    %p71 = por %p69, %p70
    %p72 = scmp.ne.s32.totalorder %s63, %s64
    %p73 = scmp.eq.s32.totalorder %s18, 0
    %p74 = por %p72, %p73
    %p75 = scmp.ne.s32.totalorder %s63, %s64
    %p76 = scmp.eq.s32.totalorder %s19, 1
    %p77 = por %p75, %p76
    %p79 = scmp.ne.s32.totalorder %s64, %s78
    %p80 = scmp.eq.s32.totalorder %s19, 0
    %p81 = por %p79, %p80
    %s83 = sadd.s32 %s82, 1
    %p86 = scmp.eq.s32.totalorder %s13, 1
    %p87 = scmp.ne.s32.totalorder %s82, %s84
    %p88 = scmp.eq.s32.totalorder %s13, 0
    %p89 = por %p87, %p88
    %p90 = scmp.ne.s32.totalorder %s82, %s84
    %p91 = scmp.eq.s32.totalorder %s18, 1
    %p92 = por %p90, %p91
    %p93 = scmp.ne.s32.totalorder %s84, %s85
    %p94 = scmp.eq.s32.totalorder %s18, 0
    %p95 = por %p93, %p94
    %p96 = scmp.ne.s32.totalorder %s84, %s85
    %p97 = scmp.eq.s32.totalorder %s19, 1
    %p98 = por %p96, %p97
    %p100 = scmp.ne.s32.totalorder %s85, %s99
    %p101 = scmp.eq.s32.totalorder %s19, 0
    %p102 = por %p100, %p101
    %s104 = sadd.s32 %s103, 1
    %p107 = scmp.eq.s32.totalorder %s13, 1
    %p108 = scmp.ne.s32.totalorder %s103, %s105
    %p109 = scmp.eq.s32.totalorder %s13, 0
    %p110 = por %p108, %p109
    %p111 = scmp.ne.s32.totalorder %s103, %s105
    %p112 = scmp.eq.s32.totalorder %s18, 1
    %p113 = por %p111, %p112
    %p114 = scmp.ne.s32.totalorder %s105, %s106
    %p115 = scmp.eq.s32.totalorder %s18, 0
    %p116 = por %p114, %p115
    %p117 = scmp.ne.s32.totalorder %s105, %s106
    %p118 = scmp.eq.s32.totalorder %s19, 1
    %p119 = por %p117, %p118
    %p121 = scmp.ne.s32.totalorder %s106, %s120
    %p122 = scmp.eq.s32.totalorder %s19, 0
    %p123 = por %p121, %p122
    %s124 = ssub.s32 %s20, %s32
    %s125 = ssub.s32 %s21, %s28
    %s126 = sor.u32 %s124, %s125
    %p127 = scmp.eq.s32.totalorder %s126, 0
    %s129 = sadd.s32 %s128, 1
    %s130 = scalar_select %p127, %s128, %s129
    %p133 = pneg %p127
    %p134 = scmp.eq.s32.totalorder %s13, 1
    %p135 = por %p133, %p134
    %p136 = scmp.ne.s32.totalorder %s128, %s131
    %p137 = scmp.eq.s32.totalorder %s13, 0
    %p138 = por %p136, %p137
    %p139 = scmp.ne.s32.totalorder %s128, %s131
    %p140 = scmp.eq.s32.totalorder %s18, 1
    %p141 = por %p139, %p140
    %p142 = scmp.ne.s32.totalorder %s131, %s132
    %p143 = scmp.eq.s32.totalorder %s18, 0
    %p144 = por %p142, %p143
    %p145 = scmp.ne.s32.totalorder %s131, %s132
    %p146 = scmp.eq.s32.totalorder %s19, 1
    %p147 = por %p145, %p146
    %p149 = scmp.ne.s32.totalorder %s132, %s148
    %p150 = scmp.eq.s32.totalorder %s19, 0
    %p151 = por %p149, %p150
    %s152 = ssub.s32 %s20, %s32
    %s153 = ssub.s32 %s21, %s28
    %s154 = sor.u32 %s152, %s153
    %p155 = scmp.eq.s32.totalorder %s154, 0
    %s157 = sadd.s32 %s156, 1
    %s158 = scalar_select %p155, %s156, %s157
    %p161 = pneg %p155
    %p162 = scmp.eq.s32.totalorder %s13, 1
    %p163 = por %p161, %p162
    %p164 = scmp.ne.s32.totalorder %s156, %s159
    %p165 = scmp.eq.s32.totalorder %s13, 0
    %p166 = por %p164, %p165
    %p167 = scmp.ne.s32.totalorder %s156, %s159
    %p168 = scmp.eq.s32.totalorder %s18, 1
    %p169 = por %p167, %p168
    %p170 = scmp.ne.s32.totalorder %s159, %s160
    %p171 = scmp.eq.s32.totalorder %s18, 0
    %p172 = por %p170, %p171
    %p173 = scmp.ne.s32.totalorder %s159, %s160
    %p174 = scmp.eq.s32.totalorder %s19, 1
    %p175 = por %p173, %p174
    %p177 = scmp.ne.s32.totalorder %s160, %s176
    %p178 = scmp.eq.s32.totalorder %s19, 0
    %p179 = por %p177, %p178
    %s180 = ssub.s32 %s20, %s32
    %s181 = ssub.s32 %s21, %s28
    %s182 = sor.u32 %s180, %s181
    %p183 = scmp.eq.s32.totalorder %s182, 0
    %s185 = sadd.s32 %s184, 1
    %s186 = scalar_select %p183, %s184, %s185
    %p189 = pneg %p183
    %p190 = scmp.eq.s32.totalorder %s13, 1
    %p191 = por %p189, %p190
    %p192 = scmp.ne.s32.totalorder %s184, %s187
    %p193 = scmp.eq.s32.totalorder %s13, 0
    %p194 = por %p192, %p193
    %p195 = scmp.ne.s32.totalorder %s184, %s187
    %p196 = scmp.eq.s32.totalorder %s18, 1
    %p197 = por %p195, %p196
    %p198 = scmp.ne.s32.totalorder %s187, %s188
    %p199 = scmp.eq.s32.totalorder %s18, 0
    %p200 = por %p198, %p199
    %p201 = scmp.ne.s32.totalorder %s187, %s188
    %p202 = scmp.eq.s32.totalorder %s19, 1
    %p203 = por %p201, %p202
    %p205 = scmp.ne.s32.totalorder %s188, %s204
    %p206 = scmp.eq.s32.totalorder %s19, 0
    %p207 = por %p205, %p206
    %p208 = scmp.le.s32.totalorder 1, %s13
    %p209 = scmp.lt.s32.totalorder %s13, 3
    %p210 = pnand %p208, %p209
    %p211 = pneg %p210
    // Predicated region
    $region9: #{_lambda_.7} parent=5 // pred_check
      _
    $region10: #{_lambda_.7} parent=5 // pred_check_branch
      %213 = sbr.rel (%p210) target = $region12
    $region11: #{_lambda_.7} parent=5 // pred_region
      %s214 = ssub.s32 %s13, 1
      // Predicated region
      $region13: #{_lambda_.7} parent=11 // pred_check
        %p215 = pneg %p74
      $region14: #{_lambda_.7} parent=11 // pred_check_branch
        %217 = sbr.rel (%p215) target = $region16
      $region15: #{_lambda_.7} parent=11 // pred_region
        _
      $region16: #{_lambda_.7} parent=11 // pred_fallthru
        _
      // Predicated region
      $region17: #{_lambda_.7} parent=11 // pred_check
        %p218 = pneg %p95
      $region18: #{_lambda_.7} parent=11 // pred_check_branch
        %220 = sbr.rel (%p218) target = $region20
      $region19: #{_lambda_.7} parent=11 // pred_region
        _
      $region20: #{_lambda_.7} parent=11 // pred_fallthru
        _
      // Predicated region
      $region21: #{_lambda_.7} parent=11 // pred_check
        %p221 = pneg %p116
      $region22: #{_lambda_.7} parent=11 // pred_check_branch
        %223 = sbr.rel (%p221) target = $region24
      $region23: #{_lambda_.7} parent=11 // pred_region
        _
      $region24: #{_lambda_.7} parent=11 // pred_fallthru
        _
    $region12: #{_lambda_.7} parent=5 // pred_fallthru
      _
    %p224 = scmp.lt.s32.totalorder %s13, 2
    // Predicated region
    $region25: #{_lambda_.7} parent=5 // pred_check
      %p225 = pneg %p224
    $region26: #{_lambda_.7} parent=5 // pred_check_branch
      %227 = sbr.rel (%p225) target = $region28
    $region27: #{_lambda_.7} parent=5 // pred_region
      // Predicated region
      $region29: #{_lambda_.7} parent=27 // pred_check
        %p228 = pneg %p47
      $region30: #{_lambda_.7} parent=27 // pred_check_branch
        %230 = sbr.rel (%p228) target = $region32
      $region31: #{_lambda_.7} parent=27 // pred_region
        %p231 = scmp.lt.s32.totalorder %s20, 1
        %s232 = scalar_select %p231, %s20, 1
        %p233 = scmp.lt.s32.totalorder %s21, 0
        %s234 = scalar_select %p233, %s21, 0
        %s235 = sadd.s32 %s234, %s232
        %s236 = smul.addr %s235, 8
        %s237 = scalar_lea.vmem %s0, %s236
      $region32: #{_lambda_.7} parent=27 // pred_fallthru
        _
    $region28: #{_lambda_.7} parent=5 // pred_fallthru
      _
    %p238 = scmp.le.s32.totalorder 1, %s13
    %p239 = scmp.lt.s32.totalorder %s13, 3
    %p240 = pnand %p238, %p239
    %p241 = pneg %p240
    // Predicated region
    $region33: #{_lambda_.7} parent=5 // pred_check
      _
    $region34: #{_lambda_.7} parent=5 // pred_check_branch
      %243 = sbr.rel (%p240) target = $region36
    $region35: #{_lambda_.7} parent=5 // pred_region
      %s244 = ssub.s32 %s13, 1
      %p245 = scmp.lt.s32.totalorder %s22, 1
      %s246 = scalar_select %p245, %s22, 1
      %p247 = scmp.lt.s32.totalorder %s23, 0
      %s248 = scalar_select %p247, %s23, 0
      %s249 = sadd.s32 %s248, %s246
      %s250 = smul.addr %s249, 8
      %s251 = scalar_lea.vmem %s0, %s250
      %p252 = pneg %p53
      %p253 = pneg %p50
      %p254 = pneg %p74
      %p255 = pneg %p71
      %p256 = pneg %p95
      %p257 = pneg %p92
      %p258 = pneg %p116
      %p259 = pneg %p113
      %p260 = pneg %p144
      %p261 = pneg %p141
      %p262 = scmp.lt.s32.totalorder %s22, 1
      %s263 = scalar_select %p262, %s22, 1
      %p264 = scmp.lt.s32.totalorder %s23, 0
      %s265 = scalar_select %p264, %s23, 0
      %s266 = smul.addr %s263, 4
      %s267 = sadd.s32 %s265, %s266
      %s268 = smul.addr %s267, 4
      %s269 = scalar_lea.vmem %s4, %s268
      %p270 = pneg %p172
      %p271 = pneg %p169
      %p272 = scmp.lt.s32.totalorder %s22, 1
      %s273 = scalar_select %p272, %s22, 1
      %p274 = scmp.lt.s32.totalorder %s23, 0
      %s275 = scalar_select %p274, %s23, 0
      %s276 = smul.addr %s273, 4
      %s277 = sadd.s32 %s275, %s276
      %s278 = smul.addr %s277, 4
      %s279 = scalar_lea.vmem %s5, %s278
      %p280 = pneg %p200
      %p281 = pneg %p197
      %p282 = scmp.lt.s32.totalorder %s22, 1
      %s283 = scalar_select %p282, %s22, 1
      %p284 = scmp.lt.s32.totalorder %s23, 0
      %s285 = scalar_select %p284, %s23, 0
      %s286 = smul.addr %s283, 4
      %s287 = sadd.s32 %s285, %s286
      %s288 = smul.addr %s287, 4
      %s289 = scalar_lea.vmem %s6, %s288
      %p290 = scmp.lt.s32.totalorder %s22, 1
      %s291 = scalar_select %p290, %s22, 1
      %p292 = scmp.lt.s32.totalorder %s23, 0
      %s293 = scalar_select %p292, %s23, 0
      %s294 = sadd.s32 %s293, %s291
      %s295 = smul.addr %s294, 8
      %s296 = scalar_lea.vmem %s0, %s295
      %p297 = scmp.lt.s32.totalorder %s22, 1
      %s298 = scalar_select %p297, %s22, 1
      %p299 = scmp.lt.s32.totalorder %s23, 0
      %s300 = scalar_select %p299, %s23, 0
      %s301 = smul.addr %s298, 4
      %s302 = sadd.s32 %s300, %s301
      %s303 = smul.addr %s302, 4
      %s304 = scalar_lea.vmem %s4, %s303
      %p305 = scmp.lt.s32.totalorder %s22, 1
      %s306 = scalar_select %p305, %s22, 1
      %p307 = scmp.lt.s32.totalorder %s23, 0
      %s308 = scalar_select %p307, %s23, 0
      %s309 = smul.addr %s306, 4
      %s310 = sadd.s32 %s308, %s309
      %s311 = smul.addr %s310, 4
      %s312 = scalar_lea.vmem %s5, %s311
      %p313 = scmp.lt.s32.totalorder %s22, 1
      %s314 = scalar_select %p313, %s22, 1
      %p315 = scmp.lt.s32.totalorder %s23, 0
      %s316 = scalar_select %p315, %s23, 0
      %s317 = smul.addr %s314, 4
      %s318 = sadd.s32 %s316, %s317
      %s319 = smul.addr %s318, 4
      %s320 = scalar_lea.vmem %s6, %s319
      %v322 = vld [vmem:[%s296] sm:$0xff]
      %v323 = vld [vmem:[%s1] sm:$0x1]
      %v324 = vld [vmem:[%s2] sm:$0x1]
      %vm325 = vcmask 261120
      %v326 = vsel %vm325, %v322, 0.0
      %327 = vadd.xlane.f32.xlu0 %v326
      %v328 = vpop.xlane.xlu0 %327
      %v329 = vrcp.pop 32.0
      %v330 = vmul.f32 %v328, %v329
      %v331 = vsub.f32 %v322, %v330
      %v332 = vmul.f32 %v331, %v331
      %v333 = vsel %vm325, %v332, 0.0
      %334 = vadd.xlane.f32.xlu0 %v333
      %v335 = vpop.xlane.xlu0 %334
      %v336 = vmul.f32 %v335, %v329
      %v337 = vadd.f32 %v336, 1e-05
      %v338 = vrsqrt.pop %v337
      %v339 = vmul.f32 %v331, %v338
      %v341 = vlaneseq
      %v342 = vshrl.u32 %v341, 7
      %v343 = vsub.s32 0, %v342
      %v344 = vrot.slane %v323, %v343
      %v346 = vmul.f32 %v339, %v344
      %v348 = vlaneseq
      %v349 = vshrl.u32 %v348, 7
      %v350 = vsub.s32 0, %v349
      %v351 = vrot.slane %v324, %v350
      %v353 = vadd.f32 %v346, %v351
      %v354 = vpack.c.bf16 %v353, %v353
      %v355 = vld [vmem:[%s3] sm:$0xf]
      %v356 = vld [vmem:[%s3 + $0x4] sm:$0xf]
      %v357 = vld [vmem:[%s3 + $0x8] sm:$0xf]
      %v358 = vld [vmem:[%s3 + $0xc] sm:$0xf]
      %v363 = vunpack.c.l.b16 %v355
      %v364 = vunpack.c.l.b16 %v356
      %v365 = vunpack.c.l.b16 %v357
      %v366 = vunpack.c.l.b16 %v358
      %v367 = vpack.c.b16 %v364, %v363
      %v368 = vpack.c.b16 %v366, %v365
      %v372 = vsel %vm325, %v354, 0
      %374 = vmatprep.subr.bf16.mxu0 0
      %375 = vmatpush1.bf16.msra.mxu0 %v367
      %376 = vmatprep.subr.bf16.mxu0 0
      %377 = vmatpush1.bf16.msra.mxu0 %v368
      %378 = vmatprep.subr.bf16.mxu0 0
      %379 = vmatpush1.bf16.msra.mxu0 0
      %380 = vmatprep.subr.bf16.mxu0 0
      %381 = vmatpush1.bf16.msra.mxu0 0
      %382 = vmatprep.subr.bf16.mxu0 0
      %383 = vmatpush1.bf16.msra.mxu0 0
      %384 = vmatprep.subr.bf16.mxu0 0
      %385 = vmatpush1.bf16.msra.mxu0 0
      %386 = vmatprep.subr.bf16.mxu0 0
      %387 = vmatpush1.bf16.msra.mxu0 0
      %388 = vmatprep.subr.bf16.mxu0 0
      %389 = vmatpush1.bf16.msra.mxu0 0
      %390 = vmatprep.subr.bf16.mxu0 0
      %391 = vmatpush1.bf16.msra.mxu0 0
      %392 = vmatprep.subr.bf16.mxu0 0
      %393 = vmatpush1.bf16.msra.mxu0 0
      %394 = vmatprep.subr.bf16.mxu0 0
      %395 = vmatpush1.bf16.msra.mxu0 0
      %396 = vmatprep.subr.bf16.mxu0 0
      %397 = vmatpush1.bf16.msra.mxu0 0
      %398 = vmatprep.subr.bf16.mxu0 0
      %399 = vmatpush1.bf16.msra.mxu0 0
      %400 = vmatprep.subr.bf16.mxu0 0
      %401 = vmatpush1.bf16.msra.mxu0 0
      %402 = vmatprep.subr.bf16.mxu0 0
      %403 = vmatpush1.bf16.msra.mxu0 0
      %404 = vmatprep.subr.bf16.mxu0 0
      %405 = vmatpush1.bf16.msra.mxu0 0
      %406 = vmatprep.mubr.bf16.mxu0 0
      %407 = vmatmul.mubr.bf16.gmra.mrb[0].mxu0 %v372
      %v408 = vpop.f32.mrb[0].mxu0
      %v409 = vadd.f32 0.0, %v408
      %v410 = vpop.f32.mrb[0].mxu0
      %v411 = vpop.f32.mrb[0].mxu0
      %v412 = vpop.f32.mrb[0].mxu0
      %413 = vdwg.mxu0
      %v414 = vmul.f32 %v409, 0.35355338
      %416 = vrot.lane.b32.xlu0 %v414, 120
      %v417 = vpop.permute.xlu0 %416
      %419 = vrot.lane.b32.xlu0 %v414, 112
      %v420 = vpop.permute.xlu0 %419
      %422 = vrot.lane.b32.xlu0 %v414, 104
      %v423 = vpop.permute.xlu0 %422
      %v425 = vcombine.low %v414, %v420
      %v426 = vcombine.high %v414, %v420
      %v428 = vunpack.c.l.s4 1983009808
      %v429 = vunpack.c.0.s8 %v428
      %v430 = vlaneseq
      %v431 = vshrl.u32 %v430, 7
      %v432 = vsub.s32 %v429, %v431
      %v433 = vrot.slane %v425, %v432
      %v435 = vunpack.c.l.s4 1983009808
      %v436 = vunpack.c.0.s8 %v435
      %v437 = vlaneseq
      %v438 = vshrl.u32 %v437, 7
      %v439 = vsub.s32 %v436, %v438
      %v440 = vrot.slane %v426, %v439
      %v441 = vcombine.low %v417, %v423
      %v442 = vcombine.high %v417, %v423
      %v444 = vunpack.c.l.s4 1983009808
      %v445 = vunpack.c.0.s8 %v444
      %v446 = vlaneseq
      %v447 = vshrl.u32 %v446, 7
      %v448 = vsub.s32 %v445, %v447
      %v449 = vrot.slane %v441, %v448
      %v451 = vunpack.c.l.s4 1983009808
      %v452 = vunpack.c.0.s8 %v451
      %v453 = vlaneseq
      %v454 = vshrl.u32 %v453, 7
      %v455 = vsub.s32 %v452, %v454
      %v456 = vrot.slane %v442, %v455
      %v457 = vcombine.low %v433, %v449
      %v458 = vcombine.high %v433, %v449
      %v460 = vunpack.c.l.s4 1934713408
      %v461 = vunpack.c.0.s8 %v460
      %v462 = vlaneseq
      %v463 = vshrl.u32 %v462, 7
      %v464 = vsub.s32 %v461, %v463
      %v465 = vrot.slane %v457, %v464
      %v467 = vunpack.c.l.s4 1934713408
      %v468 = vunpack.c.0.s8 %v467
      %v469 = vlaneseq
      %v470 = vshrl.u32 %v469, 7
      %v471 = vsub.s32 %v468, %v470
      %v472 = vrot.slane %v458, %v471
      %v473 = vcombine.low %v440, %v456
      %v474 = vcombine.high %v440, %v456
      %v476 = vunpack.c.l.s4 1934713408
      %v477 = vunpack.c.0.s8 %v476
      %v478 = vlaneseq
      %v479 = vshrl.u32 %v478, 7
      %v480 = vsub.s32 %v477, %v479
      %v481 = vrot.slane %v473, %v480
      %v483 = vunpack.c.l.s4 1934713408
      %v484 = vunpack.c.0.s8 %v483
      %v485 = vlaneseq
      %v486 = vshrl.u32 %v485, 7
      %v487 = vsub.s32 %v484, %v486
      %v488 = vrot.slane %v474, %v487
      %v489 = vcombine.high %v465, 0.0
      %v490 = vcombine.high %v472, 0.0
      %v491 = vcombine.high %v481, 0.0
      %v492 = vcombine.high %v488, 0.0
      %v493 = vcombine.low %v465, %v472
      %v495 = vunpack.c.l.s4 1983009808
      %v496 = vunpack.c.0.s8 %v495
      %v497 = vlaneseq
      %v498 = vshrl.u32 %v497, 7
      %v499 = vsub.s32 %v496, %v498
      %v500 = vrot.slane %v493, %v499
      %v501 = vcombine.low %v489, %v490
      %v503 = vunpack.c.l.s4 1983009808
      %v504 = vunpack.c.0.s8 %v503
      %v505 = vlaneseq
      %v506 = vshrl.u32 %v505, 7
      %v507 = vsub.s32 %v504, %v506
      %v508 = vrot.slane %v501, %v507
      %v509 = vcombine.low %v481, %v488
      %v511 = vunpack.c.l.s4 1983009808
      %v512 = vunpack.c.0.s8 %v511
      %v513 = vlaneseq
      %v514 = vshrl.u32 %v513, 7
      %v515 = vsub.s32 %v512, %v514
      %v516 = vrot.slane %v509, %v515
      %v517 = vcombine.low %v491, %v492
      %v519 = vunpack.c.l.s4 1983009808
      %v520 = vunpack.c.0.s8 %v519
      %v521 = vlaneseq
      %v522 = vshrl.u32 %v521, 7
      %v523 = vsub.s32 %v520, %v522
      %v524 = vrot.slane %v517, %v523
      %v525 = vcombine.low %v500, %v508
      %v526 = vcombine.high %v500, %v508
      %v528 = vunpack.c.l.s4 1934713408
      %v529 = vunpack.c.0.s8 %v528
      %v530 = vlaneseq
      %v531 = vshrl.u32 %v530, 7
      %v532 = vsub.s32 %v529, %v531
      %v533 = vrot.slane %v525, %v532
      %v535 = vunpack.c.l.s4 1934713408
      %v536 = vunpack.c.0.s8 %v535
      %v537 = vlaneseq
      %v538 = vshrl.u32 %v537, 7
      %v539 = vsub.s32 %v536, %v538
      %v540 = vrot.slane %v526, %v539
      %v541 = vcombine.low %v516, %v524
      %v542 = vcombine.high %v516, %v524
      %v544 = vunpack.c.l.s4 1934713408
      %v545 = vunpack.c.0.s8 %v544
      %v546 = vlaneseq
      %v547 = vshrl.u32 %v546, 7
      %v548 = vsub.s32 %v545, %v547
      %v549 = vrot.slane %v541, %v548
      %v551 = vunpack.c.l.s4 1934713408
      %v552 = vunpack.c.0.s8 %v551
      %v553 = vlaneseq
      %v554 = vshrl.u32 %v553, 7
      %v555 = vsub.s32 %v552, %v554
      %v556 = vrot.slane %v542, %v555
      %v557 = vcombine.low %v533, %v549
      %v558 = vcombine.high %v533, %v549
      %v559 = vcombine.low %v540, %v556
      %v560 = vcombine.high %v540, %v556
      %v561 = vpack.c.bf16 %v557, %v557
      %v562 = vpack.c.bf16 %v558, %v558
      %v563 = vpack.c.bf16 %v559, %v559
      %v564 = vpack.c.bf16 %v560, %v560
      %vm565 = vcmask 60416
      %566 = vst.msk [vmem:[%s304] sm:$0xf] %vm565, %v561
      %567 = vst.msk [vmem:[%s304 + $0x4] sm:$0xf] %vm565, %v562
      %568 = vst.msk [vmem:[%s304 + $0x8] sm:$0xf] %vm565, %v563
      %569 = vst.msk [vmem:[%s304 + $0xc] sm:$0xf] %vm565, %v564
      %571 = vrot.lane.b32.xlu0 %v409, 120
      %v572 = vpop.permute.xlu0 %571
      %573 = vrot.lane.b32.xlu0 %v409, 112
      %v574 = vpop.permute.xlu0 %573
      %575 = vrot.lane.b32.xlu0 %v409, 104
      %v576 = vpop.permute.xlu0 %575
      %577 = vrot.lane.b32.xlu0 %v409, 96
      %v578 = vpop.permute.xlu0 %577
      %579 = vrot.lane.b32.xlu0 %v572, 96
      %v580 = vpop.permute.xlu0 %579
      %581 = vrot.lane.b32.xlu0 %v574, 96
      %v582 = vpop.permute.xlu0 %581
      %583 = vrot.lane.b32.xlu0 %v576, 96
      %v584 = vpop.permute.xlu0 %583
      %v589 = vcombine.low %v578, %v582
      %v590 = vcombine.high %v578, %v582
      %v592 = vunpack.c.l.s4 1983009808
      %v593 = vunpack.c.0.s8 %v592
      %v594 = vlaneseq
      %v595 = vshrl.u32 %v594, 7
      %v596 = vsub.s32 %v593, %v595
      %v597 = vrot.slane %v589, %v596
      %v599 = vunpack.c.l.s4 1983009808
      %v600 = vunpack.c.0.s8 %v599
      %v601 = vlaneseq
      %v602 = vshrl.u32 %v601, 7
      %v603 = vsub.s32 %v600, %v602
      %v604 = vrot.slane %v590, %v603
      %v605 = vcombine.low %v580, %v584
      %v606 = vcombine.high %v580, %v584
      %v608 = vunpack.c.l.s4 1983009808
      %v609 = vunpack.c.0.s8 %v608
      %v610 = vlaneseq
      %v611 = vshrl.u32 %v610, 7
      %v612 = vsub.s32 %v609, %v611
      %v613 = vrot.slane %v605, %v612
      %v615 = vunpack.c.l.s4 1983009808
      %v616 = vunpack.c.0.s8 %v615
      %v617 = vlaneseq
      %v618 = vshrl.u32 %v617, 7
      %v619 = vsub.s32 %v616, %v618
      %v620 = vrot.slane %v606, %v619
      %v621 = vcombine.low %v597, %v613
      %v622 = vcombine.high %v597, %v613
      %v624 = vunpack.c.l.s4 1934713408
      %v625 = vunpack.c.0.s8 %v624
      %v626 = vlaneseq
      %v627 = vshrl.u32 %v626, 7
      %v628 = vsub.s32 %v625, %v627
      %v629 = vrot.slane %v621, %v628
      %v631 = vunpack.c.l.s4 1934713408
      %v632 = vunpack.c.0.s8 %v631
      %v633 = vlaneseq
      %v634 = vshrl.u32 %v633, 7
      %v635 = vsub.s32 %v632, %v634
      %v636 = vrot.slane %v622, %v635
      %v637 = vcombine.low %v604, %v620
      %v638 = vcombine.high %v604, %v620
      %v640 = vunpack.c.l.s4 1934713408
      %v641 = vunpack.c.0.s8 %v640
      %v642 = vlaneseq
      %v643 = vshrl.u32 %v642, 7
      %v644 = vsub.s32 %v641, %v643
      %v645 = vrot.slane %v637, %v644
      %v647 = vunpack.c.l.s4 1934713408
      %v648 = vunpack.c.0.s8 %v647
      %v649 = vlaneseq
      %v650 = vshrl.u32 %v649, 7
      %v651 = vsub.s32 %v648, %v650
      %v652 = vrot.slane %v638, %v651
      %v653 = vcombine.high %v629, 0.0
      %v654 = vcombine.high %v636, 0.0
      %v655 = vcombine.high %v645, 0.0
      %v656 = vcombine.high %v652, 0.0
      %v657 = vcombine.low %v629, %v636
      %v659 = vunpack.c.l.s4 1983009808
      %v660 = vunpack.c.0.s8 %v659
      %v661 = vlaneseq
      %v662 = vshrl.u32 %v661, 7
      %v663 = vsub.s32 %v660, %v662
      %v664 = vrot.slane %v657, %v663
      %v665 = vcombine.low %v653, %v654
      %v667 = vunpack.c.l.s4 1983009808
      %v668 = vunpack.c.0.s8 %v667
      %v669 = vlaneseq
      %v670 = vshrl.u32 %v669, 7
      %v671 = vsub.s32 %v668, %v670
      %v672 = vrot.slane %v665, %v671
      %v673 = vcombine.low %v645, %v652
      %v675 = vunpack.c.l.s4 1983009808
      %v676 = vunpack.c.0.s8 %v675
      %v677 = vlaneseq
      %v678 = vshrl.u32 %v677, 7
      %v679 = vsub.s32 %v676, %v678
      %v680 = vrot.slane %v673, %v679
      %v681 = vcombine.low %v655, %v656
      %v683 = vunpack.c.l.s4 1983009808
      %v684 = vunpack.c.0.s8 %v683
      %v685 = vlaneseq
      %v686 = vshrl.u32 %v685, 7
      %v687 = vsub.s32 %v684, %v686
      %v688 = vrot.slane %v681, %v687
      %v689 = vcombine.low %v664, %v672
      %v690 = vcombine.high %v664, %v672
      %v692 = vunpack.c.l.s4 1934713408
      %v693 = vunpack.c.0.s8 %v692
      %v694 = vlaneseq
      %v695 = vshrl.u32 %v694, 7
      %v696 = vsub.s32 %v693, %v695
      %v697 = vrot.slane %v689, %v696
      %v699 = vunpack.c.l.s4 1934713408
      %v700 = vunpack.c.0.s8 %v699
      %v701 = vlaneseq
      %v702 = vshrl.u32 %v701, 7
      %v703 = vsub.s32 %v700, %v702
      %v704 = vrot.slane %v690, %v703
      %v705 = vcombine.low %v680, %v688
      %v706 = vcombine.high %v680, %v688
      %v708 = vunpack.c.l.s4 1934713408
      %v709 = vunpack.c.0.s8 %v708
      %v710 = vlaneseq
      %v711 = vshrl.u32 %v710, 7
      %v712 = vsub.s32 %v709, %v711
      %v713 = vrot.slane %v705, %v712
      %v715 = vunpack.c.l.s4 1934713408
      %v716 = vunpack.c.0.s8 %v715
      %v717 = vlaneseq
      %v718 = vshrl.u32 %v717, 7
      %v719 = vsub.s32 %v716, %v718
      %v720 = vrot.slane %v706, %v719
      %v721 = vcombine.low %v697, %v713
      %v722 = vcombine.high %v697, %v713
      %v723 = vcombine.low %v704, %v720
      %v724 = vcombine.high %v704, %v720
      %v725 = vpack.c.bf16 %v721, %v721
      %v726 = vpack.c.bf16 %v722, %v722
      %v727 = vpack.c.bf16 %v723, %v723
      %v728 = vpack.c.bf16 %v724, %v724
      %729 = vst.msk [vmem:[%s312] sm:$0xf] %vm565, %v725
      %730 = vst.msk [vmem:[%s312 + $0x4] sm:$0xf] %vm565, %v726
      %731 = vst.msk [vmem:[%s312 + $0x8] sm:$0xf] %vm565, %v727
      %732 = vst.msk [vmem:[%s312 + $0xc] sm:$0xf] %vm565, %v728
      %733 = vrot.lane.b32.xlu0 %v409, 64
      %v734 = vpop.permute.xlu0 %733
      %735 = vrot.lane.b32.xlu0 %v572, 64
      %v736 = vpop.permute.xlu0 %735
      %737 = vrot.lane.b32.xlu0 %v574, 64
      %v738 = vpop.permute.xlu0 %737
      %739 = vrot.lane.b32.xlu0 %v576, 64
      %v740 = vpop.permute.xlu0 %739
      %v745 = vcombine.low %v734, %v738
      %v746 = vcombine.high %v734, %v738
      %v748 = vunpack.c.l.s4 1983009808
      %v749 = vunpack.c.0.s8 %v748
      %v750 = vlaneseq
      %v751 = vshrl.u32 %v750, 7
      %v752 = vsub.s32 %v749, %v751
      %v753 = vrot.slane %v745, %v752
      %v755 = vunpack.c.l.s4 1983009808
      %v756 = vunpack.c.0.s8 %v755
      %v757 = vlaneseq
      %v758 = vshrl.u32 %v757, 7
      %v759 = vsub.s32 %v756, %v758
      %v760 = vrot.slane %v746, %v759
      %v761 = vcombine.low %v736, %v740
      %v762 = vcombine.high %v736, %v740
      %v764 = vunpack.c.l.s4 1983009808
      %v765 = vunpack.c.0.s8 %v764
      %v766 = vlaneseq
      %v767 = vshrl.u32 %v766, 7
      %v768 = vsub.s32 %v765, %v767
      %v769 = vrot.slane %v761, %v768
      %v771 = vunpack.c.l.s4 1983009808
      %v772 = vunpack.c.0.s8 %v771
      %v773 = vlaneseq
      %v774 = vshrl.u32 %v773, 7
      %v775 = vsub.s32 %v772, %v774
      %v776 = vrot.slane %v762, %v775
      %v777 = vcombine.low %v753, %v769
      %v778 = vcombine.high %v753, %v769
      %v780 = vunpack.c.l.s4 1934713408
      %v781 = vunpack.c.0.s8 %v780
      %v782 = vlaneseq
      %v783 = vshrl.u32 %v782, 7
      %v784 = vsub.s32 %v781, %v783
      %v785 = vrot.slane %v777, %v784
      %v787 = vunpack.c.l.s4 1934713408
      %v788 = vunpack.c.0.s8 %v787
      %v789 = vlaneseq
      %v790 = vshrl.u32 %v789, 7
      %v791 = vsub.s32 %v788, %v790
      %v792 = vrot.slane %v778, %v791
      %v793 = vcombine.low %v760, %v776
      %v794 = vcombine.high %v760, %v776
      %v796 = vunpack.c.l.s4 1934713408
      %v797 = vunpack.c.0.s8 %v796
      %v798 = vlaneseq
      %v799 = vshrl.u32 %v798, 7
      %v800 = vsub.s32 %v797, %v799
      %v801 = vrot.slane %v793, %v800
      %v803 = vunpack.c.l.s4 1934713408
      %v804 = vunpack.c.0.s8 %v803
      %v805 = vlaneseq
      %v806 = vshrl.u32 %v805, 7
      %v807 = vsub.s32 %v804, %v806
      %v808 = vrot.slane %v794, %v807
      %v809 = vcombine.high %v785, 0.0
      %v810 = vcombine.high %v792, 0.0
      %v811 = vcombine.high %v801, 0.0
      %v812 = vcombine.high %v808, 0.0
      %v813 = vcombine.low %v785, %v792
      %v815 = vunpack.c.l.s4 1983009808
      %v816 = vunpack.c.0.s8 %v815
      %v817 = vlaneseq
      %v818 = vshrl.u32 %v817, 7
      %v819 = vsub.s32 %v816, %v818
      %v820 = vrot.slane %v813, %v819
      %v821 = vcombine.low %v809, %v810
      %v823 = vunpack.c.l.s4 1983009808
      %v824 = vunpack.c.0.s8 %v823
      %v825 = vlaneseq
      %v826 = vshrl.u32 %v825, 7
      %v827 = vsub.s32 %v824, %v826
      %v828 = vrot.slane %v821, %v827
      %v829 = vcombine.low %v801, %v808
      %v831 = vunpack.c.l.s4 1983009808
      %v832 = vunpack.c.0.s8 %v831
      %v833 = vlaneseq
      %v834 = vshrl.u32 %v833, 7
      %v835 = vsub.s32 %v832, %v834
      %v836 = vrot.slane %v829, %v835
      %v837 = vcombine.low %v811, %v812
      %v839 = vunpack.c.l.s4 1983009808
      %v840 = vunpack.c.0.s8 %v839
      %v841 = vlaneseq
      %v842 = vshrl.u32 %v841, 7
      %v843 = vsub.s32 %v840, %v842
      %v844 = vrot.slane %v837, %v843
      %v845 = vcombine.low %v820, %v828
      %v846 = vcombine.high %v820, %v828
      %v848 = vunpack.c.l.s4 1934713408
      %v849 = vunpack.c.0.s8 %v848
      %v850 = vlaneseq
      %v851 = vshrl.u32 %v850, 7
      %v852 = vsub.s32 %v849, %v851
      %v853 = vrot.slane %v845, %v852
      %v855 = vunpack.c.l.s4 1934713408
      %v856 = vunpack.c.0.s8 %v855
      %v857 = vlaneseq
      %v858 = vshrl.u32 %v857, 7
      %v859 = vsub.s32 %v856, %v858
      %v860 = vrot.slane %v846, %v859
      %v861 = vcombine.low %v836, %v844
      %v862 = vcombine.high %v836, %v844
      %v864 = vunpack.c.l.s4 1934713408
      %v865 = vunpack.c.0.s8 %v864
      %v866 = vlaneseq
      %v867 = vshrl.u32 %v866, 7
      %v868 = vsub.s32 %v865, %v867
      %v869 = vrot.slane %v861, %v868
      %v871 = vunpack.c.l.s4 1934713408
      %v872 = vunpack.c.0.s8 %v871
      %v873 = vlaneseq
      %v874 = vshrl.u32 %v873, 7
      %v875 = vsub.s32 %v872, %v874
      %v876 = vrot.slane %v862, %v875
      %v877 = vcombine.low %v853, %v869
      %v878 = vcombine.high %v853, %v869
      %v879 = vcombine.low %v860, %v876
      %v880 = vcombine.high %v860, %v876
      %v881 = vpack.c.bf16 %v877, %v877
      %v882 = vpack.c.bf16 %v878, %v878
      %v883 = vpack.c.bf16 %v879, %v879
      %v884 = vpack.c.bf16 %v880, %v880
      %885 = vst.msk [vmem:[%s320] sm:$0xf] %vm565, %v881
      %886 = vst.msk [vmem:[%s320 + $0x4] sm:$0xf] %vm565, %v882
      %887 = vst.msk [vmem:[%s320 + $0x8] sm:$0xf] %vm565, %v883
      %888 = vst.msk [vmem:[%s320 + $0xc] sm:$0xf] %vm565, %v884
      %p889 = scmp.lt.s32.totalorder %s22, 1
      %s890 = scalar_select %p889, %s22, 1
      %p891 = scmp.lt.s32.totalorder %s23, 0
      %s892 = scalar_select %p891, %s23, 0
      %s893 = smul.addr %s890, 4
      %s894 = sadd.s32 %s892, %s893
      %s895 = smul.addr %s894, 4
      %s896 = scalar_lea.vmem %s4, %s895
      %p897 = scmp.lt.s32.totalorder %s22, 1
      %s898 = scalar_select %p897, %s22, 1
      %p899 = scmp.lt.s32.totalorder %s23, 0
      %s900 = scalar_select %p899, %s23, 0
      %s901 = smul.addr %s898, 4
      %s902 = sadd.s32 %s900, %s901
      %s903 = smul.addr %s902, 4
      %s904 = scalar_lea.vmem %s5, %s903
      %p905 = scmp.lt.s32.totalorder %s22, 1
      %s906 = scalar_select %p905, %s22, 1
      %p907 = scmp.lt.s32.totalorder %s23, 0
      %s908 = scalar_select %p907, %s23, 0
      %s909 = smul.addr %s906, 4
      %s910 = sadd.s32 %s908, %s909
      %s911 = smul.addr %s910, 4
      %s912 = scalar_lea.vmem %s6, %s911
      // Predicated region
      $region37: #{_lambda_.7} parent=35 // pred_check
        %p913 = pneg %p141
      $region38: #{_lambda_.7} parent=35 // pred_check_branch
        %915 = sbr.rel (%p913) target = $region40
      $region39: #{_lambda_.7} parent=35 // pred_region
        _
      $region40: #{_lambda_.7} parent=35 // pred_fallthru
        _
      // Predicated region
      $region41: #{_lambda_.7} parent=35 // pred_check
        %p916 = pneg %p169
      $region42: #{_lambda_.7} parent=35 // pred_check_branch
        %918 = sbr.rel (%p916) target = $region44
      $region43: #{_lambda_.7} parent=35 // pred_region
        _
      $region44: #{_lambda_.7} parent=35 // pred_fallthru
        _
      // Predicated region
      $region45: #{_lambda_.7} parent=35 // pred_check
        %p919 = pneg %p197
      $region46: #{_lambda_.7} parent=35 // pred_check_branch
        %921 = sbr.rel (%p919) target = $region48
      $region47: #{_lambda_.7} parent=35 // pred_region
        _
      $region48: #{_lambda_.7} parent=35 // pred_fallthru
        _
    $region36: #{_lambda_.7} parent=5 // pred_fallthru
      _
    %p922 = scmp.le.s32.totalorder 2, %s13
    // Predicated region
    $region49: #{_lambda_.7} parent=5 // pred_check
      %p923 = pneg %p922
    $region50: #{_lambda_.7} parent=5 // pred_check_branch
      %925 = sbr.rel (%p923) target = $region52
    $region51: #{_lambda_.7} parent=5 // pred_region
      %s926 = ssub.s32 %s13, 2
      // Predicated region
      $region53: #{_lambda_.7} parent=51 // pred_check
        %p927 = pneg %p147
      $region54: #{_lambda_.7} parent=51 // pred_check_branch
        %929 = sbr.rel (%p927) target = $region56
      $region55: #{_lambda_.7} parent=51 // pred_region
        %p930 = scmp.lt.s32.totalorder %s24, 1
        %s931 = scalar_select %p930, %s24, 1
        %p932 = scmp.lt.s32.totalorder %s25, 0
        %s933 = scalar_select %p932, %s25, 0
        %s934 = smul.addr %s931, 4
        %s935 = sadd.s32 %s933, %s934
        %s936 = smul.addr %s935, 4
        %s937 = scalar_lea.vmem %s4, %s936
      $region56: #{_lambda_.7} parent=51 // pred_fallthru
        _
      // Predicated region
      $region57: #{_lambda_.7} parent=51 // pred_check
        %p938 = pneg %p175
      $region58: #{_lambda_.7} parent=51 // pred_check_branch
        %940 = sbr.rel (%p938) target = $region60
      $region59: #{_lambda_.7} parent=51 // pred_region
        %p941 = scmp.lt.s32.totalorder %s24, 1
        %s942 = scalar_select %p941, %s24, 1
        %p943 = scmp.lt.s32.totalorder %s25, 0
        %s944 = scalar_select %p943, %s25, 0
        %s945 = smul.addr %s942, 4
        %s946 = sadd.s32 %s944, %s945
        %s947 = smul.addr %s946, 4
        %s948 = scalar_lea.vmem %s5, %s947
      $region60: #{_lambda_.7} parent=51 // pred_fallthru
        _
      // Predicated region
      $region61: #{_lambda_.7} parent=51 // pred_check
        %p949 = pneg %p203
      $region62: #{_lambda_.7} parent=51 // pred_check_branch
        %951 = sbr.rel (%p949) target = $region64
      $region63: #{_lambda_.7} parent=51 // pred_region
        %p952 = scmp.lt.s32.totalorder %s24, 1
        %s953 = scalar_select %p952, %s24, 1
        %p954 = scmp.lt.s32.totalorder %s25, 0
        %s955 = scalar_select %p954, %s25, 0
        %s956 = smul.addr %s953, 4
        %s957 = sadd.s32 %s955, %s956
        %s958 = smul.addr %s957, 4
        %s959 = scalar_lea.vmem %s6, %s958
      $region64: #{_lambda_.7} parent=51 // pred_fallthru
        _
    $region52: #{_lambda_.7} parent=5 // pred_fallthru
      _
  $region6: #{_lambda_.7} parent=0 // loop_footer
    %s17 = sadd.s32 1, %s13
  $region7: #{_lambda_.7} parent=0 // loop_footer_branch
    %12 = sbr.rel target = $region3
  $region8: #{_lambda_.7} parent=0 // loop_exit
    _

// kernel: _lambda_.8
$region0: #{_lambda_.8}
  #allocation0 [shape = 'u32[]', space=smem, size = 0x4, offset = 0x4, fixed_abs, tag = 'smem constant byte address 0x4 - core index']
  #allocation1 [shape = 'u32[144,128]{1,0:T(1,128)}', space=vmem, size = 0x12000, scoped, tag = 'internal scratch']
  #allocation2 [shape = 'f32[4,8,1]{2,1,0:T(8,128)}', space=vmem, size = 0x4000, scoped, tag = 'scratch operand']
  #allocation3 [shape = 'f32[4,8,1]{2,1,0:T(8,128)}', space=vmem, size = 0x4000, scoped, tag = 'scratch operand']
  #allocation4 [shape = 'f32[4,8,8]{2,1,0:T(8,128)}', space=vmem, size = 0x4000, scoped, tag = 'scratch operand']
  %s0 = inlined_call_operand.vmem [shape: bf16[2,4,8,8], index: 0, kind: input, shape index: {}]
  %s1 = inlined_call_operand.vmem [shape: bf16[2,4,8,8], index: 1, kind: input, shape index: {}]
  %s2 = inlined_call_operand.vmem [shape: bf16[2,4,8,8], index: 2, kind: input, shape index: {}]
  %s3 = inlined_call_operand.vmem [shape: bf16[2,8,32], index: 3, kind: output, shape index: {}]
  %s4 = sld [smem:[#allocation0]]
  $region57: #{_lambda_.8} parent=0
    _
  %s6 = ssub.s32 1, %s4
  %s7 = scalar_select 0, %s6, %s4
  loop: start=0, step=1, limit=4
  $region2: #{_lambda_.8} parent=0 // loop_pre_header
    _
  $region3: #{_lambda_.8} parent=0 // loop_header
    %s9 = sphi 0, %s13
    %p10 = scmp.ge.s32.totalorder %s9, 4
    %s16 = sphi 0, %s35
    %s17 = sphi 0, %s31
    %s18 = sphi 0, %s27
    %s19 = sphi 0, %s16
    %s20 = sphi 0, %s17
    %s21 = sphi 0, %s18
    %s22 = sphi 0, %s19
    %s23 = sphi 0, %s20
    %s24 = sphi 0, %s21
    %s40 = sphi 0, %s42
    %s43 = sphi 0, %s40
    %s44 = sphi 0, %s43
    %s60 = sphi 0, %s44
    %s68 = sphi 0, %s70
    %s71 = sphi 0, %s68
    %s72 = sphi 0, %s71
    %s88 = sphi 0, %s72
    %s96 = sphi 0, %s98
    %s99 = sphi 0, %s96
    %s100 = sphi 0, %s99
    %s116 = sphi 0, %s100
    %s124 = sphi 0, %s126
    %s127 = sphi 0, %s124
    %s128 = sphi 0, %s127
    %s144 = sphi 0, %s128
  $region4: #{_lambda_.8} parent=0 // loop_header_branch
    %12 = sbr.rel (%p10) target = $region8
  $region5: #{_lambda_.8} parent=0 // loop_body
    %s14 = ssub.s32 %s9, 1
    %s15 = ssub.s32 %s9, 2
    %s25 = sadd.s32 1, %s18
    %p26 = scmp.ge.s32.totalorder %s25, 1
    %s27 = scalar_select %p26, 0, %s25
    %s28 = sadd.s32 1, %s17
    %s29 = scalar_select %p26, %s28, %s17
    %p30 = scmp.ge.s32.totalorder %s29, 1
    %s31 = scalar_select %p30, 0, %s29
    %s32 = sadd.s32 1, %s16
    %s33 = scalar_select %p30, %s32, %s16
    %p34 = scmp.ge.s32.totalorder %s33, 2
    %s35 = scalar_select %p34, 0, %s33
    %s36 = ssub.s32 %s16, %s35
    %s37 = ssub.s32 %s17, %s31
    %s38 = sor.u32 %s36, %s37
    %p39 = scmp.eq.s32.totalorder %s38, 0
    %s41 = sadd.s32 %s40, 1
    %s42 = scalar_select %p39, %s40, %s41
    %p45 = pneg %p39
    %p46 = scmp.eq.s32.totalorder %s9, 1
    %p47 = por %p45, %p46
    %p48 = scmp.ne.s32.totalorder %s40, %s43
    %p49 = scmp.eq.s32.totalorder %s9, 0
    %p50 = por %p48, %p49
    %p51 = scmp.ne.s32.totalorder %s40, %s43
    %p52 = scmp.eq.s32.totalorder %s14, 1
    %p53 = por %p51, %p52
    %p54 = scmp.ne.s32.totalorder %s43, %s44
    %p55 = scmp.eq.s32.totalorder %s14, 0
    %p56 = por %p54, %p55
    %p57 = scmp.ne.s32.totalorder %s43, %s44
    %p58 = scmp.eq.s32.totalorder %s15, 1
    %p59 = por %p57, %p58
    %p61 = scmp.ne.s32.totalorder %s44, %s60
    %p62 = scmp.eq.s32.totalorder %s15, 0
    %p63 = por %p61, %p62
    %s64 = ssub.s32 %s16, %s35
    %s65 = ssub.s32 %s18, %s27
    %s66 = sor.u32 %s64, %s65
    %p67 = scmp.eq.s32.totalorder %s66, 0
    %s69 = sadd.s32 %s68, 1
    %s70 = scalar_select %p67, %s68, %s69
    %p73 = pneg %p67
    %p74 = scmp.eq.s32.totalorder %s9, 1
    %p75 = por %p73, %p74
    %p76 = scmp.ne.s32.totalorder %s68, %s71
    %p77 = scmp.eq.s32.totalorder %s9, 0
    %p78 = por %p76, %p77
    %p79 = scmp.ne.s32.totalorder %s68, %s71
    %p80 = scmp.eq.s32.totalorder %s14, 1
    %p81 = por %p79, %p80
    %p82 = scmp.ne.s32.totalorder %s71, %s72
    %p83 = scmp.eq.s32.totalorder %s14, 0
    %p84 = por %p82, %p83
    %p85 = scmp.ne.s32.totalorder %s71, %s72
    %p86 = scmp.eq.s32.totalorder %s15, 1
    %p87 = por %p85, %p86
    %p89 = scmp.ne.s32.totalorder %s72, %s88
    %p90 = scmp.eq.s32.totalorder %s15, 0
    %p91 = por %p89, %p90
    %s92 = ssub.s32 %s16, %s35
    %s93 = ssub.s32 %s18, %s27
    %s94 = sor.u32 %s92, %s93
    %p95 = scmp.eq.s32.totalorder %s94, 0
    %s97 = sadd.s32 %s96, 1
    %s98 = scalar_select %p95, %s96, %s97
    %p101 = pneg %p95
    %p102 = scmp.eq.s32.totalorder %s9, 1
    %p103 = por %p101, %p102
    %p104 = scmp.ne.s32.totalorder %s96, %s99
    %p105 = scmp.eq.s32.totalorder %s9, 0
    %p106 = por %p104, %p105
    %p107 = scmp.ne.s32.totalorder %s96, %s99
    %p108 = scmp.eq.s32.totalorder %s14, 1
    %p109 = por %p107, %p108
    %p110 = scmp.ne.s32.totalorder %s99, %s100
    %p111 = scmp.eq.s32.totalorder %s14, 0
    %p112 = por %p110, %p111
    %p113 = scmp.ne.s32.totalorder %s99, %s100
    %p114 = scmp.eq.s32.totalorder %s15, 1
    %p115 = por %p113, %p114
    %p117 = scmp.ne.s32.totalorder %s100, %s116
    %p118 = scmp.eq.s32.totalorder %s15, 0
    %p119 = por %p117, %p118
    %s120 = ssub.s32 %s16, %s35
    %s121 = ssub.s32 %s17, %s31
    %s122 = sor.u32 %s120, %s121
    %p123 = scmp.eq.s32.totalorder %s122, 0
    %s125 = sadd.s32 %s124, 1
    %s126 = scalar_select %p123, %s124, %s125
    %p129 = pneg %p123
    %p130 = scmp.eq.s32.totalorder %s9, 1
    %p131 = por %p129, %p130
    %p132 = scmp.ne.s32.totalorder %s124, %s127
    %p133 = scmp.eq.s32.totalorder %s9, 0
    %p134 = por %p132, %p133
    %p135 = scmp.ne.s32.totalorder %s124, %s127
    %p136 = scmp.eq.s32.totalorder %s14, 1
    %p137 = por %p135, %p136
    %p138 = scmp.ne.s32.totalorder %s127, %s128
    %p139 = scmp.eq.s32.totalorder %s14, 0
    %p140 = por %p138, %p139
    %p141 = scmp.ne.s32.totalorder %s127, %s128
    %p142 = scmp.eq.s32.totalorder %s15, 1
    %p143 = por %p141, %p142
    %p145 = scmp.ne.s32.totalorder %s128, %s144
    %p146 = scmp.eq.s32.totalorder %s15, 0
    %p147 = por %p145, %p146
    %p148 = scmp.le.s32.totalorder 1, %s9
    %p149 = scmp.lt.s32.totalorder %s9, 3
    %p150 = pnand %p148, %p149
    %p151 = pneg %p150
    // Predicated region
    $region9: #{_lambda_.8} parent=5 // pred_check
      _
    $region10: #{_lambda_.8} parent=5 // pred_check_branch
      %153 = sbr.rel (%p150) target = $region12
    $region11: #{_lambda_.8} parent=5 // pred_region
      %s154 = ssub.s32 %s9, 1
    $region12: #{_lambda_.8} parent=5 // pred_fallthru
      _
    %p155 = scmp.lt.s32.totalorder %s9, 2
    // Predicated region
    $region13: #{_lambda_.8} parent=5 // pred_check
      %p156 = pneg %p155
    $region14: #{_lambda_.8} parent=5 // pred_check_branch
      %158 = sbr.rel (%p156) target = $region16
    $region15: #{_lambda_.8} parent=5 // pred_region
      // Predicated region
      $region17: #{_lambda_.8} parent=15 // pred_check
        %p159 = pneg %p50
      $region18: #{_lambda_.8} parent=15 // pred_check_branch
        %161 = sbr.rel (%p159) target = $region20
      $region19: #{_lambda_.8} parent=15 // pred_region
        %p162 = scmp.lt.s32.totalorder %s16, 1
        %s163 = scalar_select %p162, %s16, 1
        %p164 = scmp.lt.s32.totalorder %s17, 0
        %s165 = scalar_select %p164, %s17, 0
        %s166 = smul.addr %s163, 4
        %s167 = sadd.s32 %s165, %s166
        %s168 = smul.addr %s167, 4
        %s169 = scalar_lea.vmem %s0, %s168
      $region20: #{_lambda_.8} parent=15 // pred_fallthru
        _
      // Predicated region
      $region21: #{_lambda_.8} parent=15 // pred_check
        %p170 = pneg %p78
      $region22: #{_lambda_.8} parent=15 // pred_check_branch
        %172 = sbr.rel (%p170) target = $region24
      $region23: #{_lambda_.8} parent=15 // pred_region
        %p173 = scmp.lt.s32.totalorder %s16, 1
        %s174 = scalar_select %p173, %s16, 1
        %p175 = scmp.lt.s32.totalorder %s18, 0
        %s176 = scalar_select %p175, %s18, 0
        %s177 = smul.addr %s174, 4
        %s178 = sadd.s32 %s176, %s177
        %s179 = smul.addr %s178, 4
        %s180 = scalar_lea.vmem %s1, %s179
      $region24: #{_lambda_.8} parent=15 // pred_fallthru
        _
      // Predicated region
      $region25: #{_lambda_.8} parent=15 // pred_check
        %p181 = pneg %p106
      $region26: #{_lambda_.8} parent=15 // pred_check_branch
        %183 = sbr.rel (%p181) target = $region28
      $region27: #{_lambda_.8} parent=15 // pred_region
        %p184 = scmp.lt.s32.totalorder %s16, 1
        %s185 = scalar_select %p184, %s16, 1
        %p186 = scmp.lt.s32.totalorder %s18, 0
        %s187 = scalar_select %p186, %s18, 0
        %s188 = smul.addr %s185, 4
        %s189 = sadd.s32 %s187, %s188
        %s190 = smul.addr %s189, 4
        %s191 = scalar_lea.vmem %s2, %s190
      $region28: #{_lambda_.8} parent=15 // pred_fallthru
        _
    $region16: #{_lambda_.8} parent=5 // pred_fallthru
      _
    %p192 = scmp.le.s32.totalorder 1, %s9
    %p193 = scmp.lt.s32.totalorder %s9, 3
    %p194 = pnand %p192, %p193
    %p195 = pneg %p194
    // Predicated region
    $region29: #{_lambda_.8} parent=5 // pred_check
      _
    $region30: #{_lambda_.8} parent=5 // pred_check_branch
      %197 = sbr.rel (%p194) target = $region32
    $region31: #{_lambda_.8} parent=5 // pred_region
      %s198 = ssub.s32 %s9, 1
      %p199 = scmp.lt.s32.totalorder %s19, 1
      %s200 = scalar_select %p199, %s19, 1
      %p201 = scmp.lt.s32.totalorder %s20, 0
      %s202 = scalar_select %p201, %s20, 0
      %s203 = smul.addr %s200, 4
      %s204 = sadd.s32 %s202, %s203
      %s205 = smul.addr %s204, 4
      %s206 = scalar_lea.vmem %s0, %s205
      %p207 = pneg %p56
      %p208 = pneg %p53
      %p209 = scmp.lt.s32.totalorder %s19, 1
      %s210 = scalar_select %p209, %s19, 1
      %p211 = scmp.lt.s32.totalorder %s21, 0
      %s212 = scalar_select %p211, %s21, 0
      %s213 = smul.addr %s210, 4
      %s214 = sadd.s32 %s212, %s213
      %s215 = smul.addr %s214, 4
      %s216 = scalar_lea.vmem %s1, %s215
      %p217 = pneg %p84
      %p218 = pneg %p81
      %p219 = scmp.lt.s32.totalorder %s19, 1
      %s220 = scalar_select %p219, %s19, 1
      %p221 = scmp.lt.s32.totalorder %s21, 0
      %s222 = scalar_select %p221, %s21, 0
      %s223 = smul.addr %s220, 4
      %s224 = sadd.s32 %s222, %s223
      %s225 = smul.addr %s224, 4
      %s226 = scalar_lea.vmem %s2, %s225
      %p227 = pneg %p112
      %p228 = pneg %p109
      %p229 = pneg %p140
      %p230 = pneg %p137
      %p231 = scmp.lt.s32.totalorder %s19, 1
      %s232 = scalar_select %p231, %s19, 1
      %p233 = scmp.lt.s32.totalorder %s20, 0
      %s234 = scalar_select %p233, %s20, 0
      %s235 = sadd.s32 %s234, %s232
      %s236 = smul.addr %s235, 4
      %s237 = scalar_lea.vmem %s3, %s236
      %p238 = scmp.lt.s32.totalorder %s19, 1
      %s239 = scalar_select %p238, %s19, 1
      %p240 = scmp.lt.s32.totalorder %s20, 0
      %s241 = scalar_select %p240, %s20, 0
      %s242 = smul.addr %s239, 4
      %s243 = sadd.s32 %s241, %s242
      %s244 = smul.addr %s243, 4
      %s245 = scalar_lea.vmem %s0, %s244
      %p246 = scmp.lt.s32.totalorder %s19, 1
      %s247 = scalar_select %p246, %s19, 1
      %p248 = scmp.lt.s32.totalorder %s21, 0
      %s249 = scalar_select %p248, %s21, 0
      %s250 = smul.addr %s247, 4
      %s251 = sadd.s32 %s249, %s250
      %s252 = smul.addr %s251, 4
      %s253 = scalar_lea.vmem %s1, %s252
      %p254 = scmp.lt.s32.totalorder %s19, 1
      %s255 = scalar_select %p254, %s19, 1
      %p256 = scmp.lt.s32.totalorder %s21, 0
      %s257 = scalar_select %p256, %s21, 0
      %s258 = smul.addr %s255, 4
      %s259 = sadd.s32 %s257, %s258
      %s260 = smul.addr %s259, 4
      %s261 = scalar_lea.vmem %s2, %s260
      %p262 = scmp.lt.s32.totalorder %s19, 1
      %s263 = scalar_select %p262, %s19, 1
      %p264 = scmp.lt.s32.totalorder %s20, 0
      %s265 = scalar_select %p264, %s20, 0
      %s266 = sadd.s32 %s265, %s263
      %s267 = smul.addr %s266, 4
      %s268 = scalar_lea.vmem %s3, %s267
      %p270 = scmp.eq.s32.totalorder %s21, 0
      // Predicated region
      $region33: #{_lambda_.8} parent=31 // pred_check
        %p271 = pneg %p270
      $region34: #{_lambda_.8} parent=31 // pred_check_branch
        %273 = sbr.rel (%p271) target = $region36
      $region35: #{_lambda_.8} parent=31 // pred_region
        %vm274 = vcmask 7168
        %275 = vst.msk [vmem:[#allocation2] sm:$0xff] %vm274, -inf
        %276 = vst.msk [vmem:[#allocation2 + $0x8] sm:$0xff] %vm274, -inf
        %277 = vst.msk [vmem:[#allocation2 + $0x10] sm:$0xff] %vm274, -inf
        %278 = vst.msk [vmem:[#allocation2 + $0x18] sm:$0xff] %vm274, -inf
        %279 = vst.msk [vmem:[#allocation3] sm:$0xff] %vm274, 0.0
        %280 = vst.msk [vmem:[#allocation3 + $0x8] sm:$0xff] %vm274, 0.0
        %281 = vst.msk [vmem:[#allocation3 + $0x10] sm:$0xff] %vm274, 0.0
        %282 = vst.msk [vmem:[#allocation3 + $0x18] sm:$0xff] %vm274, 0.0
        %vm283 = vcmask 64512
        %284 = vst.msk [vmem:[#allocation4] sm:$0xff] %vm283, 0.0
        %285 = vst.msk [vmem:[#allocation4 + $0x8] sm:$0xff] %vm283, 0.0
        %286 = vst.msk [vmem:[#allocation4 + $0x10] sm:$0xff] %vm283, 0.0
        %287 = vst.msk [vmem:[#allocation4 + $0x18] sm:$0xff] %vm283, 0.0
      $region36: #{_lambda_.8} parent=31 // pred_fallthru
        _
      %s288 = smul.u32 %s21, 8
      %s289 = smul.u32 %s20, 8
      %s290 = sadd.s32 %s289, 7
      %p291 = scmp.le.s32.totalorder %s288, %s290
      // Predicated region
      $region37: #{_lambda_.8} parent=31 // pred_check
        %p292 = pneg %p291
      $region38: #{_lambda_.8} parent=31 // pred_check_branch
        %294 = sbr.rel (%p292) target = $region40
      $region39: #{_lambda_.8} parent=31 // pred_region
        %v295 = vld [vmem:[%s245] sm:$0xf]
        %v296 = vld [vmem:[%s245 + $0x4] sm:$0xf]
        %v297 = vld [vmem:[%s245 + $0x8] sm:$0xf]
        %v298 = vld [vmem:[%s245 + $0xc] sm:$0xf]
        %v299 = vld [vmem:[%s253] sm:$0xf]
        %v300 = vld [vmem:[%s253 + $0x4] sm:$0xf]
        %v301 = vld [vmem:[%s253 + $0x8] sm:$0xf]
        %v302 = vld [vmem:[%s253 + $0xc] sm:$0xf]
        %v303 = vld [vmem:[%s261] sm:$0xf]
        %v304 = vld [vmem:[%s261 + $0x4] sm:$0xf]
        %v305 = vld [vmem:[%s261 + $0x8] sm:$0xf]
        %v306 = vld [vmem:[%s261 + $0xc] sm:$0xf]
        %v307 = vlaneseq
        %v308 = vshrl.u32 %v307, 7
        %v309 = vstv %s289
        %v310 = vadd.s32 %v308, %v309
        %v311 = vlaneseq
        %v312 = vand.u32 %v311, 127
        %v313 = vstv %s288
        %v314 = vadd.s32 %v312, %v313
        %vm315 = vcmp.gt.s32.totalorder %v314, %v310
        %v316 = vsel %vm315, -1e+30, 0.0
        %vm317 = vcmask 64512
        %v319 = vsel %vm317, %v295, 0
        %v322 = vsel %vm317, %v299, 0
        %324 = vmatprep.subr.bf16.mxu0 0
        %325 = vmatpush1.bf16.xpose.msra.mxu0 %v322
        %326 = vmatprep.subr.bf16.mxu0 0
        %327 = vmatpush1.bf16.xpose.msra.mxu0 0
        %328 = vmatprep.subr.bf16.mxu0 0
        %329 = vmatpush1.bf16.xpose.msra.mxu0 0
        %330 = vmatprep.subr.bf16.mxu0 0
        %331 = vmatpush1.bf16.xpose.msra.mxu0 0
        %332 = vmatprep.subr.bf16.mxu0 0
        %333 = vmatpush1.bf16.xpose.msra.mxu0 0
        %334 = vmatprep.subr.bf16.mxu0 0
        %335 = vmatpush1.bf16.xpose.msra.mxu0 0
        %336 = vmatprep.subr.bf16.mxu0 0
        %337 = vmatpush1.bf16.xpose.msra.mxu0 0
        %338 = vmatprep.subr.bf16.mxu0 0
        %339 = vmatpush1.bf16.xpose.msra.mxu0 0
        %340 = vmatprep.subr.bf16.mxu0 0
        %341 = vmatpush1.bf16.xpose.msra.mxu0 0
        %342 = vmatprep.subr.bf16.mxu0 0
        %343 = vmatpush1.bf16.xpose.msra.mxu0 0
        %344 = vmatprep.subr.bf16.mxu0 0
        %345 = vmatpush1.bf16.xpose.msra.mxu0 0
        %346 = vmatprep.subr.bf16.mxu0 0
        %347 = vmatpush1.bf16.xpose.msra.mxu0 0
        %348 = vmatprep.subr.bf16.mxu0 0
        %349 = vmatpush1.bf16.xpose.msra.mxu0 0
        %350 = vmatprep.subr.bf16.mxu0 0
        %351 = vmatpush1.bf16.xpose.msra.mxu0 0
        %352 = vmatprep.subr.bf16.mxu0 0
        %353 = vmatpush1.bf16.xpose.msra.mxu0 0
        %354 = vmatprep.subr.bf16.mxu0 0
        %355 = vmatpush1.bf16.xpose.msra.mxu0 0
        %356 = vmatprep.mubr.bf16.mxu0 0
        %357 = vmatmul.mubr.bf16.gmra.mrb[0].mxu0 %v319
        %v358 = vpop.f32.mrb[0].mxu0
        %v359 = vadd.f32 %v316, %v358
        %v360 = vpop.f32.mrb[0].mxu0
        %v361 = vpop.f32.mrb[0].mxu0
        %v362 = vpop.f32.mrb[0].mxu0
        %363 = vdwg.mxu0
        %v365 = vsel %vm317, %v296, 0
        %v368 = vsel %vm317, %v300, 0
        %370 = vmatprep.subr.bf16.mxu0 0
        %371 = vmatpush1.bf16.xpose.msra.mxu0 %v368
        %372 = vmatprep.subr.bf16.mxu0 0
        %373 = vmatpush1.bf16.xpose.msra.mxu0 0
        %374 = vmatprep.subr.bf16.mxu0 0
        %375 = vmatpush1.bf16.xpose.msra.mxu0 0
        %376 = vmatprep.subr.bf16.mxu0 0
        %377 = vmatpush1.bf16.xpose.msra.mxu0 0
        %378 = vmatprep.subr.bf16.mxu0 0
        %379 = vmatpush1.bf16.xpose.msra.mxu0 0
        %380 = vmatprep.subr.bf16.mxu0 0
        %381 = vmatpush1.bf16.xpose.msra.mxu0 0
        %382 = vmatprep.subr.bf16.mxu0 0
        %383 = vmatpush1.bf16.xpose.msra.mxu0 0
        %384 = vmatprep.subr.bf16.mxu0 0
        %385 = vmatpush1.bf16.xpose.msra.mxu0 0
        %386 = vmatprep.subr.bf16.mxu0 0
        %387 = vmatpush1.bf16.xpose.msra.mxu0 0
        %388 = vmatprep.subr.bf16.mxu0 0
        %389 = vmatpush1.bf16.xpose.msra.mxu0 0
        %390 = vmatprep.subr.bf16.mxu0 0
        %391 = vmatpush1.bf16.xpose.msra.mxu0 0
        %392 = vmatprep.subr.bf16.mxu0 0
        %393 = vmatpush1.bf16.xpose.msra.mxu0 0
        %394 = vmatprep.subr.bf16.mxu0 0
        %395 = vmatpush1.bf16.xpose.msra.mxu0 0
        %396 = vmatprep.subr.bf16.mxu0 0
        %397 = vmatpush1.bf16.xpose.msra.mxu0 0
        %398 = vmatprep.subr.bf16.mxu0 0
        %399 = vmatpush1.bf16.xpose.msra.mxu0 0
        %400 = vmatprep.subr.bf16.mxu0 0
        %401 = vmatpush1.bf16.xpose.msra.mxu0 0
        %402 = vmatprep.mubr.bf16.mxu0 0
        %403 = vmatmul.mubr.bf16.gmra.mrb[0].mxu0 %v365
        %v404 = vpop.f32.mrb[0].mxu0
        %v405 = vadd.f32 %v316, %v404
        %v406 = vpop.f32.mrb[0].mxu0
        %v407 = vpop.f32.mrb[0].mxu0
        %v408 = vpop.f32.mrb[0].mxu0
        %409 = vdwg.mxu0
        %v411 = vsel %vm317, %v297, 0
        %v414 = vsel %vm317, %v301, 0
        %416 = vmatprep.subr.bf16.mxu0 0
        %417 = vmatpush1.bf16.xpose.msra.mxu0 %v414
        %418 = vmatprep.subr.bf16.mxu0 0
        %419 = vmatpush1.bf16.xpose.msra.mxu0 0
        %420 = vmatprep.subr.bf16.mxu0 0
        %421 = vmatpush1.bf16.xpose.msra.mxu0 0
        %422 = vmatprep.subr.bf16.mxu0 0
        %423 = vmatpush1.bf16.xpose.msra.mxu0 0
        %424 = vmatprep.subr.bf16.mxu0 0
        %425 = vmatpush1.bf16.xpose.msra.mxu0 0
        %426 = vmatprep.subr.bf16.mxu0 0
        %427 = vmatpush1.bf16.xpose.msra.mxu0 0
        %428 = vmatprep.subr.bf16.mxu0 0
        %429 = vmatpush1.bf16.xpose.msra.mxu0 0
        %430 = vmatprep.subr.bf16.mxu0 0
        %431 = vmatpush1.bf16.xpose.msra.mxu0 0
        %432 = vmatprep.subr.bf16.mxu0 0
        %433 = vmatpush1.bf16.xpose.msra.mxu0 0
        %434 = vmatprep.subr.bf16.mxu0 0
        %435 = vmatpush1.bf16.xpose.msra.mxu0 0
        %436 = vmatprep.subr.bf16.mxu0 0
        %437 = vmatpush1.bf16.xpose.msra.mxu0 0
        %438 = vmatprep.subr.bf16.mxu0 0
        %439 = vmatpush1.bf16.xpose.msra.mxu0 0
        %440 = vmatprep.subr.bf16.mxu0 0
        %441 = vmatpush1.bf16.xpose.msra.mxu0 0
        %442 = vmatprep.subr.bf16.mxu0 0
        %443 = vmatpush1.bf16.xpose.msra.mxu0 0
        %444 = vmatprep.subr.bf16.mxu0 0
        %445 = vmatpush1.bf16.xpose.msra.mxu0 0
        %446 = vmatprep.subr.bf16.mxu0 0
        %447 = vmatpush1.bf16.xpose.msra.mxu0 0
        %448 = vmatprep.mubr.bf16.mxu0 0
        %449 = vmatmul.mubr.bf16.gmra.mrb[0].mxu0 %v411
        %v450 = vpop.f32.mrb[0].mxu0
        %v451 = vadd.f32 %v316, %v450
        %v452 = vpop.f32.mrb[0].mxu0
        %v453 = vpop.f32.mrb[0].mxu0
        %v454 = vpop.f32.mrb[0].mxu0
        %455 = vdwg.mxu0
        %v457 = vsel %vm317, %v298, 0
        %v460 = vsel %vm317, %v302, 0
        %462 = vmatprep.subr.bf16.mxu0 0
        %463 = vmatpush1.bf16.xpose.msra.mxu0 %v460
        %464 = vmatprep.subr.bf16.mxu0 0
        %465 = vmatpush1.bf16.xpose.msra.mxu0 0
        %466 = vmatprep.subr.bf16.mxu0 0
        %467 = vmatpush1.bf16.xpose.msra.mxu0 0
        %468 = vmatprep.subr.bf16.mxu0 0
        %469 = vmatpush1.bf16.xpose.msra.mxu0 0
        %470 = vmatprep.subr.bf16.mxu0 0
        %471 = vmatpush1.bf16.xpose.msra.mxu0 0
        %472 = vmatprep.subr.bf16.mxu0 0
        %473 = vmatpush1.bf16.xpose.msra.mxu0 0
        %474 = vmatprep.subr.bf16.mxu0 0
        %475 = vmatpush1.bf16.xpose.msra.mxu0 0
        %476 = vmatprep.subr.bf16.mxu0 0
        %477 = vmatpush1.bf16.xpose.msra.mxu0 0
        %478 = vmatprep.subr.bf16.mxu0 0
        %479 = vmatpush1.bf16.xpose.msra.mxu0 0
        %480 = vmatprep.subr.bf16.mxu0 0
        %481 = vmatpush1.bf16.xpose.msra.mxu0 0
        %482 = vmatprep.subr.bf16.mxu0 0
        %483 = vmatpush1.bf16.xpose.msra.mxu0 0
        %484 = vmatprep.subr.bf16.mxu0 0
        %485 = vmatpush1.bf16.xpose.msra.mxu0 0
        %486 = vmatprep.subr.bf16.mxu0 0
        %487 = vmatpush1.bf16.xpose.msra.mxu0 0
        %488 = vmatprep.subr.bf16.mxu0 0
        %489 = vmatpush1.bf16.xpose.msra.mxu0 0
        %490 = vmatprep.subr.bf16.mxu0 0
        %491 = vmatpush1.bf16.xpose.msra.mxu0 0
        %492 = vmatprep.subr.bf16.mxu0 0
        %493 = vmatpush1.bf16.xpose.msra.mxu0 0
        %494 = vmatprep.mubr.bf16.mxu0 0
        %495 = vmatmul.mubr.bf16.gmra.mrb[0].mxu0 %v457
        %v496 = vpop.f32.mrb[0].mxu0
        %v497 = vadd.f32 %v316, %v496
        %v498 = vpop.f32.mrb[0].mxu0
        %v499 = vpop.f32.mrb[0].mxu0
        %v500 = vpop.f32.mrb[0].mxu0
        %501 = vdwg.mxu0
        %v502 = vld [vmem:[#allocation2] sm:$0xff]
        %v503 = vld [vmem:[#allocation2 + $0x8] sm:$0xff]
        %v504 = vld [vmem:[#allocation2 + $0x10] sm:$0xff]
        %v505 = vld [vmem:[#allocation2 + $0x18] sm:$0xff]
        %v506 = vsel %vm317, %v359, -inf
        %507 = vmax.xlane.f32.xlu0 %v506
        %v508 = vpop.xlane.xlu0 %507
        %v509 = vsel %vm317, %v405, -inf
        %510 = vmax.xlane.f32.xlu0 %v509
        %v511 = vpop.xlane.xlu0 %510
        %v512 = vsel %vm317, %v451, -inf
        %513 = vmax.xlane.f32.xlu0 %v512
        %v514 = vpop.xlane.xlu0 %513
        %v515 = vsel %vm317, %v497, -inf
        %516 = vmax.xlane.f32.xlu0 %v515
        %v517 = vpop.xlane.xlu0 %516
        %v518 = vmax.f32 %v502, %v508
        %v519 = vmax.f32 %v503, %v511
        %v520 = vmax.f32 %v504, %v514
        %v521 = vmax.f32 %v505, %v517
        %v522 = vsub.f32 %v502, %v518
        %v523 = vsub.f32 %v503, %v519
        %v524 = vsub.f32 %v504, %v520
        %v525 = vsub.f32 %v505, %v521
        %v526 = vmul.f32 %v522, 1.442695
        %v527 = vpow.pop %v526
        %v528 = vmul.f32 %v523, 1.442695
        %v529 = vpow.pop %v528
        %v530 = vmul.f32 %v524, 1.442695
        %v531 = vpow.pop %v530
        %v532 = vmul.f32 %v525, 1.442695
        %v533 = vpow.pop %v532
        %535 = vset.pattern.permute.xlu0 0
        %536 = vperm.xlu0 %535, %v518
        %v537 = vpop.permute.xlu0 %536
        %540 = vset.pattern.permute.xlu0 0
        %541 = vperm.xlu0 %540, %v519
        %v542 = vpop.permute.xlu0 %541
        %545 = vset.pattern.permute.xlu0 0
        %546 = vperm.xlu0 %545, %v520
        %v547 = vpop.permute.xlu0 %546
        %550 = vset.pattern.permute.xlu0 0
        %551 = vperm.xlu0 %550, %v521
        %v552 = vpop.permute.xlu0 %551
        %v554 = vsub.f32 %v359, %v537
        %v555 = vsub.f32 %v405, %v542
        %v556 = vsub.f32 %v451, %v547
        %v557 = vsub.f32 %v497, %v552
        %v558 = vmul.f32 %v554, 1.442695
        %v559 = vpow.pop %v558
        %v560 = vmul.f32 %v555, 1.442695
        %v561 = vpow.pop %v560
        %v562 = vmul.f32 %v556, 1.442695
        %v563 = vpow.pop %v562
        %v564 = vmul.f32 %v557, 1.442695
        %v565 = vpow.pop %v564
        %v566 = vld [vmem:[#allocation3] sm:$0xff]
        %v567 = vld [vmem:[#allocation3 + $0x8] sm:$0xff]
        %v568 = vld [vmem:[#allocation3 + $0x10] sm:$0xff]
        %v569 = vld [vmem:[#allocation3 + $0x18] sm:$0xff]
        %v570 = vmul.f32 %v527, %v566
        %v571 = vmul.f32 %v529, %v567
        %v572 = vmul.f32 %v531, %v568
        %v573 = vmul.f32 %v533, %v569
        %v574 = vsel %vm317, %v559, 0.0
        %575 = vadd.xlane.f32.xlu0 %v574
        %v576 = vpop.xlane.xlu0 %575
        %v577 = vsel %vm317, %v561, 0.0
        %578 = vadd.xlane.f32.xlu0 %v577
        %v579 = vpop.xlane.xlu0 %578
        %v580 = vsel %vm317, %v563, 0.0
        %581 = vadd.xlane.f32.xlu0 %v580
        %v582 = vpop.xlane.xlu0 %581
        %v583 = vsel %vm317, %v565, 0.0
        %584 = vadd.xlane.f32.xlu0 %v583
        %v585 = vpop.xlane.xlu0 %584
        %v586 = vadd.f32 %v570, %v576
        %v587 = vadd.f32 %v571, %v579
        %v588 = vadd.f32 %v572, %v582
        %v589 = vadd.f32 %v573, %v585
        %vm590 = vcmask 7168
        %591 = vst.msk [vmem:[#allocation3] sm:$0xff] %vm590, %v586
        %592 = vst.msk [vmem:[#allocation3 + $0x8] sm:$0xff] %vm590, %v587
        %593 = vst.msk [vmem:[#allocation3 + $0x10] sm:$0xff] %vm590, %v588
        %594 = vst.msk [vmem:[#allocation3 + $0x18] sm:$0xff] %vm590, %v589
        %v595 = vld [vmem:[#allocation4] sm:$0xff]
        %v596 = vld [vmem:[#allocation4 + $0x8] sm:$0xff]
        %v597 = vld [vmem:[#allocation4 + $0x10] sm:$0xff]
        %v598 = vld [vmem:[#allocation4 + $0x18] sm:$0xff]
        %600 = vset.pattern.permute.xlu0 0
        %601 = vperm.xlu0 %600, %v527
        %v602 = vpop.permute.xlu0 %601
        %605 = vset.pattern.permute.xlu0 0
        %606 = vperm.xlu0 %605, %v529
        %v607 = vpop.permute.xlu0 %606
        %610 = vset.pattern.permute.xlu0 0
        %611 = vperm.xlu0 %610, %v531
        %v612 = vpop.permute.xlu0 %611
        %615 = vset.pattern.permute.xlu0 0
        %616 = vperm.xlu0 %615, %v533
        %v617 = vpop.permute.xlu0 %616
        %v619 = vmul.f32 %v602, %v595
        %v620 = vmul.f32 %v607, %v596
        %v621 = vmul.f32 %v612, %v597
        %v622 = vmul.f32 %v617, %v598
        %v623 = vpack.c.bf16 %v559, %v559
        %v624 = vpack.c.bf16 %v561, %v561
        %v625 = vpack.c.bf16 %v563, %v563
        %v626 = vpack.c.bf16 %v565, %v565
        %v628 = vsel %vm317, %v623, 0
        %vm630 = vcmask 1043456
        %v632 = vsel %vm630, %v303, 0
        %634 = vmatprep.subr.bf16.mxu0 0
        %635 = vmatpush1.bf16.msra.mxu0 %v632
        %636 = vmatprep.subr.bf16.mxu0 0
        %637 = vmatpush1.bf16.msra.mxu0 0
        %638 = vmatprep.subr.bf16.mxu0 0
        %639 = vmatpush1.bf16.msra.mxu0 0
        %640 = vmatprep.subr.bf16.mxu0 0
        %641 = vmatpush1.bf16.msra.mxu0 0
        %642 = vmatprep.subr.bf16.mxu0 0
        %643 = vmatpush1.bf16.msra.mxu0 0
        %644 = vmatprep.subr.bf16.mxu0 0
        %645 = vmatpush1.bf16.msra.mxu0 0
        %646 = vmatprep.subr.bf16.mxu0 0
        %647 = vmatpush1.bf16.msra.mxu0 0
        %648 = vmatprep.subr.bf16.mxu0 0
        %649 = vmatpush1.bf16.msra.mxu0 0
        %650 = vmatprep.subr.bf16.mxu0 0
        %651 = vmatpush1.bf16.msra.mxu0 0
        %652 = vmatprep.subr.bf16.mxu0 0
        %653 = vmatpush1.bf16.msra.mxu0 0
        %654 = vmatprep.subr.bf16.mxu0 0
        %655 = vmatpush1.bf16.msra.mxu0 0
        %656 = vmatprep.subr.bf16.mxu0 0
        %657 = vmatpush1.bf16.msra.mxu0 0
        %658 = vmatprep.subr.bf16.mxu0 0
        %659 = vmatpush1.bf16.msra.mxu0 0
        %660 = vmatprep.subr.bf16.mxu0 0
        %661 = vmatpush1.bf16.msra.mxu0 0
        %662 = vmatprep.subr.bf16.mxu0 0
        %663 = vmatpush1.bf16.msra.mxu0 0
        %664 = vmatprep.subr.bf16.mxu0 0
        %665 = vmatpush1.bf16.msra.mxu0 0
        %666 = vmatprep.mubr.bf16.mxu0 0
        %667 = vmatmul.mubr.bf16.gmra.mrb[0].mxu0 %v628
        %v668 = vpop.f32.mrb[0].mxu0
        %v669 = vadd.f32 0.0, %v668
        %v670 = vpop.f32.mrb[0].mxu0
        %v671 = vpop.f32.mrb[0].mxu0
        %v672 = vpop.f32.mrb[0].mxu0
        %673 = vdwg.mxu0
        %v675 = vsel %vm317, %v624, 0
        %v678 = vsel %vm630, %v304, 0
        %680 = vmatprep.subr.bf16.mxu0 0
        %681 = vmatpush1.bf16.msra.mxu0 %v678
        %682 = vmatprep.subr.bf16.mxu0 0
        %683 = vmatpush1.bf16.msra.mxu0 0
        %684 = vmatprep.subr.bf16.mxu0 0
        %685 = vmatpush1.bf16.msra.mxu0 0
        %686 = vmatprep.subr.bf16.mxu0 0
        %687 = vmatpush1.bf16.msra.mxu0 0
        %688 = vmatprep.subr.bf16.mxu0 0
        %689 = vmatpush1.bf16.msra.mxu0 0
        %690 = vmatprep.subr.bf16.mxu0 0
        %691 = vmatpush1.bf16.msra.mxu0 0
        %692 = vmatprep.subr.bf16.mxu0 0
        %693 = vmatpush1.bf16.msra.mxu0 0
        %694 = vmatprep.subr.bf16.mxu0 0
        %695 = vmatpush1.bf16.msra.mxu0 0
        %696 = vmatprep.subr.bf16.mxu0 0
        %697 = vmatpush1.bf16.msra.mxu0 0
        %698 = vmatprep.subr.bf16.mxu0 0
        %699 = vmatpush1.bf16.msra.mxu0 0
        %700 = vmatprep.subr.bf16.mxu0 0
        %701 = vmatpush1.bf16.msra.mxu0 0
        %702 = vmatprep.subr.bf16.mxu0 0
        %703 = vmatpush1.bf16.msra.mxu0 0
        %704 = vmatprep.subr.bf16.mxu0 0
        %705 = vmatpush1.bf16.msra.mxu0 0
        %706 = vmatprep.subr.bf16.mxu0 0
        %707 = vmatpush1.bf16.msra.mxu0 0
        %708 = vmatprep.subr.bf16.mxu0 0
        %709 = vmatpush1.bf16.msra.mxu0 0
        %710 = vmatprep.subr.bf16.mxu0 0
        %711 = vmatpush1.bf16.msra.mxu0 0
        %712 = vmatprep.mubr.bf16.mxu0 0
        %713 = vmatmul.mubr.bf16.gmra.mrb[0].mxu0 %v675
        %v714 = vpop.f32.mrb[0].mxu0
        %v715 = vadd.f32 0.0, %v714
        %v716 = vpop.f32.mrb[0].mxu0
        %v717 = vpop.f32.mrb[0].mxu0
        %v718 = vpop.f32.mrb[0].mxu0
        %719 = vdwg.mxu0
        %v721 = vsel %vm317, %v625, 0
        %v724 = vsel %vm630, %v305, 0
        %726 = vmatprep.subr.bf16.mxu0 0
        %727 = vmatpush1.bf16.msra.mxu0 %v724
        %728 = vmatprep.subr.bf16.mxu0 0
        %729 = vmatpush1.bf16.msra.mxu0 0
        %730 = vmatprep.subr.bf16.mxu0 0
        %731 = vmatpush1.bf16.msra.mxu0 0
        %732 = vmatprep.subr.bf16.mxu0 0
        %733 = vmatpush1.bf16.msra.mxu0 0
        %734 = vmatprep.subr.bf16.mxu0 0
        %735 = vmatpush1.bf16.msra.mxu0 0
        %736 = vmatprep.subr.bf16.mxu0 0
        %737 = vmatpush1.bf16.msra.mxu0 0
        %738 = vmatprep.subr.bf16.mxu0 0
        %739 = vmatpush1.bf16.msra.mxu0 0
        %740 = vmatprep.subr.bf16.mxu0 0
        %741 = vmatpush1.bf16.msra.mxu0 0
        %742 = vmatprep.subr.bf16.mxu0 0
        %743 = vmatpush1.bf16.msra.mxu0 0
        %744 = vmatprep.subr.bf16.mxu0 0
        %745 = vmatpush1.bf16.msra.mxu0 0
        %746 = vmatprep.subr.bf16.mxu0 0
        %747 = vmatpush1.bf16.msra.mxu0 0
        %748 = vmatprep.subr.bf16.mxu0 0
        %749 = vmatpush1.bf16.msra.mxu0 0
        %750 = vmatprep.subr.bf16.mxu0 0
        %751 = vmatpush1.bf16.msra.mxu0 0
        %752 = vmatprep.subr.bf16.mxu0 0
        %753 = vmatpush1.bf16.msra.mxu0 0
        %754 = vmatprep.subr.bf16.mxu0 0
        %755 = vmatpush1.bf16.msra.mxu0 0
        %756 = vmatprep.subr.bf16.mxu0 0
        %757 = vmatpush1.bf16.msra.mxu0 0
        %758 = vmatprep.mubr.bf16.mxu0 0
        %759 = vmatmul.mubr.bf16.gmra.mrb[0].mxu0 %v721
        %v760 = vpop.f32.mrb[0].mxu0
        %v761 = vadd.f32 0.0, %v760
        %v762 = vpop.f32.mrb[0].mxu0
        %v763 = vpop.f32.mrb[0].mxu0
        %v764 = vpop.f32.mrb[0].mxu0
        %765 = vdwg.mxu0
        %v767 = vsel %vm317, %v626, 0
        %v770 = vsel %vm630, %v306, 0
        %772 = vmatprep.subr.bf16.mxu0 0
        %773 = vmatpush1.bf16.msra.mxu0 %v770
        %774 = vmatprep.subr.bf16.mxu0 0
        %775 = vmatpush1.bf16.msra.mxu0 0
        %776 = vmatprep.subr.bf16.mxu0 0
        %777 = vmatpush1.bf16.msra.mxu0 0
        %778 = vmatprep.subr.bf16.mxu0 0
        %779 = vmatpush1.bf16.msra.mxu0 0
        %780 = vmatprep.subr.bf16.mxu0 0
        %781 = vmatpush1.bf16.msra.mxu0 0
        %782 = vmatprep.subr.bf16.mxu0 0
        %783 = vmatpush1.bf16.msra.mxu0 0
        %784 = vmatprep.subr.bf16.mxu0 0
        %785 = vmatpush1.bf16.msra.mxu0 0
        %786 = vmatprep.subr.bf16.mxu0 0
        %787 = vmatpush1.bf16.msra.mxu0 0
        %788 = vmatprep.subr.bf16.mxu0 0
        %789 = vmatpush1.bf16.msra.mxu0 0
        %790 = vmatprep.subr.bf16.mxu0 0
        %791 = vmatpush1.bf16.msra.mxu0 0
        %792 = vmatprep.subr.bf16.mxu0 0
        %793 = vmatpush1.bf16.msra.mxu0 0
        %794 = vmatprep.subr.bf16.mxu0 0
        %795 = vmatpush1.bf16.msra.mxu0 0
        %796 = vmatprep.subr.bf16.mxu0 0
        %797 = vmatpush1.bf16.msra.mxu0 0
        %798 = vmatprep.subr.bf16.mxu0 0
        %799 = vmatpush1.bf16.msra.mxu0 0
        %800 = vmatprep.subr.bf16.mxu0 0
        %801 = vmatpush1.bf16.msra.mxu0 0
        %802 = vmatprep.subr.bf16.mxu0 0
        %803 = vmatpush1.bf16.msra.mxu0 0
        %804 = vmatprep.mubr.bf16.mxu0 0
        %805 = vmatmul.mubr.bf16.gmra.mrb[0].mxu0 %v767
        %v806 = vpop.f32.mrb[0].mxu0
        %v807 = vadd.f32 0.0, %v806
        %v808 = vpop.f32.mrb[0].mxu0
        %v809 = vpop.f32.mrb[0].mxu0
        %v810 = vpop.f32.mrb[0].mxu0
        %811 = vdwg.mxu0
        %v812 = vadd.f32 %v619, %v669
        %v813 = vadd.f32 %v620, %v715
        %v814 = vadd.f32 %v621, %v761
        %v815 = vadd.f32 %v622, %v807
        %816 = vst.msk [vmem:[#allocation4] sm:$0xff] %vm317, %v812
        %817 = vst.msk [vmem:[#allocation4 + $0x8] sm:$0xff] %vm317, %v813
        %818 = vst.msk [vmem:[#allocation4 + $0x10] sm:$0xff] %vm317, %v814
        %819 = vst.msk [vmem:[#allocation4 + $0x18] sm:$0xff] %vm317, %v815
        %820 = vst.msk [vmem:[#allocation2] sm:$0xff] %vm590, %v518
        %821 = vst.msk [vmem:[#allocation2 + $0x8] sm:$0xff] %vm590, %v519
        %822 = vst.msk [vmem:[#allocation2 + $0x10] sm:$0xff] %vm590, %v520
        %823 = vst.msk [vmem:[#allocation2 + $0x18] sm:$0xff] %vm590, %v521
      $region40: #{_lambda_.8} parent=31 // pred_fallthru
        _
      // Predicated region
      $region41: #{_lambda_.8} parent=31 // pred_check
        %p824 = pneg %p270
      $region42: #{_lambda_.8} parent=31 // pred_check_branch
        %826 = sbr.rel (%p824) target = $region44
      $region43: #{_lambda_.8} parent=31 // pred_region
        %v827 = vld [vmem:[#allocation4] sm:$0xff]
        %v828 = vld [vmem:[#allocation4 + $0x8] sm:$0xff]
        %v829 = vld [vmem:[#allocation4 + $0x10] sm:$0xff]
        %v830 = vld [vmem:[#allocation4 + $0x18] sm:$0xff]
        %v831 = vld [vmem:[#allocation3] sm:$0xff]
        %v832 = vld [vmem:[#allocation3 + $0x8] sm:$0xff]
        %v833 = vld [vmem:[#allocation3 + $0x10] sm:$0xff]
        %v834 = vld [vmem:[#allocation3 + $0x18] sm:$0xff]
        %v835 = vrcp.pop %v831
        %v836 = vrcp.pop %v832
        %v837 = vrcp.pop %v833
        %v838 = vrcp.pop %v834
        %840 = vset.pattern.permute.xlu0 0
        %841 = vperm.xlu0 %840, %v835
        %v842 = vpop.permute.xlu0 %841
        %845 = vset.pattern.permute.xlu0 0
        %846 = vperm.xlu0 %845, %v836
        %v847 = vpop.permute.xlu0 %846
        %850 = vset.pattern.permute.xlu0 0
        %851 = vperm.xlu0 %850, %v837
        %v852 = vpop.permute.xlu0 %851
        %855 = vset.pattern.permute.xlu0 0
        %856 = vperm.xlu0 %855, %v838
        %v857 = vpop.permute.xlu0 %856
        %v859 = vmul.f32 %v827, %v842
        %v860 = vmul.f32 %v828, %v847
        %v861 = vmul.f32 %v829, %v852
        %v862 = vmul.f32 %v830, %v857
        %v863 = vcombine.low %v859, %v861
        %v864 = vcombine.high %v859, %v861
        %v866 = vunpack.c.l.s4 1983009808
        %v867 = vunpack.c.0.s8 %v866
        %v868 = vlaneseq
        %v869 = vshrl.u32 %v868, 7
        %v870 = vsub.s32 %v867, %v869
        %v871 = vrot.slane %v863, %v870
        %v873 = vunpack.c.l.s4 1983009808
        %v874 = vunpack.c.0.s8 %v873
        %v875 = vlaneseq
        %v876 = vshrl.u32 %v875, 7
        %v877 = vsub.s32 %v874, %v876
        %v878 = vrot.slane %v864, %v877
        %v879 = vcombine.low %v860, %v862
        %v880 = vcombine.high %v860, %v862
        %v882 = vunpack.c.l.s4 1983009808
        %v883 = vunpack.c.0.s8 %v882
        %v884 = vlaneseq
        %v885 = vshrl.u32 %v884, 7
        %v886 = vsub.s32 %v883, %v885
        %v887 = vrot.slane %v879, %v886
        %v889 = vunpack.c.l.s4 1983009808
        %v890 = vunpack.c.0.s8 %v889
        %v891 = vlaneseq
        %v892 = vshrl.u32 %v891, 7
        %v893 = vsub.s32 %v890, %v892
        %v894 = vrot.slane %v880, %v893
        %v895 = vcombine.low %v871, %v887
        %v896 = vcombine.high %v871, %v887
        %v898 = vunpack.c.l.s4 1934713408
        %v899 = vunpack.c.0.s8 %v898
        %v900 = vlaneseq
        %v901 = vshrl.u32 %v900, 7
        %v902 = vsub.s32 %v899, %v901
        %v903 = vrot.slane %v895, %v902
        %v905 = vunpack.c.l.s4 1934713408
        %v906 = vunpack.c.0.s8 %v905
        %v907 = vlaneseq
        %v908 = vshrl.u32 %v907, 7
        %v909 = vsub.s32 %v906, %v908
        %v910 = vrot.slane %v896, %v909
        %v911 = vcombine.low %v878, %v894
        %v912 = vcombine.high %v878, %v894
        %v914 = vunpack.c.l.s4 1934713408
        %v915 = vunpack.c.0.s8 %v914
        %v916 = vlaneseq
        %v917 = vshrl.u32 %v916, 7
        %v918 = vsub.s32 %v915, %v917
        %v919 = vrot.slane %v911, %v918
        %v921 = vunpack.c.l.s4 1934713408
        %v922 = vunpack.c.0.s8 %v921
        %v923 = vlaneseq
        %v924 = vshrl.u32 %v923, 7
        %v925 = vsub.s32 %v922, %v924
        %v926 = vrot.slane %v912, %v925
        %v927 = vcombine.high %v903, 0.0
        %v928 = vcombine.high %v910, 0.0
        %v929 = vcombine.high %v919, 0.0
        %v930 = vcombine.high %v926, 0.0
        %v931 = vcombine.low %v903, %v910
        %v933 = vunpack.c.l.s4 1983009808
        %v934 = vunpack.c.0.s8 %v933
        %v935 = vlaneseq
        %v936 = vshrl.u32 %v935, 7
        %v937 = vsub.s32 %v934, %v936
        %v938 = vrot.slane %v931, %v937
        %v939 = vcombine.low %v927, %v928
        %v941 = vunpack.c.l.s4 1983009808
        %v942 = vunpack.c.0.s8 %v941
        %v943 = vlaneseq
        %v944 = vshrl.u32 %v943, 7
        %v945 = vsub.s32 %v942, %v944
        %v946 = vrot.slane %v939, %v945
        %v947 = vcombine.low %v919, %v926
        %v949 = vunpack.c.l.s4 1983009808
        %v950 = vunpack.c.0.s8 %v949
        %v951 = vlaneseq
        %v952 = vshrl.u32 %v951, 7
        %v953 = vsub.s32 %v950, %v952
        %v954 = vrot.slane %v947, %v953
        %v955 = vcombine.low %v929, %v930
        %v957 = vunpack.c.l.s4 1983009808
        %v958 = vunpack.c.0.s8 %v957
        %v959 = vlaneseq
        %v960 = vshrl.u32 %v959, 7
        %v961 = vsub.s32 %v958, %v960
        %v962 = vrot.slane %v955, %v961
        %v963 = vcombine.low %v938, %v946
        %v964 = vcombine.high %v938, %v946
        %v966 = vunpack.c.l.s4 1934713408
        %v967 = vunpack.c.0.s8 %v966
        %v968 = vlaneseq
        %v969 = vshrl.u32 %v968, 7
        %v970 = vsub.s32 %v967, %v969
        %v971 = vrot.slane %v963, %v970
        %v973 = vunpack.c.l.s4 1934713408
        %v974 = vunpack.c.0.s8 %v973
        %v975 = vlaneseq
        %v976 = vshrl.u32 %v975, 7
        %v977 = vsub.s32 %v974, %v976
        %v978 = vrot.slane %v964, %v977
        %v979 = vcombine.low %v954, %v962
        %v980 = vcombine.high %v954, %v962
        %v982 = vunpack.c.l.s4 1934713408
        %v983 = vunpack.c.0.s8 %v982
        %v984 = vlaneseq
        %v985 = vshrl.u32 %v984, 7
        %v986 = vsub.s32 %v983, %v985
        %v987 = vrot.slane %v979, %v986
        %v989 = vunpack.c.l.s4 1934713408
        %v990 = vunpack.c.0.s8 %v989
        %v991 = vlaneseq
        %v992 = vshrl.u32 %v991, 7
        %v993 = vsub.s32 %v990, %v992
        %v994 = vrot.slane %v980, %v993
        %v995 = vcombine.low %v971, %v987
        %v996 = vcombine.high %v971, %v987
        %v997 = vcombine.low %v978, %v994
        %v998 = vcombine.high %v978, %v994
        %1000 = vrot.lane.b32.xlu0 %v996, 8
        %v1001 = vpop.permute.xlu0 %1000
        %1004 = vrot.lane.b32.xlu0 %v997, 16
        %v1005 = vpop.permute.xlu0 %1004
        %1008 = vrot.lane.b32.xlu0 %v998, 24
        %v1009 = vpop.permute.xlu0 %1008
        %vm1011 = vcmask 64512
        %v1012 = vsel %vm1011, %v995, %v1001
        %vm1013 = vcmask 130048
        %v1014 = vsel %vm1013, %v1012, %v1005
        %vm1015 = vcmask 195584
        %v1016 = vsel %vm1015, %v1014, %v1009
        %v1017 = vpack.c.bf16 %v1016, %v1016
        %vm1018 = vcmask 257024
        %1019 = vst.msk [vmem:[%s268] sm:$0xf] %vm1018, %v1017
      $region44: #{_lambda_.8} parent=31 // pred_fallthru
        _
      %p1020 = scmp.lt.s32.totalorder %s19, 1
      %s1021 = scalar_select %p1020, %s19, 1
      %p1022 = scmp.lt.s32.totalorder %s20, 0
      %s1023 = scalar_select %p1022, %s20, 0
      %s1024 = sadd.s32 %s1023, %s1021
      %s1025 = smul.addr %s1024, 4
      %s1026 = scalar_lea.vmem %s3, %s1025
      // Predicated region
      $region45: #{_lambda_.8} parent=31 // pred_check
        %p1027 = pneg %p137
      $region46: #{_lambda_.8} parent=31 // pred_check_branch
        %1029 = sbr.rel (%p1027) target = $region48
      $region47: #{_lambda_.8} parent=31 // pred_region
        _
      $region48: #{_lambda_.8} parent=31 // pred_fallthru
        _
    $region32: #{_lambda_.8} parent=5 // pred_fallthru
      _
    %p1030 = scmp.le.s32.totalorder 2, %s9
    // Predicated region
    $region49: #{_lambda_.8} parent=5 // pred_check
      %p1031 = pneg %p1030
    $region50: #{_lambda_.8} parent=5 // pred_check_branch
      %1033 = sbr.rel (%p1031) target = $region52
    $region51: #{_lambda_.8} parent=5 // pred_region
      %s1034 = ssub.s32 %s9, 2
      // Predicated region
      $region53: #{_lambda_.8} parent=51 // pred_check
        %p1035 = pneg %p143
      $region54: #{_lambda_.8} parent=51 // pred_check_branch
        %1037 = sbr.rel (%p1035) target = $region56
      $region55: #{_lambda_.8} parent=51 // pred_region
        %p1038 = scmp.lt.s32.totalorder %s22, 1
        %s1039 = scalar_select %p1038, %s22, 1
        %p1040 = scmp.lt.s32.totalorder %s23, 0
        %s1041 = scalar_select %p1040, %s23, 0
        %s1042 = sadd.s32 %s1041, %s1039
        %s1043 = smul.addr %s1042, 4
        %s1044 = scalar_lea.vmem %s3, %s1043
      $region56: #{_lambda_.8} parent=51 // pred_fallthru
        _
    $region52: #{_lambda_.8} parent=5 // pred_fallthru
      _
  $region6: #{_lambda_.8} parent=0 // loop_footer
    %s13 = sadd.s32 1, %s9
  $region7: #{_lambda_.8} parent=0 // loop_footer_branch
    %8 = sbr.rel target = $region3
  $region8: #{_lambda_.8} parent=0 // loop_exit
    _

</llo_original>
